<compile_context>
chip_gen: v7x
topology: tpu7x:2x2x1
jax: 0.10.0
libtpu: 0.0.40
codegen_flags: <defaults>
</compile_context>

<pallas_src>
import functools

import jax
import jax.numpy as jnp
from jax import lax
from jax.experimental import pallas as pl
from jax.experimental.pallas import tpu as pltpu


def _mhsa_kernel(x_ref, wqkv_ref, wout_ref, bout_ref, o_ref, slab_ref,
                 *, n_head, n_head_feat, scale):
    Bb, N, C = x_ref.shape
    d = n_head_feat
    hidden = n_head * d
    cdt = x_ref.dtype                      # MXU operand dtype (bf16 for bf16 models)

    x = x_ref[...]                         # (Bb, N, C)
    wqkv = wqkv_ref[...]                   # (C, 3H)  in cdt
    wout = wout_ref[...]                   # (H, C)   in cdt

    # QKV projection on the flattened (Bb*N, C) slab (nn.Linear, bias=False).
    # f32 accumulation on the MXU, result cast back to the narrow compute dtype.
    xf = x.reshape(Bb * N, C)
    qkv = jnp.dot(xf, wqkv, preferred_element_type=jnp.float32).astype(cdt)
    qkv = qkv.reshape(Bb, N, 3 * hidden)

    # Per-head attention.  Each head's context rows land in the VMEM slab at a
    # static lane offset h*d; per-head intermediates die at the end of the head.
    for h in range(n_head):
        lo = h * d
        q = qkv[:, :, lo:lo + d] * scale                                 # (Bb,N,d) cdt
        k = qkv[:, :, hidden + lo:hidden + lo + d]                       # (Bb,N,d)
        v = qkv[:, :, 2 * hidden + lo:2 * hidden + lo + d]               # (Bb,N,d)

        # scores = q @ k^T  (contract feature dim directly; no transpose op)
        s = lax.dot_general(
            q, k, dimension_numbers=(((2,), (2,)), ((0,), (0,))),
            preferred_element_type=jnp.float32)                          # (Bb,N,N) f32

        # Numerically stable softmax; normalization deferred past p @ v.
        m = jnp.max(s, axis=-1, keepdims=True)
        e = jnp.exp(s - m)                                               # (Bb,N,N) f32
        denom = jnp.sum(e, axis=-1, keepdims=True)                       # (Bb,N,1)

        pv = lax.dot_general(
            e.astype(cdt), v, dimension_numbers=(((2,), (1,)), ((0,), (0,))),
            preferred_element_type=jnp.float32)                          # (Bb,N,d) f32
        pv = pv * pl.reciprocal(denom, approx=True)

        slab_ref[:, lo:lo + d] = pv.reshape(Bb * N, d).astype(cdt)

    # Single K=H output projection for all heads + bias, then one cast+store.
    out = jnp.dot(slab_ref[...], wout, preferred_element_type=jnp.float32)
    out = out + bout_ref[...].astype(jnp.float32)                        # (1,C) bcast
    o_ref[...] = out.reshape(Bb, N, C).astype(o_ref.dtype)


def _tpu_vmem_bytes():
    """Best-effort VMEM capacity query (None if unavailable)."""
    try:
        return int(pltpu.get_tpu_info().vmem_capacity_bytes)
    except Exception:
        return None


def _pick_block_b(B, N, vmem_bytes):
    """Pick batch-block size.  Bigger row blocks on 128 MiB parts (v5e/v6e,
    single TC -> grid is a serial loop, don't split needlessly); on v7x-class
    parts (64 MiB, 2 TCs) use smaller blocks and keep the grid length >= 2 so
    both TensorCores get work."""
    small_vmem = (vmem_bytes is not None) and vmem_bytes < (100 << 20)   # v7x-class
    target_rows = 256 if small_vmem else 512
    best = 1
    for bb in range(1, B + 1):
        if B % bb == 0 and bb * N <= max(target_rows, N):
            best = bb
    if small_vmem and best == B and B > 1:
        best = max(dd for dd in range(1, B) if B % dd == 0)
    return best


def _vmem_limit_bytes(vmem_bytes):
    if vmem_bytes is None:
        return None                      # keep compiler default if query failed
    if vmem_bytes >= (100 << 20):        # v5e / v6e: 128 MiB physical
        return 100 << 20
    return 48 << 20                      # v7x: 64 MiB physical, leave headroom


def multihead_self_attention(x, w_qkv, w_out, b_out, *, n_head, n_head_feat,
                             block_b=None):
    """x: (B,N,C); w_qkv: (C,3H); w_out: (H,C); b_out: (C,);  H = n_head*n_head_feat."""
    B, N, C = x.shape
    hidden = n_head * n_head_feat
    assert w_qkv.shape == (C, 3 * hidden)
    assert w_out.shape == (hidden, C)
    assert b_out.shape == (C,)
    scale = float(n_head_feat) ** -0.5

    vmem_bytes = _tpu_vmem_bytes()
    if block_b is None:
        block_b = _pick_block_b(B, N, vmem_bytes)
    assert B % block_b == 0
    grid = (B // block_b,)

    cdt = x.dtype
    w_qkv_c = w_qkv.astype(cdt)
    w_out_c = w_out.astype(cdt)
    b_out2 = b_out.reshape(1, C).astype(jnp.float32)

    kernel = functools.partial(
        _mhsa_kernel, n_head=n_head, n_head_feat=n_head_feat, scale=scale)

    compiler_params = pltpu.CompilerParams(
        dimension_semantics=("parallel",),
        vmem_limit_bytes=_vmem_limit_bytes(vmem_bytes))

    def build(single_buffer_weights):
        wkw = ({"pipeline_mode": pl.Buffered(1)} if single_buffer_weights else {})
        in_specs = [
            pl.BlockSpec((block_b, N, C), lambda b: (b, 0, 0)),
            pl.BlockSpec((C, 3 * hidden), lambda b: (0, 0), **wkw),
            pl.BlockSpec((hidden, C), lambda b: (0, 0), **wkw),
            pl.BlockSpec((1, C), lambda b: (0, 0), **wkw),
        ]
        return pl.pallas_call(
            kernel,
            out_shape=jax.ShapeDtypeStruct((B, N, C), x.dtype),
            grid_spec=pltpu.PrefetchScalarGridSpec(
                num_scalar_prefetch=0,
                grid=grid,
                in_specs=in_specs,
                out_specs=pl.BlockSpec((block_b, N, C), lambda b: (b, 0, 0)),
                scratch_shapes=[pltpu.VMEM((block_b * N, hidden), cdt)]),
            compiler_params=compiler_params,
        )

    try:
        # Grid-invariant weights single-buffered (halves their VMEM footprint).
        return build(True)(x, w_qkv_c, w_out_c, b_out2)
    except Exception:
        # Fallback if this jax version rejects pl.Buffered(1) on the outer
        # pipeline; only the VMEM footprint differs, not correctness.
        return build(False)(x, w_qkv_c, w_out_c, b_out2)


def _reference(x, w_qkv, w_out, b_out, *, n_head, n_head_feat):
    # Pure-JAX reference mirroring the PyTorch forward.
    B, N, C = x.shape
    hidden = n_head * n_head_feat
    scale = float(n_head_feat) ** -0.5
    qkv = x @ w_qkv
    q, k, v = jnp.split(qkv, 3, axis=-1)

    def split_heads(t):  # 'b n (h d) -> b h n d'
        return t.reshape(B, N, n_head, n_head_feat).transpose(0, 2, 1, 3)

    q, k, v = map(split_heads, (q, k, v))
    dots = jnp.einsum("bhnd,bhmd->bhnm", q, k) * scale
    attn = jax.nn.softmax(dots, axis=-1)
    out = jnp.einsum("bhnm,bhmd->bhnd", attn, v)
    out = out.transpose(0, 2, 1, 3).reshape(B, N, hidden)  # 'b h n d -> b n (h d)'
    return out @ w_out + b_out


if __name__ == "__main__":
    # Small, module-consistent shapes (B=4 exercises the batched block path).
    B, N = 4, 8
    n_in_feat = 32
    n_head = 2
    n_head_feat = 16
    hidden = n_head * n_head_feat  # 32

    key = jax.random.PRNGKey(0)
    kx, kqkv, kwout, kbout = jax.random.split(key, 4)

    x = jax.random.normal(kx, (B, N, n_in_feat), dtype=jnp.float32)
    # PyTorch Linear weights are (out,in); generated directly in (in,out) layout.
    w_qkv = jax.random.normal(kqkv, (n_in_feat, 3 * hidden), dtype=jnp.float32) * 0.1
    w_out = jax.random.normal(kwout, (hidden, n_in_feat), dtype=jnp.float32) * 0.1
    b_out = jax.random.normal(kbout, (n_in_feat,), dtype=jnp.float32) * 0.1

    y = multihead_self_attention(
        x, w_qkv, w_out, b_out, n_head=n_head, n_head_feat=n_head_feat)
    y = jax.block_until_ready(y)

    y_ref = _reference(x, w_qkv, w_out, b_out, n_head=n_head, n_head_feat=n_head_feat)
    assert y.shape == (B, N, n_in_feat)
    assert jnp.allclose(y, y_ref, atol=1e-3, rtol=1e-3), "mismatch vs JAX reference"

    print("KERNEL_OK")
</pallas_src>

<mosaic_0001>
module attributes {stable_mosaic.version = 11 : i64} {
  func.func @_mhsa_kernel(%arg0: i32, %arg1: memref<4x8x32xf32, #tpu.memory_space<vmem>>, %arg2: memref<32x96xf32, #tpu.memory_space<vmem>>, %arg3: memref<32x32xf32, #tpu.memory_space<vmem>>, %arg4: memref<1x32xf32, #tpu.memory_space<vmem>>, %arg5: memref<4x8x32xf32, #tpu.memory_space<vmem>>, %arg6: memref<32x32xf32, #tpu.memory_space<vmem>>) attributes {dimension_semantics = [#tpu.dimension_semantics<parallel>], iteration_bounds = array<i64: 1>, scalar_prefetch = 0 : i64, scratch_operands = 1 : i64, tpu.core_type = #tpu.core_type<tc>, window_params = [{transform_indices = @transform_0, window_bounds = array<i64: 4, 8, 32>}, {pipeline_mode = #tpu.pipeline_mode<synchronous>, transform_indices = @transform_1, window_bounds = array<i64: 32, 96>}, {pipeline_mode = #tpu.pipeline_mode<synchronous>, transform_indices = @transform_2, window_bounds = array<i64: 32, 32>}, {pipeline_mode = #tpu.pipeline_mode<synchronous>, transform_indices = @transform_3, window_bounds = array<i64: 1, 32>}, {transform_indices = @transform_4, window_bounds = array<i64: 4, 8, 32>}]} {
    %c0 = arith.constant 0 : index
    %c0_0 = arith.constant 0 : index
    %c0_1 = arith.constant 0 : index
    %0 = vector.load %arg1[%c0, %c0_0, %c0_1] : memref<4x8x32xf32, #tpu.memory_space<vmem>>, vector<4x8x32xf32>
    %c0_2 = arith.constant 0 : index
    %c0_3 = arith.constant 0 : index
    %1 = vector.load %arg2[%c0_2, %c0_3] : memref<32x96xf32, #tpu.memory_space<vmem>>, vector<32x96xf32>
    %c0_4 = arith.constant 0 : index
    %c0_5 = arith.constant 0 : index
    %2 = vector.load %arg3[%c0_4, %c0_5] : memref<32x32xf32, #tpu.memory_space<vmem>>, vector<32x32xf32>
    %3 = vector.shape_cast %0 : vector<4x8x32xf32> to vector<32x32xf32>
    %cst = arith.constant dense<0.000000e+00> : vector<32x96xf32>
    %4 = tpu.matmul %3, %1, %cst {dimension_numbers = #tpu.dot_dimension_numbers<[1], [0], [0], [1], [0, 0, 1, 1], [], []>} : vector<32x32xf32>, vector<32x96xf32>, vector<32x96xf32> -> vector<32x96xf32>
    %5 = vector.shape_cast %4 : vector<32x96xf32> to vector<4x8x96xf32>
    %6 = vector.extract_strided_slice %5 {offsets = [0, 0, 0], sizes = [4, 8, 16], strides = [1, 1, 1]} : vector<4x8x96xf32> to vector<4x8x16xf32>
    %cst_6 = arith.constant 2.500000e-01 : f32
    %7 = vector.broadcast %cst_6 : f32 to vector<4x8x16xf32>
    %8 = arith.mulf %6, %7 : vector<4x8x16xf32>
    %9 = vector.extract_strided_slice %5 {offsets = [0, 0, 32], sizes = [4, 8, 16], strides = [1, 1, 1]} : vector<4x8x96xf32> to vector<4x8x16xf32>
    %10 = vector.extract_strided_slice %5 {offsets = [0, 0, 64], sizes = [4, 8, 16], strides = [1, 1, 1]} : vector<4x8x96xf32> to vector<4x8x16xf32>
    %cst_7 = arith.constant dense<0.000000e+00> : vector<4x8x8xf32>
    %11 = tpu.matmul %8, %9, %cst_7 {dimension_numbers = #tpu.dot_dimension_numbers<[2], [2], [1], [1], [0, 0, 0, 1, 1, 1], [0], [0]>} : vector<4x8x16xf32>, vector<4x8x16xf32>, vector<4x8x8xf32> -> vector<4x8x8xf32>
    %cst_8 = arith.constant dense<0xFF800000> : vector<4x8xf32>
    %12 = vector.multi_reduction <maximumf>, %11, %cst_8 [2] : vector<4x8x8xf32> to vector<4x8xf32>
    %13 = vector.shape_cast %12 : vector<4x8xf32> to vector<4x8x1xf32>
    %14 = vector.broadcast %13 : vector<4x8x1xf32> to vector<4x8x8xf32>
    %15 = arith.subf %11, %14 : vector<4x8x8xf32>
    %16 = math.exp %15 : vector<4x8x8xf32>
    %cst_9 = arith.constant dense<0.000000e+00> : vector<4x8xf32>
    %17 = vector.multi_reduction <add>, %16, %cst_9 [2] : vector<4x8x8xf32> to vector<4x8xf32>
    %18 = vector.shape_cast %17 : vector<4x8xf32> to vector<4x8x1xf32>
    %cst_10 = arith.constant dense<0.000000e+00> : vector<4x8x16xf32>
    %19 = tpu.matmul %16, %10, %cst_10 {dimension_numbers = #tpu.dot_dimension_numbers<[2], [1], [1], [2], [0, 0, 0, 1, 1, 2], [0], [0]>} : vector<4x8x8xf32>, vector<4x8x16xf32>, vector<4x8x16xf32> -> vector<4x8x16xf32>
    %20 = tpu.reciprocal %18 {approx = true} : vector<4x8x1xf32> -> vector<4x8x1xf32>
    %21 = vector.broadcast %20 : vector<4x8x1xf32> to vector<4x8x16xf32>
    %22 = arith.mulf %19, %21 : vector<4x8x16xf32>
    %23 = vector.shape_cast %22 : vector<4x8x16xf32> to vector<32x16xf32>
    %c0_11 = arith.constant 0 : index
    %c0_12 = arith.constant 0 : index
    %24 = vector.load %arg6[%c0_11, %c0_12] : memref<32x32xf32, #tpu.memory_space<vmem>>, vector<32x16xf32>
    tpu.vector_store %arg6[%c0_11, %c0_12], %23 {strides = array<i32>} : memref<32x32xf32, #tpu.memory_space<vmem>>, vector<32x16xf32>,
    %25 = vector.extract_strided_slice %5 {offsets = [0, 0, 16], sizes = [4, 8, 16], strides = [1, 1, 1]} : vector<4x8x96xf32> to vector<4x8x16xf32>
    %cst_13 = arith.constant 2.500000e-01 : f32
    %26 = vector.broadcast %cst_13 : f32 to vector<4x8x16xf32>
    %27 = arith.mulf %25, %26 : vector<4x8x16xf32>
    %28 = vector.extract_strided_slice %5 {offsets = [0, 0, 48], sizes = [4, 8, 16], strides = [1, 1, 1]} : vector<4x8x96xf32> to vector<4x8x16xf32>
    %29 = vector.extract_strided_slice %5 {offsets = [0, 0, 80], sizes = [4, 8, 16], strides = [1, 1, 1]} : vector<4x8x96xf32> to vector<4x8x16xf32>
    %cst_14 = arith.constant dense<0.000000e+00> : vector<4x8x8xf32>
    %30 = tpu.matmul %27, %28, %cst_14 {dimension_numbers = #tpu.dot_dimension_numbers<[2], [2], [1], [1], [0, 0, 0, 1, 1, 1], [0], [0]>} : vector<4x8x16xf32>, vector<4x8x16xf32>, vector<4x8x8xf32> -> vector<4x8x8xf32>
    %cst_15 = arith.constant dense<0xFF800000> : vector<4x8xf32>
    %31 = vector.multi_reduction <maximumf>, %30, %cst_15 [2] : vector<4x8x8xf32> to vector<4x8xf32>
    %32 = vector.shape_cast %31 : vector<4x8xf32> to vector<4x8x1xf32>
    %33 = vector.broadcast %32 : vector<4x8x1xf32> to vector<4x8x8xf32>
    %34 = arith.subf %30, %33 : vector<4x8x8xf32>
    %35 = math.exp %34 : vector<4x8x8xf32>
    %cst_16 = arith.constant dense<0.000000e+00> : vector<4x8xf32>
    %36 = vector.multi_reduction <add>, %35, %cst_16 [2] : vector<4x8x8xf32> to vector<4x8xf32>
    %37 = vector.shape_cast %36 : vector<4x8xf32> to vector<4x8x1xf32>
    %cst_17 = arith.constant dense<0.000000e+00> : vector<4x8x16xf32>
    %38 = tpu.matmul %35, %29, %cst_17 {dimension_numbers = #tpu.dot_dimension_numbers<[2], [1], [1], [2], [0, 0, 0, 1, 1, 2], [0], [0]>} : vector<4x8x8xf32>, vector<4x8x16xf32>, vector<4x8x16xf32> -> vector<4x8x16xf32>
    %39 = tpu.reciprocal %37 {approx = true} : vector<4x8x1xf32> -> vector<4x8x1xf32>
    %40 = vector.broadcast %39 : vector<4x8x1xf32> to vector<4x8x16xf32>
    %41 = arith.mulf %38, %40 : vector<4x8x16xf32>
    %42 = vector.shape_cast %41 : vector<4x8x16xf32> to vector<32x16xf32>
    %c0_18 = arith.constant 0 : index
    %c16 = arith.constant 16 : index
    %43 = vector.load %arg6[%c0_18, %c16] : memref<32x32xf32, #tpu.memory_space<vmem>>, vector<32x16xf32>
    tpu.vector_store %arg6[%c0_18, %c16], %42 {strides = array<i32>} : memref<32x32xf32, #tpu.memory_space<vmem>>, vector<32x16xf32>,
    %c0_19 = arith.constant 0 : index
    %c0_20 = arith.constant 0 : index
    %44 = vector.load %arg6[%c0_19, %c0_20] : memref<32x32xf32, #tpu.memory_space<vmem>>, vector<32x32xf32>
    %cst_21 = arith.constant dense<0.000000e+00> : vector<32x32xf32>
    %45 = tpu.matmul %44, %2, %cst_21 {dimension_numbers = #tpu.dot_dimension_numbers<[1], [0], [0], [1], [0, 0, 1, 1], [], []>} : vector<32x32xf32>, vector<32x32xf32>, vector<32x32xf32> -> vector<32x32xf32>
    %c0_22 = arith.constant 0 : index
    %c0_23 = arith.constant 0 : index
    %46 = vector.load %arg4[%c0_22, %c0_23] : memref<1x32xf32, #tpu.memory_space<vmem>>, vector<1x32xf32>
    %47 = vector.broadcast %46 : vector<1x32xf32> to vector<32x32xf32>
    %48 = arith.addf %45, %47 : vector<32x32xf32>
    %49 = vector.shape_cast %48 : vector<32x32xf32> to vector<4x8x32xf32>
    %c0_24 = arith.constant 0 : index
    %c0_25 = arith.constant 0 : index
    %c0_26 = arith.constant 0 : index
    %50 = vector.load %arg5[%c0_24, %c0_25, %c0_26] : memref<4x8x32xf32, #tpu.memory_space<vmem>>, vector<4x8x32xf32>
    tpu.vector_store %arg5[%c0_24, %c0_25, %c0_26], %49 {strides = array<i32>} : memref<4x8x32xf32, #tpu.memory_space<vmem>>, vector<4x8x32xf32>,
    return
  }
  func.func @transform_0(%arg0: i32) -> (i32, i32, i32) {
    %c0_i32 = arith.constant 0 : i32
    %c0_i32_0 = arith.constant 0 : i32
    %c0_i32_1 = arith.constant 0 : i32
    return %arg0, %c0_i32, %c0_i32_0 : i32, i32, i32
  }
  func.func @transform_1(%arg0: i32) -> (i32, i32) {
    %c0_i32 = arith.constant 0 : i32
    %c0_i32_0 = arith.constant 0 : i32
    %c0_i32_1 = arith.constant 0 : i32
    return %c0_i32, %c0_i32_0 : i32, i32
  }
  func.func @transform_2(%arg0: i32) -> (i32, i32) {
    %c0_i32 = arith.constant 0 : i32
    %c0_i32_0 = arith.constant 0 : i32
    %c0_i32_1 = arith.constant 0 : i32
    return %c0_i32, %c0_i32_0 : i32, i32
  }
  func.func @transform_3(%arg0: i32) -> (i32, i32) {
    %c0_i32 = arith.constant 0 : i32
    %c0_i32_0 = arith.constant 0 : i32
    %c0_i32_1 = arith.constant 0 : i32
    return %c0_i32, %c0_i32_0 : i32, i32
  }
  func.func @transform_4(%arg0: i32) -> (i32, i32, i32) {
    %c0_i32 = arith.constant 0 : i32
    %c0_i32_0 = arith.constant 0 : i32
    %c0_i32_1 = arith.constant 0 : i32
    return %arg0, %c0_i32, %c0_i32_0 : i32, i32, i32
  }
}

module attributes {stable_mosaic.version = 11 : i64} {
  func.func @_mhsa_kernel(%arg0: i32, %arg1: memref<4x8x32xf32, #tpu.memory_space<vmem>>, %arg2: memref<32x96xf32, #tpu.memory_space<vmem>>, %arg3: memref<32x32xf32, #tpu.memory_space<vmem>>, %arg4: memref<1x32xf32, #tpu.memory_space<vmem>>, %arg5: memref<4x8x32xf32, #tpu.memory_space<vmem>>, %arg6: memref<32x32xf32, #tpu.memory_space<vmem>>) attributes {dimension_semantics = [#tpu.dimension_semantics<parallel>], iteration_bounds = array<i64: 1>, scalar_prefetch = 0 : i64, scratch_operands = 1 : i64, tpu.core_type = #tpu.core_type<tc>, window_params = [{transform_indices = @transform_0, window_bounds = array<i64: 4, 8, 32>}, {pipeline_mode = #tpu.pipeline_mode<synchronous>, transform_indices = @transform_1, window_bounds = array<i64: 32, 96>}, {pipeline_mode = #tpu.pipeline_mode<synchronous>, transform_indices = @transform_2, window_bounds = array<i64: 32, 32>}, {pipeline_mode = #tpu.pipeline_mode<synchronous>, transform_indices = @transform_3, window_bounds = array<i64: 1, 32>}, {transform_indices = @transform_4, window_bounds = array<i64: 4, 8, 32>}]} {
    %c0 = arith.constant 0 : index
    %c0_0 = arith.constant 0 : index
    %c0_1 = arith.constant 0 : index
    %0 = vector.load %arg1[%c0, %c0_0, %c0_1] : memref<4x8x32xf32, #tpu.memory_space<vmem>>, vector<4x8x32xf32>
    %c0_2 = arith.constant 0 : index
    %c0_3 = arith.constant 0 : index
    %1 = vector.load %arg2[%c0_2, %c0_3] : memref<32x96xf32, #tpu.memory_space<vmem>>, vector<32x96xf32>
    %c0_4 = arith.constant 0 : index
    %c0_5 = arith.constant 0 : index
    %2 = vector.load %arg3[%c0_4, %c0_5] : memref<32x32xf32, #tpu.memory_space<vmem>>, vector<32x32xf32>
    %3 = vector.shape_cast %0 : vector<4x8x32xf32> to vector<32x32xf32>
    %cst = arith.constant dense<0.000000e+00> : vector<32x96xf32>
    %4 = tpu.matmul %3, %1, %cst {dimension_numbers = #tpu.dot_dimension_numbers<[1], [0], [0], [1], [0, 0, 1, 1], [], []>} : vector<32x32xf32>, vector<32x96xf32>, vector<32x96xf32> -> vector<32x96xf32>
    %5 = vector.shape_cast %4 : vector<32x96xf32> to vector<4x8x96xf32>
    %6 = vector.extract_strided_slice %5 {offsets = [0, 0, 0], sizes = [4, 8, 16], strides = [1, 1, 1]} : vector<4x8x96xf32> to vector<4x8x16xf32>
    %cst_6 = arith.constant 2.500000e-01 : f32
    %7 = vector.broadcast %cst_6 : f32 to vector<4x8x16xf32>
    %8 = arith.mulf %6, %7 : vector<4x8x16xf32>
    %9 = vector.extract_strided_slice %5 {offsets = [0, 0, 32], sizes = [4, 8, 16], strides = [1, 1, 1]} : vector<4x8x96xf32> to vector<4x8x16xf32>
    %10 = vector.extract_strided_slice %5 {offsets = [0, 0, 64], sizes = [4, 8, 16], strides = [1, 1, 1]} : vector<4x8x96xf32> to vector<4x8x16xf32>
    %cst_7 = arith.constant dense<0.000000e+00> : vector<4x8x8xf32>
    %11 = tpu.matmul %8, %9, %cst_7 {dimension_numbers = #tpu.dot_dimension_numbers<[2], [2], [1], [1], [0, 0, 0, 1, 1, 1], [0], [0]>} : vector<4x8x16xf32>, vector<4x8x16xf32>, vector<4x8x8xf32> -> vector<4x8x8xf32>
    %cst_8 = arith.constant dense<0xFF800000> : vector<4x8xf32>
    %12 = vector.multi_reduction <maximumf>, %11, %cst_8 [2] : vector<4x8x8xf32> to vector<4x8xf32>
    %13 = vector.shape_cast %12 : vector<4x8xf32> to vector<4x8x1xf32>
    %14 = vector.broadcast %13 : vector<4x8x1xf32> to vector<4x8x8xf32>
    %15 = arith.subf %11, %14 : vector<4x8x8xf32>
    %16 = math.exp %15 : vector<4x8x8xf32>
    %cst_9 = arith.constant dense<0.000000e+00> : vector<4x8xf32>
    %17 = vector.multi_reduction <add>, %16, %cst_9 [2] : vector<4x8x8xf32> to vector<4x8xf32>
    %18 = vector.shape_cast %17 : vector<4x8xf32> to vector<4x8x1xf32>
    %cst_10 = arith.constant dense<0.000000e+00> : vector<4x8x16xf32>
    %19 = tpu.matmul %16, %10, %cst_10 {dimension_numbers = #tpu.dot_dimension_numbers<[2], [1], [1], [2], [0, 0, 0, 1, 1, 2], [0], [0]>} : vector<4x8x8xf32>, vector<4x8x16xf32>, vector<4x8x16xf32> -> vector<4x8x16xf32>
    %20 = tpu.reciprocal %18 {approx = true} : vector<4x8x1xf32> -> vector<4x8x1xf32>
    %21 = vector.broadcast %20 : vector<4x8x1xf32> to vector<4x8x16xf32>
    %22 = arith.mulf %19, %21 : vector<4x8x16xf32>
    %23 = vector.shape_cast %22 : vector<4x8x16xf32> to vector<32x16xf32>
    %c0_11 = arith.constant 0 : index
    %c0_12 = arith.constant 0 : index
    %24 = vector.load %arg6[%c0_11, %c0_12] : memref<32x32xf32, #tpu.memory_space<vmem>>, vector<32x16xf32>
    tpu.vector_store %arg6[%c0_11, %c0_12], %23 {strides = array<i32>} : memref<32x32xf32, #tpu.memory_space<vmem>>, vector<32x16xf32>,
    %25 = vector.extract_strided_slice %5 {offsets = [0, 0, 16], sizes = [4, 8, 16], strides = [1, 1, 1]} : vector<4x8x96xf32> to vector<4x8x16xf32>
    %cst_13 = arith.constant 2.500000e-01 : f32
    %26 = vector.broadcast %cst_13 : f32 to vector<4x8x16xf32>
    %27 = arith.mulf %25, %26 : vector<4x8x16xf32>
    %28 = vector.extract_strided_slice %5 {offsets = [0, 0, 48], sizes = [4, 8, 16], strides = [1, 1, 1]} : vector<4x8x96xf32> to vector<4x8x16xf32>
    %29 = vector.extract_strided_slice %5 {offsets = [0, 0, 80], sizes = [4, 8, 16], strides = [1, 1, 1]} : vector<4x8x96xf32> to vector<4x8x16xf32>
    %cst_14 = arith.constant dense<0.000000e+00> : vector<4x8x8xf32>
    %30 = tpu.matmul %27, %28, %cst_14 {dimension_numbers = #tpu.dot_dimension_numbers<[2], [2], [1], [1], [0, 0, 0, 1, 1, 1], [0], [0]>} : vector<4x8x16xf32>, vector<4x8x16xf32>, vector<4x8x8xf32> -> vector<4x8x8xf32>
    %cst_15 = arith.constant dense<0xFF800000> : vector<4x8xf32>
    %31 = vector.multi_reduction <maximumf>, %30, %cst_15 [2] : vector<4x8x8xf32> to vector<4x8xf32>
    %32 = vector.shape_cast %31 : vector<4x8xf32> to vector<4x8x1xf32>
    %33 = vector.broadcast %32 : vector<4x8x1xf32> to vector<4x8x8xf32>
    %34 = arith.subf %30, %33 : vector<4x8x8xf32>
    %35 = math.exp %34 : vector<4x8x8xf32>
    %cst_16 = arith.constant dense<0.000000e+00> : vector<4x8xf32>
    %36 = vector.multi_reduction <add>, %35, %cst_16 [2] : vector<4x8x8xf32> to vector<4x8xf32>
    %37 = vector.shape_cast %36 : vector<4x8xf32> to vector<4x8x1xf32>
    %cst_17 = arith.constant dense<0.000000e+00> : vector<4x8x16xf32>
    %38 = tpu.matmul %35, %29, %cst_17 {dimension_numbers = #tpu.dot_dimension_numbers<[2], [1], [1], [2], [0, 0, 0, 1, 1, 2], [0], [0]>} : vector<4x8x8xf32>, vector<4x8x16xf32>, vector<4x8x16xf32> -> vector<4x8x16xf32>
    %39 = tpu.reciprocal %37 {approx = true} : vector<4x8x1xf32> -> vector<4x8x1xf32>
    %40 = vector.broadcast %39 : vector<4x8x1xf32> to vector<4x8x16xf32>
    %41 = arith.mulf %38, %40 : vector<4x8x16xf32>
    %42 = vector.shape_cast %41 : vector<4x8x16xf32> to vector<32x16xf32>
    %c0_18 = arith.constant 0 : index
    %c16 = arith.constant 16 : index
    %43 = vector.load %arg6[%c0_18, %c16] : memref<32x32xf32, #tpu.memory_space<vmem>>, vector<32x16xf32>
    tpu.vector_store %arg6[%c0_18, %c16], %42 {strides = array<i32>} : memref<32x32xf32, #tpu.memory_space<vmem>>, vector<32x16xf32>,
    %c0_19 = arith.constant 0 : index
    %c0_20 = arith.constant 0 : index
    %44 = vector.load %arg6[%c0_19, %c0_20] : memref<32x32xf32, #tpu.memory_space<vmem>>, vector<32x32xf32>
    %cst_21 = arith.constant dense<0.000000e+00> : vector<32x32xf32>
    %45 = tpu.matmul %44, %2, %cst_21 {dimension_numbers = #tpu.dot_dimension_numbers<[1], [0], [0], [1], [0, 0, 1, 1], [], []>} : vector<32x32xf32>, vector<32x32xf32>, vector<32x32xf32> -> vector<32x32xf32>
    %c0_22 = arith.constant 0 : index
    %c0_23 = arith.constant 0 : index
    %46 = vector.load %arg4[%c0_22, %c0_23] : memref<1x32xf32, #tpu.memory_space<vmem>>, vector<1x32xf32>
    %47 = vector.broadcast %46 : vector<1x32xf32> to vector<32x32xf32>
    %48 = arith.addf %45, %47 : vector<32x32xf32>
    %49 = vector.shape_cast %48 : vector<32x32xf32> to vector<4x8x32xf32>
    %c0_24 = arith.constant 0 : index
    %c0_25 = arith.constant 0 : index
    %c0_26 = arith.constant 0 : index
    %50 = vector.load %arg5[%c0_24, %c0_25, %c0_26] : memref<4x8x32xf32, #tpu.memory_space<vmem>>, vector<4x8x32xf32>
    tpu.vector_store %arg5[%c0_24, %c0_25, %c0_26], %49 {strides = array<i32>} : memref<4x8x32xf32, #tpu.memory_space<vmem>>, vector<4x8x32xf32>,
    return
  }
  func.func @transform_0(%arg0: i32) -> (i32, i32, i32) {
    %c0_i32 = arith.constant 0 : i32
    %c0_i32_0 = arith.constant 0 : i32
    %c0_i32_1 = arith.constant 0 : i32
    return %arg0, %c0_i32, %c0_i32_0 : i32, i32, i32
  }
  func.func @transform_1(%arg0: i32) -> (i32, i32) {
    %c0_i32 = arith.constant 0 : i32
    %c0_i32_0 = arith.constant 0 : i32
    %c0_i32_1 = arith.constant 0 : i32
    return %c0_i32, %c0_i32_0 : i32, i32
  }
  func.func @transform_2(%arg0: i32) -> (i32, i32) {
    %c0_i32 = arith.constant 0 : i32
    %c0_i32_0 = arith.constant 0 : i32
    %c0_i32_1 = arith.constant 0 : i32
    return %c0_i32, %c0_i32_0 : i32, i32
  }
  func.func @transform_3(%arg0: i32) -> (i32, i32) {
    %c0_i32 = arith.constant 0 : i32
    %c0_i32_0 = arith.constant 0 : i32
    %c0_i32_1 = arith.constant 0 : i32
    return %c0_i32, %c0_i32_0 : i32, i32
  }
  func.func @transform_4(%arg0: i32) -> (i32, i32, i32) {
    %c0_i32 = arith.constant 0 : i32
    %c0_i32_0 = arith.constant 0 : i32
    %c0_i32_1 = arith.constant 0 : i32
    return %arg0, %c0_i32, %c0_i32_0 : i32, i32, i32
  }
}

</mosaic_0001>

<llo_original>
// kernel: tpu_custom_call.1
$region0: #{tpu_custom_call.1}
  #allocation0 [shape = 'u32[]', space=smem, size = 0x4, offset = 0x4, fixed_abs, tag = 'smem constant byte address 0x4 - core index']
  #allocation1 [shape = 'u32[144,128]{1,0:T(1,128)}', space=vmem, size = 0x12000, scoped, tag = 'internal scratch']
  #allocation2 [shape = 'f32[32,32]{1,0:T(8,128)}', space=vmem, size = 0x4000, scoped, tag = 'scratch operand']
  %s0 = inlined_call_operand.hbm [shape: f32[4,8,32], index: 0, kind: input, shape index: {}]
  %s1 = inlined_call_operand.hbm [shape: f32[32,96], index: 1, kind: input, shape index: {}]
  %s2 = inlined_call_operand.hbm [shape: f32[32,32], index: 2, kind: input, shape index: {}]
  %s3 = inlined_call_operand.vmem [shape: f32[1,32], index: 3, kind: input, shape index: {}]
  %s4 = inlined_call_operand.hbm [shape: f32[4,8,32], index: 4, kind: output, shape index: {}]
  %s5 = sld [smem:[#allocation0]]
  $region38: #{tpu_custom_call.1} parent=0
    _
  %s7 = ssub.s32 1, %s5
  %s8 = scalar_select 0, %s7, %s5
  $region1: #{tpu_custom_call.1} parent=0
    #allocation3 [shape = 'u8[16384]{0}', space=vmem, size = 0x4000, scoped, tag = 'input window, operand 0, single buffered']
    #allocation4 [shape = 's32[1]{0}', space=sflag, size = 0x4, scoped, tag = 'scoped memory for tpu_custom_call.1']
    #allocation5 [shape = 's32[1]{0}', space=sflag, size = 0x4, scoped, tag = 'scoped memory for tpu_custom_call.1']
    #allocation6 [shape = 'u8[16384]{0}', space=vmem, size = 0x4000, scoped, tag = 'input window, operand 1, single buffered']
    #allocation7 [shape = 's32[1]{0}', space=sflag, size = 0x4, scoped, tag = 'scoped memory for tpu_custom_call.1']
    #allocation8 [shape = 'u8[16384]{0}', space=vmem, size = 0x4000, scoped, tag = 'input window, operand 2, single buffered']
    #allocation9 [shape = 'u8[16384]{0}', space=vmem, size = 0x4000, scoped, tag = 'output window, operand 0, single buffered']
    %9 = vsyncpa [#allocation4], 0
    %10 = vsyncpa [#allocation7], 0
    %11 = vsyncpa [#allocation5], 0
    // Predicated region
    $region2: #{tpu_custom_call.1} parent=1 // pred_check
      _
    $region3: #{tpu_custom_call.1} parent=1 // pred_check_branch
      %13 = sbr.rel (0) target = $region5
    $region4: #{tpu_custom_call.1} parent=1 // pred_region
      %s15 = ssub.s32 512, 512
      %16 = vsyncadd [#allocation4], %s15
      %s17 = sshll.u32 [#allocation3], 4
      %s18 = int_to_ptr.vmem [resolvable:$true] %s17
      %23 = dma.hbm_to_vmem [thread:$0]  %s0, 512, %s18, [#allocation4], 128, 128, 8
    $region5: #{tpu_custom_call.1} parent=1 // pred_fallthru
      _
    // Predicated region
    $region6: #{tpu_custom_call.1} parent=1 // pred_check
      _
    $region7: #{tpu_custom_call.1} parent=1 // pred_check_branch
      %25 = sbr.rel (0) target = $region9
    $region8: #{tpu_custom_call.1} parent=1 // pred_region
      %s27 = ssub.s32 512, 512
      %28 = vsyncadd [#allocation7], %s27
      %s29 = sshll.u32 [#allocation6], 4
      %s30 = int_to_ptr.vmem [resolvable:$true] %s29
      %35 = dma.hbm_to_vmem [thread:$0]  %s1, 512, %s30, [#allocation7], 128, 128, 8
    $region9: #{tpu_custom_call.1} parent=1 // pred_fallthru
      _
    // Predicated region
    $region10: #{tpu_custom_call.1} parent=1 // pred_check
      _
    $region11: #{tpu_custom_call.1} parent=1 // pred_check_branch
      %37 = sbr.rel (0) target = $region13
    $region12: #{tpu_custom_call.1} parent=1 // pred_region
      %s39 = ssub.s32 512, 512
      %40 = vsyncadd [#allocation7], %s39
      %s41 = sshll.u32 [#allocation8], 4
      %s42 = int_to_ptr.vmem [resolvable:$true] %s41
      %47 = dma.hbm_to_vmem [thread:$0]  %s2, 512, %s42, [#allocation7], 128, 128, 8
    $region13: #{tpu_custom_call.1} parent=1 // pred_fallthru
      _
    // Predicated region
    $region14: #{tpu_custom_call.1} parent=1 // pred_check
      _
    $region15: #{tpu_custom_call.1} parent=1 // pred_check_branch
      %49 = sbr.rel (0) target = $region17
    $region16: #{tpu_custom_call.1} parent=1 // pred_region
      _
    $region17: #{tpu_custom_call.1} parent=1 // pred_fallthru
      _
    // Predicated region
    $region18: #{tpu_custom_call.1} parent=1 // pred_check
      _
    $region19: #{tpu_custom_call.1} parent=1 // pred_check_branch
      %51 = sbr.rel (0) target = $region21
    $region20: #{tpu_custom_call.1} parent=1 // pred_region
      %52 = dma.done [#allocation4], 512
    $region21: #{tpu_custom_call.1} parent=1 // pred_fallthru
      _
    // Predicated region
    $region22: #{tpu_custom_call.1} parent=1 // pred_check
      _
    $region23: #{tpu_custom_call.1} parent=1 // pred_check_branch
      %54 = sbr.rel (0) target = $region25
    $region24: #{tpu_custom_call.1} parent=1 // pred_region
      %55 = dma.done [#allocation7], 512
    $region25: #{tpu_custom_call.1} parent=1 // pred_fallthru
      _
    // Predicated region
    $region26: #{tpu_custom_call.1} parent=1 // pred_check
      _
    $region27: #{tpu_custom_call.1} parent=1 // pred_check_branch
      %57 = sbr.rel (0) target = $region29
    $region28: #{tpu_custom_call.1} parent=1 // pred_region
      %58 = dma.done [#allocation7], 512
    $region29: #{tpu_custom_call.1} parent=1 // pred_fallthru
      _
    %v59 = vld [vmem:[#allocation3] sm:$0xff]
    %v60 = vld [vmem:[#allocation3 + $0x8] sm:$0xff]
    %v61 = vld [vmem:[#allocation3 + $0x10] sm:$0xff]
    %v62 = vld [vmem:[#allocation3 + $0x18] sm:$0xff]
    %v63 = vld [vmem:[#allocation6] sm:$0xff]
    %v64 = vld [vmem:[#allocation6 + $0x8] sm:$0xff]
    %v65 = vld [vmem:[#allocation6 + $0x10] sm:$0xff]
    %v66 = vld [vmem:[#allocation6 + $0x18] sm:$0xff]
    %v67 = vld [vmem:[#allocation8] sm:$0xff]
    %v68 = vld [vmem:[#allocation8 + $0x8] sm:$0xff]
    %v69 = vld [vmem:[#allocation8 + $0x10] sm:$0xff]
    %v70 = vld [vmem:[#allocation8 + $0x18] sm:$0xff]
    %vm71 = vcmask 261120
    %v73 = vsel %vm71, %v59, 0
    %v76 = vsel %vm71, %v60, 0
    %v79 = vsel %vm71, %v61, 0
    %v82 = vsel %vm71, %v62, 0
    %84 = vmatprep.subr.mxu0 0.0
    %85 = vmatpush1.msra.mxu0 %v63
    %86 = vmatprep.subr.mxu0 0.0
    %87 = vmatpush1.msra.mxu0 %v64
    %88 = vmatprep.subr.mxu0 0.0
    %89 = vmatpush1.msra.mxu0 %v65
    %90 = vmatprep.subr.mxu0 0.0
    %91 = vmatpush1.msra.mxu0 %v66
    %92 = vmatprep.subr.mxu0 0.0
    %93 = vmatpush1.msra.mxu0 0.0
    %94 = vmatprep.subr.mxu0 0.0
    %95 = vmatpush1.msra.mxu0 0.0
    %96 = vmatprep.subr.mxu0 0.0
    %97 = vmatpush1.msra.mxu0 0.0
    %98 = vmatprep.subr.mxu0 0.0
    %99 = vmatpush1.msra.mxu0 0.0
    %100 = vmatprep.subr.mxu0 0.0
    %101 = vmatpush1.msra.mxu0 0.0
    %102 = vmatprep.subr.mxu0 0.0
    %103 = vmatpush1.msra.mxu0 0.0
    %104 = vmatprep.subr.mxu0 0.0
    %105 = vmatpush1.msra.mxu0 0.0
    %106 = vmatprep.subr.mxu0 0.0
    %107 = vmatpush1.msra.mxu0 0.0
    %108 = vmatprep.subr.mxu0 0.0
    %109 = vmatpush1.msra.mxu0 0.0
    %110 = vmatprep.subr.mxu0 0.0
    %111 = vmatpush1.msra.mxu0 0.0
    %112 = vmatprep.subr.mxu0 0.0
    %113 = vmatpush1.msra.mxu0 0.0
    %114 = vmatprep.subr.mxu0 0.0
    %115 = vmatpush1.msra.mxu0 0.0
    %116 = vmatprep.subr.mxu0 0.0
    %117 = vmatpush1.msra.mxu0 0.0
    %118 = vmatprep.subr.mxu0 0.0
    %119 = vmatpush1.msra.mxu0 0.0
    %120 = vmatprep.subr.mxu0 0.0
    %121 = vmatpush1.msra.mxu0 0.0
    %122 = vmatprep.subr.mxu0 0.0
    %123 = vmatpush1.msra.mxu0 0.0
    %124 = vmatprep.subr.mxu0 0.0
    %125 = vmatpush1.msra.mxu0 0.0
    %126 = vmatprep.subr.mxu0 0.0
    %127 = vmatpush1.msra.mxu0 0.0
    %128 = vmatprep.subr.mxu0 0.0
    %129 = vmatpush1.msra.mxu0 0.0
    %130 = vmatprep.subr.mxu0 0.0
    %131 = vmatpush1.msra.mxu0 0.0
    %132 = vmatprep.subr.mxu0 0.0
    %133 = vmatpush1.msra.mxu0 0.0
    %134 = vmatprep.subr.mxu0 0.0
    %135 = vmatpush1.msra.mxu0 0.0
    %136 = vmatprep.subr.mxu0 0.0
    %137 = vmatpush1.msra.mxu0 0.0
    %138 = vmatprep.subr.mxu0 0.0
    %139 = vmatpush1.msra.mxu0 0.0
    %140 = vmatprep.subr.mxu0 0.0
    %141 = vmatpush1.msra.mxu0 0.0
    %142 = vmatprep.subr.mxu0 0.0
    %143 = vmatpush1.msra.mxu0 0.0
    %144 = vmatprep.subr.mxu0 0.0
    %145 = vmatpush1.msra.mxu0 0.0
    %146 = vmatprep.subr.mxu0 0.0
    %147 = vmatpush1.msra.mxu0 0.0
    %148 = vmatprep.mubr.f32.mxu0 0.0
    %149 = vmatmul.mubr.f32.gmra.mrb[0].mxu0 %v73
    %v150 = vpop.f32.mrb[0].mxu0
    %v151 = vadd.f32 0.0, %v150
    %v152 = vpop.f32.mrb[0].mxu0
    %153 = vmatprep.mubr.f32.mxu0 0.0
    %154 = vmatmul.mubr.f32.gmra.mrb[0].mxu0 %v76
    %v155 = vpop.f32.mrb[0].mxu0
    %v156 = vadd.f32 0.0, %v155
    %v157 = vpop.f32.mrb[0].mxu0
    %158 = vmatprep.mubr.f32.mxu0 0.0
    %159 = vmatmul.mubr.f32.gmra.mrb[0].mxu0 %v79
    %v160 = vpop.f32.mrb[0].mxu0
    %v161 = vadd.f32 0.0, %v160
    %v162 = vpop.f32.mrb[0].mxu0
    %163 = vmatprep.mubr.f32.mxu0 0.0
    %164 = vmatmul.mubr.f32.gmra.mrb[0].mxu0 %v82
    %v165 = vpop.f32.mrb[0].mxu0
    %v166 = vadd.f32 0.0, %v165
    %v167 = vpop.f32.mrb[0].mxu0
    %168 = vdwg.mxu0
    %v169 = vmul.f32 %v151, 0.25
    %v170 = vmul.f32 %v156, 0.25
    %v171 = vmul.f32 %v161, 0.25
    %v172 = vmul.f32 %v166, 0.25
    %174 = vrot.lane.b32.xlu0 %v151, 96
    %v175 = vpop.permute.xlu0 %174
    %vm176 = vcmask 130048
    %v178 = vsel %vm176, %v169, 0
    %v180 = vsel %vm176, %v175, 0
    %182 = vmatprep.subr.mxu0 0.0
    %183 = vmatpush1.xpose.msra.mxu0 %v180
    %184 = vmatprep.subr.mxu0 0.0
    %185 = vmatpush1.xpose.msra.mxu0 0.0
    %186 = vmatprep.subr.mxu0 0.0
    %187 = vmatpush1.xpose.msra.mxu0 0.0
    %188 = vmatprep.subr.mxu0 0.0
    %189 = vmatpush1.xpose.msra.mxu0 0.0
    %190 = vmatprep.subr.mxu0 0.0
    %191 = vmatpush1.xpose.msra.mxu0 0.0
    %192 = vmatprep.subr.mxu0 0.0
    %193 = vmatpush1.xpose.msra.mxu0 0.0
    %194 = vmatprep.subr.mxu0 0.0
    %195 = vmatpush1.xpose.msra.mxu0 0.0
    %196 = vmatprep.subr.mxu0 0.0
    %197 = vmatpush1.xpose.msra.mxu0 0.0
    %198 = vmatprep.subr.mxu0 0.0
    %199 = vmatpush1.xpose.msra.mxu0 0.0
    %200 = vmatprep.subr.mxu0 0.0
    %201 = vmatpush1.xpose.msra.mxu0 0.0
    %202 = vmatprep.subr.mxu0 0.0
    %203 = vmatpush1.xpose.msra.mxu0 0.0
    %204 = vmatprep.subr.mxu0 0.0
    %205 = vmatpush1.xpose.msra.mxu0 0.0
    %206 = vmatprep.subr.mxu0 0.0
    %207 = vmatpush1.xpose.msra.mxu0 0.0
    %208 = vmatprep.subr.mxu0 0.0
    %209 = vmatpush1.xpose.msra.mxu0 0.0
    %210 = vmatprep.subr.mxu0 0.0
    %211 = vmatpush1.xpose.msra.mxu0 0.0
    %212 = vmatprep.subr.mxu0 0.0
    %213 = vmatpush1.xpose.msra.mxu0 0.0
    %214 = vmatprep.subr.mxu0 0.0
    %215 = vmatpush1.xpose.msra.mxu0 0.0
    %216 = vmatprep.subr.mxu0 0.0
    %217 = vmatpush1.xpose.msra.mxu0 0.0
    %218 = vmatprep.subr.mxu0 0.0
    %219 = vmatpush1.xpose.msra.mxu0 0.0
    %220 = vmatprep.subr.mxu0 0.0
    %221 = vmatpush1.xpose.msra.mxu0 0.0
    %222 = vmatprep.subr.mxu0 0.0
    %223 = vmatpush1.xpose.msra.mxu0 0.0
    %224 = vmatprep.subr.mxu0 0.0
    %225 = vmatpush1.xpose.msra.mxu0 0.0
    %226 = vmatprep.subr.mxu0 0.0
    %227 = vmatpush1.xpose.msra.mxu0 0.0
    %228 = vmatprep.subr.mxu0 0.0
    %229 = vmatpush1.xpose.msra.mxu0 0.0
    %230 = vmatprep.subr.mxu0 0.0
    %231 = vmatpush1.xpose.msra.mxu0 0.0
    %232 = vmatprep.subr.mxu0 0.0
    %233 = vmatpush1.xpose.msra.mxu0 0.0
    %234 = vmatprep.subr.mxu0 0.0
    %235 = vmatpush1.xpose.msra.mxu0 0.0
    %236 = vmatprep.subr.mxu0 0.0
    %237 = vmatpush1.xpose.msra.mxu0 0.0
    %238 = vmatprep.subr.mxu0 0.0
    %239 = vmatpush1.xpose.msra.mxu0 0.0
    %240 = vmatprep.subr.mxu0 0.0
    %241 = vmatpush1.xpose.msra.mxu0 0.0
    %242 = vmatprep.subr.mxu0 0.0
    %243 = vmatpush1.xpose.msra.mxu0 0.0
    %244 = vmatprep.subr.mxu0 0.0
    %245 = vmatpush1.xpose.msra.mxu0 0.0
    %246 = vmatprep.mubr.f32.mxu0 0.0
    %247 = vmatmul.mubr.f32.gmra.mrb[0].mxu0 %v178
    %v248 = vpop.f32.mrb[0].mxu0
    %v249 = vadd.f32 0.0, %v248
    %v250 = vpop.f32.mrb[0].mxu0
    %251 = vdwg.mxu0
    %253 = vrot.lane.b32.xlu0 %v156, 96
    %v254 = vpop.permute.xlu0 %253
    %v256 = vsel %vm176, %v170, 0
    %v258 = vsel %vm176, %v254, 0
    %260 = vmatprep.subr.mxu0 0.0
    %261 = vmatpush1.xpose.msra.mxu0 %v258
    %262 = vmatprep.subr.mxu0 0.0
    %263 = vmatpush1.xpose.msra.mxu0 0.0
    %264 = vmatprep.subr.mxu0 0.0
    %265 = vmatpush1.xpose.msra.mxu0 0.0
    %266 = vmatprep.subr.mxu0 0.0
    %267 = vmatpush1.xpose.msra.mxu0 0.0
    %268 = vmatprep.subr.mxu0 0.0
    %269 = vmatpush1.xpose.msra.mxu0 0.0
    %270 = vmatprep.subr.mxu0 0.0
    %271 = vmatpush1.xpose.msra.mxu0 0.0
    %272 = vmatprep.subr.mxu0 0.0
    %273 = vmatpush1.xpose.msra.mxu0 0.0
    %274 = vmatprep.subr.mxu0 0.0
    %275 = vmatpush1.xpose.msra.mxu0 0.0
    %276 = vmatprep.subr.mxu0 0.0
    %277 = vmatpush1.xpose.msra.mxu0 0.0
    %278 = vmatprep.subr.mxu0 0.0
    %279 = vmatpush1.xpose.msra.mxu0 0.0
    %280 = vmatprep.subr.mxu0 0.0
    %281 = vmatpush1.xpose.msra.mxu0 0.0
    %282 = vmatprep.subr.mxu0 0.0
    %283 = vmatpush1.xpose.msra.mxu0 0.0
    %284 = vmatprep.subr.mxu0 0.0
    %285 = vmatpush1.xpose.msra.mxu0 0.0
    %286 = vmatprep.subr.mxu0 0.0
    %287 = vmatpush1.xpose.msra.mxu0 0.0
    %288 = vmatprep.subr.mxu0 0.0
    %289 = vmatpush1.xpose.msra.mxu0 0.0
    %290 = vmatprep.subr.mxu0 0.0
    %291 = vmatpush1.xpose.msra.mxu0 0.0
    %292 = vmatprep.subr.mxu0 0.0
    %293 = vmatpush1.xpose.msra.mxu0 0.0
    %294 = vmatprep.subr.mxu0 0.0
    %295 = vmatpush1.xpose.msra.mxu0 0.0
    %296 = vmatprep.subr.mxu0 0.0
    %297 = vmatpush1.xpose.msra.mxu0 0.0
    %298 = vmatprep.subr.mxu0 0.0
    %299 = vmatpush1.xpose.msra.mxu0 0.0
    %300 = vmatprep.subr.mxu0 0.0
    %301 = vmatpush1.xpose.msra.mxu0 0.0
    %302 = vmatprep.subr.mxu0 0.0
    %303 = vmatpush1.xpose.msra.mxu0 0.0
    %304 = vmatprep.subr.mxu0 0.0
    %305 = vmatpush1.xpose.msra.mxu0 0.0
    %306 = vmatprep.subr.mxu0 0.0
    %307 = vmatpush1.xpose.msra.mxu0 0.0
    %308 = vmatprep.subr.mxu0 0.0
    %309 = vmatpush1.xpose.msra.mxu0 0.0
    %310 = vmatprep.subr.mxu0 0.0
    %311 = vmatpush1.xpose.msra.mxu0 0.0
    %312 = vmatprep.subr.mxu0 0.0
    %313 = vmatpush1.xpose.msra.mxu0 0.0
    %314 = vmatprep.subr.mxu0 0.0
    %315 = vmatpush1.xpose.msra.mxu0 0.0
    %316 = vmatprep.subr.mxu0 0.0
    %317 = vmatpush1.xpose.msra.mxu0 0.0
    %318 = vmatprep.subr.mxu0 0.0
    %319 = vmatpush1.xpose.msra.mxu0 0.0
    %320 = vmatprep.subr.mxu0 0.0
    %321 = vmatpush1.xpose.msra.mxu0 0.0
    %322 = vmatprep.subr.mxu0 0.0
    %323 = vmatpush1.xpose.msra.mxu0 0.0
    %324 = vmatprep.mubr.f32.mxu0 0.0
    %325 = vmatmul.mubr.f32.gmra.mrb[0].mxu0 %v256
    %v326 = vpop.f32.mrb[0].mxu0
    %v327 = vadd.f32 0.0, %v326
    %v328 = vpop.f32.mrb[0].mxu0
    %329 = vdwg.mxu0
    %331 = vrot.lane.b32.xlu0 %v161, 96
    %v332 = vpop.permute.xlu0 %331
    %v334 = vsel %vm176, %v171, 0
    %v336 = vsel %vm176, %v332, 0
    %338 = vmatprep.subr.mxu0 0.0
    %339 = vmatpush1.xpose.msra.mxu0 %v336
    %340 = vmatprep.subr.mxu0 0.0
    %341 = vmatpush1.xpose.msra.mxu0 0.0
    %342 = vmatprep.subr.mxu0 0.0
    %343 = vmatpush1.xpose.msra.mxu0 0.0
    %344 = vmatprep.subr.mxu0 0.0
    %345 = vmatpush1.xpose.msra.mxu0 0.0
    %346 = vmatprep.subr.mxu0 0.0
    %347 = vmatpush1.xpose.msra.mxu0 0.0
    %348 = vmatprep.subr.mxu0 0.0
    %349 = vmatpush1.xpose.msra.mxu0 0.0
    %350 = vmatprep.subr.mxu0 0.0
    %351 = vmatpush1.xpose.msra.mxu0 0.0
    %352 = vmatprep.subr.mxu0 0.0
    %353 = vmatpush1.xpose.msra.mxu0 0.0
    %354 = vmatprep.subr.mxu0 0.0
    %355 = vmatpush1.xpose.msra.mxu0 0.0
    %356 = vmatprep.subr.mxu0 0.0
    %357 = vmatpush1.xpose.msra.mxu0 0.0
    %358 = vmatprep.subr.mxu0 0.0
    %359 = vmatpush1.xpose.msra.mxu0 0.0
    %360 = vmatprep.subr.mxu0 0.0
    %361 = vmatpush1.xpose.msra.mxu0 0.0
    %362 = vmatprep.subr.mxu0 0.0
    %363 = vmatpush1.xpose.msra.mxu0 0.0
    %364 = vmatprep.subr.mxu0 0.0
    %365 = vmatpush1.xpose.msra.mxu0 0.0
    %366 = vmatprep.subr.mxu0 0.0
    %367 = vmatpush1.xpose.msra.mxu0 0.0
    %368 = vmatprep.subr.mxu0 0.0
    %369 = vmatpush1.xpose.msra.mxu0 0.0
    %370 = vmatprep.subr.mxu0 0.0
    %371 = vmatpush1.xpose.msra.mxu0 0.0
    %372 = vmatprep.subr.mxu0 0.0
    %373 = vmatpush1.xpose.msra.mxu0 0.0
    %374 = vmatprep.subr.mxu0 0.0
    %375 = vmatpush1.xpose.msra.mxu0 0.0
    %376 = vmatprep.subr.mxu0 0.0
    %377 = vmatpush1.xpose.msra.mxu0 0.0
    %378 = vmatprep.subr.mxu0 0.0
    %379 = vmatpush1.xpose.msra.mxu0 0.0
    %380 = vmatprep.subr.mxu0 0.0
    %381 = vmatpush1.xpose.msra.mxu0 0.0
    %382 = vmatprep.subr.mxu0 0.0
    %383 = vmatpush1.xpose.msra.mxu0 0.0
    %384 = vmatprep.subr.mxu0 0.0
    %385 = vmatpush1.xpose.msra.mxu0 0.0
    %386 = vmatprep.subr.mxu0 0.0
    %387 = vmatpush1.xpose.msra.mxu0 0.0
    %388 = vmatprep.subr.mxu0 0.0
    %389 = vmatpush1.xpose.msra.mxu0 0.0
    %390 = vmatprep.subr.mxu0 0.0
    %391 = vmatpush1.xpose.msra.mxu0 0.0
    %392 = vmatprep.subr.mxu0 0.0
    %393 = vmatpush1.xpose.msra.mxu0 0.0
    %394 = vmatprep.subr.mxu0 0.0
    %395 = vmatpush1.xpose.msra.mxu0 0.0
    %396 = vmatprep.subr.mxu0 0.0
    %397 = vmatpush1.xpose.msra.mxu0 0.0
    %398 = vmatprep.subr.mxu0 0.0
    %399 = vmatpush1.xpose.msra.mxu0 0.0
    %400 = vmatprep.subr.mxu0 0.0
    %401 = vmatpush1.xpose.msra.mxu0 0.0
    %402 = vmatprep.mubr.f32.mxu0 0.0
    %403 = vmatmul.mubr.f32.gmra.mrb[0].mxu0 %v334
    %v404 = vpop.f32.mrb[0].mxu0
    %v405 = vadd.f32 0.0, %v404
    %v406 = vpop.f32.mrb[0].mxu0
    %407 = vdwg.mxu0
    %409 = vrot.lane.b32.xlu0 %v166, 96
    %v410 = vpop.permute.xlu0 %409
    %v412 = vsel %vm176, %v172, 0
    %v414 = vsel %vm176, %v410, 0
    %416 = vmatprep.subr.mxu0 0.0
    %417 = vmatpush1.xpose.msra.mxu0 %v414
    %418 = vmatprep.subr.mxu0 0.0
    %419 = vmatpush1.xpose.msra.mxu0 0.0
    %420 = vmatprep.subr.mxu0 0.0
    %421 = vmatpush1.xpose.msra.mxu0 0.0
    %422 = vmatprep.subr.mxu0 0.0
    %423 = vmatpush1.xpose.msra.mxu0 0.0
    %424 = vmatprep.subr.mxu0 0.0
    %425 = vmatpush1.xpose.msra.mxu0 0.0
    %426 = vmatprep.subr.mxu0 0.0
    %427 = vmatpush1.xpose.msra.mxu0 0.0
    %428 = vmatprep.subr.mxu0 0.0
    %429 = vmatpush1.xpose.msra.mxu0 0.0
    %430 = vmatprep.subr.mxu0 0.0
    %431 = vmatpush1.xpose.msra.mxu0 0.0
    %432 = vmatprep.subr.mxu0 0.0
    %433 = vmatpush1.xpose.msra.mxu0 0.0
    %434 = vmatprep.subr.mxu0 0.0
    %435 = vmatpush1.xpose.msra.mxu0 0.0
    %436 = vmatprep.subr.mxu0 0.0
    %437 = vmatpush1.xpose.msra.mxu0 0.0
    %438 = vmatprep.subr.mxu0 0.0
    %439 = vmatpush1.xpose.msra.mxu0 0.0
    %440 = vmatprep.subr.mxu0 0.0
    %441 = vmatpush1.xpose.msra.mxu0 0.0
    %442 = vmatprep.subr.mxu0 0.0
    %443 = vmatpush1.xpose.msra.mxu0 0.0
    %444 = vmatprep.subr.mxu0 0.0
    %445 = vmatpush1.xpose.msra.mxu0 0.0
    %446 = vmatprep.subr.mxu0 0.0
    %447 = vmatpush1.xpose.msra.mxu0 0.0
    %448 = vmatprep.subr.mxu0 0.0
    %449 = vmatpush1.xpose.msra.mxu0 0.0
    %450 = vmatprep.subr.mxu0 0.0
    %451 = vmatpush1.xpose.msra.mxu0 0.0
    %452 = vmatprep.subr.mxu0 0.0
    %453 = vmatpush1.xpose.msra.mxu0 0.0
    %454 = vmatprep.subr.mxu0 0.0
    %455 = vmatpush1.xpose.msra.mxu0 0.0
    %456 = vmatprep.subr.mxu0 0.0
    %457 = vmatpush1.xpose.msra.mxu0 0.0
    %458 = vmatprep.subr.mxu0 0.0
    %459 = vmatpush1.xpose.msra.mxu0 0.0
    %460 = vmatprep.subr.mxu0 0.0
    %461 = vmatpush1.xpose.msra.mxu0 0.0
    %462 = vmatprep.subr.mxu0 0.0
    %463 = vmatpush1.xpose.msra.mxu0 0.0
    %464 = vmatprep.subr.mxu0 0.0
    %465 = vmatpush1.xpose.msra.mxu0 0.0
    %466 = vmatprep.subr.mxu0 0.0
    %467 = vmatpush1.xpose.msra.mxu0 0.0
    %468 = vmatprep.subr.mxu0 0.0
    %469 = vmatpush1.xpose.msra.mxu0 0.0
    %470 = vmatprep.subr.mxu0 0.0
    %471 = vmatpush1.xpose.msra.mxu0 0.0
    %472 = vmatprep.subr.mxu0 0.0
    %473 = vmatpush1.xpose.msra.mxu0 0.0
    %474 = vmatprep.subr.mxu0 0.0
    %475 = vmatpush1.xpose.msra.mxu0 0.0
    %476 = vmatprep.subr.mxu0 0.0
    %477 = vmatpush1.xpose.msra.mxu0 0.0
    %478 = vmatprep.subr.mxu0 0.0
    %479 = vmatpush1.xpose.msra.mxu0 0.0
    %480 = vmatprep.mubr.f32.mxu0 0.0
    %481 = vmatmul.mubr.f32.gmra.mrb[0].mxu0 %v412
    %v482 = vpop.f32.mrb[0].mxu0
    %v483 = vadd.f32 0.0, %v482
    %v484 = vpop.f32.mrb[0].mxu0
    %485 = vdwg.mxu0
    %vm486 = vcmask 64512
    %v487 = vsel %vm486, %v249, -inf
    %488 = vmax.xlane.f32.xlu0 %v487
    %v489 = vpop.xlane.xlu0 %488
    %v490 = vsel %vm486, %v327, -inf
    %491 = vmax.xlane.f32.xlu0 %v490
    %v492 = vpop.xlane.xlu0 %491
    %v493 = vsel %vm486, %v405, -inf
    %494 = vmax.xlane.f32.xlu0 %v493
    %v495 = vpop.xlane.xlu0 %494
    %v496 = vsel %vm486, %v483, -inf
    %497 = vmax.xlane.f32.xlu0 %v496
    %v498 = vpop.xlane.xlu0 %497
    %v499 = vsub.f32 %v249, %v489
    %v500 = vsub.f32 %v327, %v492
    %v501 = vsub.f32 %v405, %v495
    %v502 = vsub.f32 %v483, %v498
    %v503 = vmul.f32 %v499, 1.442695
    %v504 = vpow.pop %v503
    %v505 = vmul.f32 %v500, 1.442695
    %v506 = vpow.pop %v505
    %v507 = vmul.f32 %v501, 1.442695
    %v508 = vpow.pop %v507
    %v509 = vmul.f32 %v502, 1.442695
    %v510 = vpow.pop %v509
    %v511 = vsel %vm486, %v504, 0.0
    %512 = vadd.xlane.f32.xlu0 %v511
    %v513 = vpop.xlane.xlu0 %512
    %v514 = vsel %vm486, %v506, 0.0
    %515 = vadd.xlane.f32.xlu0 %v514
    %v516 = vpop.xlane.xlu0 %515
    %v517 = vsel %vm486, %v508, 0.0
    %518 = vadd.xlane.f32.xlu0 %v517
    %v519 = vpop.xlane.xlu0 %518
    %v520 = vsel %vm486, %v510, 0.0
    %521 = vadd.xlane.f32.xlu0 %v520
    %v522 = vpop.xlane.xlu0 %521
    %523 = vrot.lane.b32.xlu0 %v151, 64
    %v524 = vpop.permute.xlu0 %523
    %v527 = vsel %vm486, %v504, 0
    %529 = vmatprep.subr.mxu0 0.0
    %530 = vmatpush1.msra.mxu0 %v524
    %531 = vmatprep.subr.mxu0 0.0
    %532 = vmatpush1.msra.mxu0 0.0
    %533 = vmatprep.subr.mxu0 0.0
    %534 = vmatpush1.msra.mxu0 0.0
    %535 = vmatprep.subr.mxu0 0.0
    %536 = vmatpush1.msra.mxu0 0.0
    %537 = vmatprep.subr.mxu0 0.0
    %538 = vmatpush1.msra.mxu0 0.0
    %539 = vmatprep.subr.mxu0 0.0
    %540 = vmatpush1.msra.mxu0 0.0
    %541 = vmatprep.subr.mxu0 0.0
    %542 = vmatpush1.msra.mxu0 0.0
    %543 = vmatprep.subr.mxu0 0.0
    %544 = vmatpush1.msra.mxu0 0.0
    %545 = vmatprep.subr.mxu0 0.0
    %546 = vmatpush1.msra.mxu0 0.0
    %547 = vmatprep.subr.mxu0 0.0
    %548 = vmatpush1.msra.mxu0 0.0
    %549 = vmatprep.subr.mxu0 0.0
    %550 = vmatpush1.msra.mxu0 0.0
    %551 = vmatprep.subr.mxu0 0.0
    %552 = vmatpush1.msra.mxu0 0.0
    %553 = vmatprep.subr.mxu0 0.0
    %554 = vmatpush1.msra.mxu0 0.0
    %555 = vmatprep.subr.mxu0 0.0
    %556 = vmatpush1.msra.mxu0 0.0
    %557 = vmatprep.subr.mxu0 0.0
    %558 = vmatpush1.msra.mxu0 0.0
    %559 = vmatprep.subr.mxu0 0.0
    %560 = vmatpush1.msra.mxu0 0.0
    %561 = vmatprep.subr.mxu0 0.0
    %562 = vmatpush1.msra.mxu0 0.0
    %563 = vmatprep.subr.mxu0 0.0
    %564 = vmatpush1.msra.mxu0 0.0
    %565 = vmatprep.subr.mxu0 0.0
    %566 = vmatpush1.msra.mxu0 0.0
    %567 = vmatprep.subr.mxu0 0.0
    %568 = vmatpush1.msra.mxu0 0.0
    %569 = vmatprep.subr.mxu0 0.0
    %570 = vmatpush1.msra.mxu0 0.0
    %571 = vmatprep.subr.mxu0 0.0
    %572 = vmatpush1.msra.mxu0 0.0
    %573 = vmatprep.subr.mxu0 0.0
    %574 = vmatpush1.msra.mxu0 0.0
    %575 = vmatprep.subr.mxu0 0.0
    %576 = vmatpush1.msra.mxu0 0.0
    %577 = vmatprep.subr.mxu0 0.0
    %578 = vmatpush1.msra.mxu0 0.0
    %579 = vmatprep.subr.mxu0 0.0
    %580 = vmatpush1.msra.mxu0 0.0
    %581 = vmatprep.subr.mxu0 0.0
    %582 = vmatpush1.msra.mxu0 0.0
    %583 = vmatprep.subr.mxu0 0.0
    %584 = vmatpush1.msra.mxu0 0.0
    %585 = vmatprep.subr.mxu0 0.0
    %586 = vmatpush1.msra.mxu0 0.0
    %587 = vmatprep.subr.mxu0 0.0
    %588 = vmatpush1.msra.mxu0 0.0
    %589 = vmatprep.subr.mxu0 0.0
    %590 = vmatpush1.msra.mxu0 0.0
    %591 = vmatprep.subr.mxu0 0.0
    %592 = vmatpush1.msra.mxu0 0.0
    %593 = vmatprep.mubr.f32.mxu0 0.0
    %594 = vmatmul.mubr.f32.gmra.mrb[0].mxu0 %v527
    %v595 = vpop.f32.mrb[0].mxu0
    %v596 = vadd.f32 0.0, %v595
    %v597 = vpop.f32.mrb[0].mxu0
    %598 = vdwg.mxu0
    %599 = vrot.lane.b32.xlu0 %v156, 64
    %v600 = vpop.permute.xlu0 %599
    %v603 = vsel %vm486, %v506, 0
    %605 = vmatprep.subr.mxu0 0.0
    %606 = vmatpush1.msra.mxu0 %v600
    %607 = vmatprep.subr.mxu0 0.0
    %608 = vmatpush1.msra.mxu0 0.0
    %609 = vmatprep.subr.mxu0 0.0
    %610 = vmatpush1.msra.mxu0 0.0
    %611 = vmatprep.subr.mxu0 0.0
    %612 = vmatpush1.msra.mxu0 0.0
    %613 = vmatprep.subr.mxu0 0.0
    %614 = vmatpush1.msra.mxu0 0.0
    %615 = vmatprep.subr.mxu0 0.0
    %616 = vmatpush1.msra.mxu0 0.0
    %617 = vmatprep.subr.mxu0 0.0
    %618 = vmatpush1.msra.mxu0 0.0
    %619 = vmatprep.subr.mxu0 0.0
    %620 = vmatpush1.msra.mxu0 0.0
    %621 = vmatprep.subr.mxu0 0.0
    %622 = vmatpush1.msra.mxu0 0.0
    %623 = vmatprep.subr.mxu0 0.0
    %624 = vmatpush1.msra.mxu0 0.0
    %625 = vmatprep.subr.mxu0 0.0
    %626 = vmatpush1.msra.mxu0 0.0
    %627 = vmatprep.subr.mxu0 0.0
    %628 = vmatpush1.msra.mxu0 0.0
    %629 = vmatprep.subr.mxu0 0.0
    %630 = vmatpush1.msra.mxu0 0.0
    %631 = vmatprep.subr.mxu0 0.0
    %632 = vmatpush1.msra.mxu0 0.0
    %633 = vmatprep.subr.mxu0 0.0
    %634 = vmatpush1.msra.mxu0 0.0
    %635 = vmatprep.subr.mxu0 0.0
    %636 = vmatpush1.msra.mxu0 0.0
    %637 = vmatprep.subr.mxu0 0.0
    %638 = vmatpush1.msra.mxu0 0.0
    %639 = vmatprep.subr.mxu0 0.0
    %640 = vmatpush1.msra.mxu0 0.0
    %641 = vmatprep.subr.mxu0 0.0
    %642 = vmatpush1.msra.mxu0 0.0
    %643 = vmatprep.subr.mxu0 0.0
    %644 = vmatpush1.msra.mxu0 0.0
    %645 = vmatprep.subr.mxu0 0.0
    %646 = vmatpush1.msra.mxu0 0.0
    %647 = vmatprep.subr.mxu0 0.0
    %648 = vmatpush1.msra.mxu0 0.0
    %649 = vmatprep.subr.mxu0 0.0
    %650 = vmatpush1.msra.mxu0 0.0
    %651 = vmatprep.subr.mxu0 0.0
    %652 = vmatpush1.msra.mxu0 0.0
    %653 = vmatprep.subr.mxu0 0.0
    %654 = vmatpush1.msra.mxu0 0.0
    %655 = vmatprep.subr.mxu0 0.0
    %656 = vmatpush1.msra.mxu0 0.0
    %657 = vmatprep.subr.mxu0 0.0
    %658 = vmatpush1.msra.mxu0 0.0
    %659 = vmatprep.subr.mxu0 0.0
    %660 = vmatpush1.msra.mxu0 0.0
    %661 = vmatprep.subr.mxu0 0.0
    %662 = vmatpush1.msra.mxu0 0.0
    %663 = vmatprep.subr.mxu0 0.0
    %664 = vmatpush1.msra.mxu0 0.0
    %665 = vmatprep.subr.mxu0 0.0
    %666 = vmatpush1.msra.mxu0 0.0
    %667 = vmatprep.subr.mxu0 0.0
    %668 = vmatpush1.msra.mxu0 0.0
    %669 = vmatprep.mubr.f32.mxu0 0.0
    %670 = vmatmul.mubr.f32.gmra.mrb[0].mxu0 %v603
    %v671 = vpop.f32.mrb[0].mxu0
    %v672 = vadd.f32 0.0, %v671
    %v673 = vpop.f32.mrb[0].mxu0
    %674 = vdwg.mxu0
    %675 = vrot.lane.b32.xlu0 %v161, 64
    %v676 = vpop.permute.xlu0 %675
    %v679 = vsel %vm486, %v508, 0
    %681 = vmatprep.subr.mxu0 0.0
    %682 = vmatpush1.msra.mxu0 %v676
    %683 = vmatprep.subr.mxu0 0.0
    %684 = vmatpush1.msra.mxu0 0.0
    %685 = vmatprep.subr.mxu0 0.0
    %686 = vmatpush1.msra.mxu0 0.0
    %687 = vmatprep.subr.mxu0 0.0
    %688 = vmatpush1.msra.mxu0 0.0
    %689 = vmatprep.subr.mxu0 0.0
    %690 = vmatpush1.msra.mxu0 0.0
    %691 = vmatprep.subr.mxu0 0.0
    %692 = vmatpush1.msra.mxu0 0.0
    %693 = vmatprep.subr.mxu0 0.0
    %694 = vmatpush1.msra.mxu0 0.0
    %695 = vmatprep.subr.mxu0 0.0
    %696 = vmatpush1.msra.mxu0 0.0
    %697 = vmatprep.subr.mxu0 0.0
    %698 = vmatpush1.msra.mxu0 0.0
    %699 = vmatprep.subr.mxu0 0.0
    %700 = vmatpush1.msra.mxu0 0.0
    %701 = vmatprep.subr.mxu0 0.0
    %702 = vmatpush1.msra.mxu0 0.0
    %703 = vmatprep.subr.mxu0 0.0
    %704 = vmatpush1.msra.mxu0 0.0
    %705 = vmatprep.subr.mxu0 0.0
    %706 = vmatpush1.msra.mxu0 0.0
    %707 = vmatprep.subr.mxu0 0.0
    %708 = vmatpush1.msra.mxu0 0.0
    %709 = vmatprep.subr.mxu0 0.0
    %710 = vmatpush1.msra.mxu0 0.0
    %711 = vmatprep.subr.mxu0 0.0
    %712 = vmatpush1.msra.mxu0 0.0
    %713 = vmatprep.subr.mxu0 0.0
    %714 = vmatpush1.msra.mxu0 0.0
    %715 = vmatprep.subr.mxu0 0.0
    %716 = vmatpush1.msra.mxu0 0.0
    %717 = vmatprep.subr.mxu0 0.0
    %718 = vmatpush1.msra.mxu0 0.0
    %719 = vmatprep.subr.mxu0 0.0
    %720 = vmatpush1.msra.mxu0 0.0
    %721 = vmatprep.subr.mxu0 0.0
    %722 = vmatpush1.msra.mxu0 0.0
    %723 = vmatprep.subr.mxu0 0.0
    %724 = vmatpush1.msra.mxu0 0.0
    %725 = vmatprep.subr.mxu0 0.0
    %726 = vmatpush1.msra.mxu0 0.0
    %727 = vmatprep.subr.mxu0 0.0
    %728 = vmatpush1.msra.mxu0 0.0
    %729 = vmatprep.subr.mxu0 0.0
    %730 = vmatpush1.msra.mxu0 0.0
    %731 = vmatprep.subr.mxu0 0.0
    %732 = vmatpush1.msra.mxu0 0.0
    %733 = vmatprep.subr.mxu0 0.0
    %734 = vmatpush1.msra.mxu0 0.0
    %735 = vmatprep.subr.mxu0 0.0
    %736 = vmatpush1.msra.mxu0 0.0
    %737 = vmatprep.subr.mxu0 0.0
    %738 = vmatpush1.msra.mxu0 0.0
    %739 = vmatprep.subr.mxu0 0.0
    %740 = vmatpush1.msra.mxu0 0.0
    %741 = vmatprep.subr.mxu0 0.0
    %742 = vmatpush1.msra.mxu0 0.0
    %743 = vmatprep.subr.mxu0 0.0
    %744 = vmatpush1.msra.mxu0 0.0
    %745 = vmatprep.mubr.f32.mxu0 0.0
    %746 = vmatmul.mubr.f32.gmra.mrb[0].mxu0 %v679
    %v747 = vpop.f32.mrb[0].mxu0
    %v748 = vadd.f32 0.0, %v747
    %v749 = vpop.f32.mrb[0].mxu0
    %750 = vdwg.mxu0
    %751 = vrot.lane.b32.xlu0 %v166, 64
    %v752 = vpop.permute.xlu0 %751
    %v755 = vsel %vm486, %v510, 0
    %757 = vmatprep.subr.mxu0 0.0
    %758 = vmatpush1.msra.mxu0 %v752
    %759 = vmatprep.subr.mxu0 0.0
    %760 = vmatpush1.msra.mxu0 0.0
    %761 = vmatprep.subr.mxu0 0.0
    %762 = vmatpush1.msra.mxu0 0.0
    %763 = vmatprep.subr.mxu0 0.0
    %764 = vmatpush1.msra.mxu0 0.0
    %765 = vmatprep.subr.mxu0 0.0
    %766 = vmatpush1.msra.mxu0 0.0
    %767 = vmatprep.subr.mxu0 0.0
    %768 = vmatpush1.msra.mxu0 0.0
    %769 = vmatprep.subr.mxu0 0.0
    %770 = vmatpush1.msra.mxu0 0.0
    %771 = vmatprep.subr.mxu0 0.0
    %772 = vmatpush1.msra.mxu0 0.0
    %773 = vmatprep.subr.mxu0 0.0
    %774 = vmatpush1.msra.mxu0 0.0
    %775 = vmatprep.subr.mxu0 0.0
    %776 = vmatpush1.msra.mxu0 0.0
    %777 = vmatprep.subr.mxu0 0.0
    %778 = vmatpush1.msra.mxu0 0.0
    %779 = vmatprep.subr.mxu0 0.0
    %780 = vmatpush1.msra.mxu0 0.0
    %781 = vmatprep.subr.mxu0 0.0
    %782 = vmatpush1.msra.mxu0 0.0
    %783 = vmatprep.subr.mxu0 0.0
    %784 = vmatpush1.msra.mxu0 0.0
    %785 = vmatprep.subr.mxu0 0.0
    %786 = vmatpush1.msra.mxu0 0.0
    %787 = vmatprep.subr.mxu0 0.0
    %788 = vmatpush1.msra.mxu0 0.0
    %789 = vmatprep.subr.mxu0 0.0
    %790 = vmatpush1.msra.mxu0 0.0
    %791 = vmatprep.subr.mxu0 0.0
    %792 = vmatpush1.msra.mxu0 0.0
    %793 = vmatprep.subr.mxu0 0.0
    %794 = vmatpush1.msra.mxu0 0.0
    %795 = vmatprep.subr.mxu0 0.0
    %796 = vmatpush1.msra.mxu0 0.0
    %797 = vmatprep.subr.mxu0 0.0
    %798 = vmatpush1.msra.mxu0 0.0
    %799 = vmatprep.subr.mxu0 0.0
    %800 = vmatpush1.msra.mxu0 0.0
    %801 = vmatprep.subr.mxu0 0.0
    %802 = vmatpush1.msra.mxu0 0.0
    %803 = vmatprep.subr.mxu0 0.0
    %804 = vmatpush1.msra.mxu0 0.0
    %805 = vmatprep.subr.mxu0 0.0
    %806 = vmatpush1.msra.mxu0 0.0
    %807 = vmatprep.subr.mxu0 0.0
    %808 = vmatpush1.msra.mxu0 0.0
    %809 = vmatprep.subr.mxu0 0.0
    %810 = vmatpush1.msra.mxu0 0.0
    %811 = vmatprep.subr.mxu0 0.0
    %812 = vmatpush1.msra.mxu0 0.0
    %813 = vmatprep.subr.mxu0 0.0
    %814 = vmatpush1.msra.mxu0 0.0
    %815 = vmatprep.subr.mxu0 0.0
    %816 = vmatpush1.msra.mxu0 0.0
    %817 = vmatprep.subr.mxu0 0.0
    %818 = vmatpush1.msra.mxu0 0.0
    %819 = vmatprep.subr.mxu0 0.0
    %820 = vmatpush1.msra.mxu0 0.0
    %821 = vmatprep.mubr.f32.mxu0 0.0
    %822 = vmatmul.mubr.f32.gmra.mrb[0].mxu0 %v755
    %v823 = vpop.f32.mrb[0].mxu0
    %v824 = vadd.f32 0.0, %v823
    %v825 = vpop.f32.mrb[0].mxu0
    %826 = vdwg.mxu0
    %v827 = vrcp.pop %v513
    %v828 = vrcp.pop %v516
    %v829 = vrcp.pop %v519
    %v830 = vrcp.pop %v522
    %v831 = vmul.f32 %v596, %v827
    %v832 = vmul.f32 %v672, %v828
    %v833 = vmul.f32 %v748, %v829
    %v834 = vmul.f32 %v824, %v830
    %835 = vst.msk [vmem:[#allocation2] sm:$0xff] %vm176, %v831
    %836 = vst.msk [vmem:[#allocation2 + $0x8] sm:$0xff] %vm176, %v832
    %837 = vst.msk [vmem:[#allocation2 + $0x10] sm:$0xff] %vm176, %v833
    %838 = vst.msk [vmem:[#allocation2 + $0x18] sm:$0xff] %vm176, %v834
    %839 = vrot.lane.b32.xlu0 %v169, 112
    %v840 = vpop.permute.xlu0 %839
    %841 = vrot.lane.b32.xlu0 %v151, 80
    %v842 = vpop.permute.xlu0 %841
    %v843 = vsel %vm176, %v840, 0
    %v845 = vsel %vm176, %v842, 0
    %847 = vmatprep.subr.mxu0 0.0
    %848 = vmatpush1.xpose.msra.mxu0 %v845
    %849 = vmatprep.subr.mxu0 0.0
    %850 = vmatpush1.xpose.msra.mxu0 0.0
    %851 = vmatprep.subr.mxu0 0.0
    %852 = vmatpush1.xpose.msra.mxu0 0.0
    %853 = vmatprep.subr.mxu0 0.0
    %854 = vmatpush1.xpose.msra.mxu0 0.0
    %855 = vmatprep.subr.mxu0 0.0
    %856 = vmatpush1.xpose.msra.mxu0 0.0
    %857 = vmatprep.subr.mxu0 0.0
    %858 = vmatpush1.xpose.msra.mxu0 0.0
    %859 = vmatprep.subr.mxu0 0.0
    %860 = vmatpush1.xpose.msra.mxu0 0.0
    %861 = vmatprep.subr.mxu0 0.0
    %862 = vmatpush1.xpose.msra.mxu0 0.0
    %863 = vmatprep.subr.mxu0 0.0
    %864 = vmatpush1.xpose.msra.mxu0 0.0
    %865 = vmatprep.subr.mxu0 0.0
    %866 = vmatpush1.xpose.msra.mxu0 0.0
    %867 = vmatprep.subr.mxu0 0.0
    %868 = vmatpush1.xpose.msra.mxu0 0.0
    %869 = vmatprep.subr.mxu0 0.0
    %870 = vmatpush1.xpose.msra.mxu0 0.0
    %871 = vmatprep.subr.mxu0 0.0
    %872 = vmatpush1.xpose.msra.mxu0 0.0
    %873 = vmatprep.subr.mxu0 0.0
    %874 = vmatpush1.xpose.msra.mxu0 0.0
    %875 = vmatprep.subr.mxu0 0.0
    %876 = vmatpush1.xpose.msra.mxu0 0.0
    %877 = vmatprep.subr.mxu0 0.0
    %878 = vmatpush1.xpose.msra.mxu0 0.0
    %879 = vmatprep.subr.mxu0 0.0
    %880 = vmatpush1.xpose.msra.mxu0 0.0
    %881 = vmatprep.subr.mxu0 0.0
    %882 = vmatpush1.xpose.msra.mxu0 0.0
    %883 = vmatprep.subr.mxu0 0.0
    %884 = vmatpush1.xpose.msra.mxu0 0.0
    %885 = vmatprep.subr.mxu0 0.0
    %886 = vmatpush1.xpose.msra.mxu0 0.0
    %887 = vmatprep.subr.mxu0 0.0
    %888 = vmatpush1.xpose.msra.mxu0 0.0
    %889 = vmatprep.subr.mxu0 0.0
    %890 = vmatpush1.xpose.msra.mxu0 0.0
    %891 = vmatprep.subr.mxu0 0.0
    %892 = vmatpush1.xpose.msra.mxu0 0.0
    %893 = vmatprep.subr.mxu0 0.0
    %894 = vmatpush1.xpose.msra.mxu0 0.0
    %895 = vmatprep.subr.mxu0 0.0
    %896 = vmatpush1.xpose.msra.mxu0 0.0
    %897 = vmatprep.subr.mxu0 0.0
    %898 = vmatpush1.xpose.msra.mxu0 0.0
    %899 = vmatprep.subr.mxu0 0.0
    %900 = vmatpush1.xpose.msra.mxu0 0.0
    %901 = vmatprep.subr.mxu0 0.0
    %902 = vmatpush1.xpose.msra.mxu0 0.0
    %903 = vmatprep.subr.mxu0 0.0
    %904 = vmatpush1.xpose.msra.mxu0 0.0
    %905 = vmatprep.subr.mxu0 0.0
    %906 = vmatpush1.xpose.msra.mxu0 0.0
    %907 = vmatprep.subr.mxu0 0.0
    %908 = vmatpush1.xpose.msra.mxu0 0.0
    %909 = vmatprep.subr.mxu0 0.0
    %910 = vmatpush1.xpose.msra.mxu0 0.0
    %911 = vmatprep.mubr.f32.mxu0 0.0
    %912 = vmatmul.mubr.f32.gmra.mrb[0].mxu0 %v843
    %v913 = vpop.f32.mrb[0].mxu0
    %v914 = vadd.f32 0.0, %v913
    %v915 = vpop.f32.mrb[0].mxu0
    %916 = vdwg.mxu0
    %917 = vrot.lane.b32.xlu0 %v170, 112
    %v918 = vpop.permute.xlu0 %917
    %919 = vrot.lane.b32.xlu0 %v156, 80
    %v920 = vpop.permute.xlu0 %919
    %v921 = vsel %vm176, %v918, 0
    %v923 = vsel %vm176, %v920, 0
    %925 = vmatprep.subr.mxu0 0.0
    %926 = vmatpush1.xpose.msra.mxu0 %v923
    %927 = vmatprep.subr.mxu0 0.0
    %928 = vmatpush1.xpose.msra.mxu0 0.0
    %929 = vmatprep.subr.mxu0 0.0
    %930 = vmatpush1.xpose.msra.mxu0 0.0
    %931 = vmatprep.subr.mxu0 0.0
    %932 = vmatpush1.xpose.msra.mxu0 0.0
    %933 = vmatprep.subr.mxu0 0.0
    %934 = vmatpush1.xpose.msra.mxu0 0.0
    %935 = vmatprep.subr.mxu0 0.0
    %936 = vmatpush1.xpose.msra.mxu0 0.0
    %937 = vmatprep.subr.mxu0 0.0
    %938 = vmatpush1.xpose.msra.mxu0 0.0
    %939 = vmatprep.subr.mxu0 0.0
    %940 = vmatpush1.xpose.msra.mxu0 0.0
    %941 = vmatprep.subr.mxu0 0.0
    %942 = vmatpush1.xpose.msra.mxu0 0.0
    %943 = vmatprep.subr.mxu0 0.0
    %944 = vmatpush1.xpose.msra.mxu0 0.0
    %945 = vmatprep.subr.mxu0 0.0
    %946 = vmatpush1.xpose.msra.mxu0 0.0
    %947 = vmatprep.subr.mxu0 0.0
    %948 = vmatpush1.xpose.msra.mxu0 0.0
    %949 = vmatprep.subr.mxu0 0.0
    %950 = vmatpush1.xpose.msra.mxu0 0.0
    %951 = vmatprep.subr.mxu0 0.0
    %952 = vmatpush1.xpose.msra.mxu0 0.0
    %953 = vmatprep.subr.mxu0 0.0
    %954 = vmatpush1.xpose.msra.mxu0 0.0
    %955 = vmatprep.subr.mxu0 0.0
    %956 = vmatpush1.xpose.msra.mxu0 0.0
    %957 = vmatprep.subr.mxu0 0.0
    %958 = vmatpush1.xpose.msra.mxu0 0.0
    %959 = vmatprep.subr.mxu0 0.0
    %960 = vmatpush1.xpose.msra.mxu0 0.0
    %961 = vmatprep.subr.mxu0 0.0
    %962 = vmatpush1.xpose.msra.mxu0 0.0
    %963 = vmatprep.subr.mxu0 0.0
    %964 = vmatpush1.xpose.msra.mxu0 0.0
    %965 = vmatprep.subr.mxu0 0.0
    %966 = vmatpush1.xpose.msra.mxu0 0.0
    %967 = vmatprep.subr.mxu0 0.0
    %968 = vmatpush1.xpose.msra.mxu0 0.0
    %969 = vmatprep.subr.mxu0 0.0
    %970 = vmatpush1.xpose.msra.mxu0 0.0
    %971 = vmatprep.subr.mxu0 0.0
    %972 = vmatpush1.xpose.msra.mxu0 0.0
    %973 = vmatprep.subr.mxu0 0.0
    %974 = vmatpush1.xpose.msra.mxu0 0.0
    %975 = vmatprep.subr.mxu0 0.0
    %976 = vmatpush1.xpose.msra.mxu0 0.0
    %977 = vmatprep.subr.mxu0 0.0
    %978 = vmatpush1.xpose.msra.mxu0 0.0
    %979 = vmatprep.subr.mxu0 0.0
    %980 = vmatpush1.xpose.msra.mxu0 0.0
    %981 = vmatprep.subr.mxu0 0.0
    %982 = vmatpush1.xpose.msra.mxu0 0.0
    %983 = vmatprep.subr.mxu0 0.0
    %984 = vmatpush1.xpose.msra.mxu0 0.0
    %985 = vmatprep.subr.mxu0 0.0
    %986 = vmatpush1.xpose.msra.mxu0 0.0
    %987 = vmatprep.subr.mxu0 0.0
    %988 = vmatpush1.xpose.msra.mxu0 0.0
    %989 = vmatprep.mubr.f32.mxu0 0.0
    %990 = vmatmul.mubr.f32.gmra.mrb[0].mxu0 %v921
    %v991 = vpop.f32.mrb[0].mxu0
    %v992 = vadd.f32 0.0, %v991
    %v993 = vpop.f32.mrb[0].mxu0
    %994 = vdwg.mxu0
    %995 = vrot.lane.b32.xlu0 %v171, 112
    %v996 = vpop.permute.xlu0 %995
    %997 = vrot.lane.b32.xlu0 %v161, 80
    %v998 = vpop.permute.xlu0 %997
    %v999 = vsel %vm176, %v996, 0
    %v1001 = vsel %vm176, %v998, 0
    %1003 = vmatprep.subr.mxu0 0.0
    %1004 = vmatpush1.xpose.msra.mxu0 %v1001
    %1005 = vmatprep.subr.mxu0 0.0
    %1006 = vmatpush1.xpose.msra.mxu0 0.0
    %1007 = vmatprep.subr.mxu0 0.0
    %1008 = vmatpush1.xpose.msra.mxu0 0.0
    %1009 = vmatprep.subr.mxu0 0.0
    %1010 = vmatpush1.xpose.msra.mxu0 0.0
    %1011 = vmatprep.subr.mxu0 0.0
    %1012 = vmatpush1.xpose.msra.mxu0 0.0
    %1013 = vmatprep.subr.mxu0 0.0
    %1014 = vmatpush1.xpose.msra.mxu0 0.0
    %1015 = vmatprep.subr.mxu0 0.0
    %1016 = vmatpush1.xpose.msra.mxu0 0.0
    %1017 = vmatprep.subr.mxu0 0.0
    %1018 = vmatpush1.xpose.msra.mxu0 0.0
    %1019 = vmatprep.subr.mxu0 0.0
    %1020 = vmatpush1.xpose.msra.mxu0 0.0
    %1021 = vmatprep.subr.mxu0 0.0
    %1022 = vmatpush1.xpose.msra.mxu0 0.0
    %1023 = vmatprep.subr.mxu0 0.0
    %1024 = vmatpush1.xpose.msra.mxu0 0.0
    %1025 = vmatprep.subr.mxu0 0.0
    %1026 = vmatpush1.xpose.msra.mxu0 0.0
    %1027 = vmatprep.subr.mxu0 0.0
    %1028 = vmatpush1.xpose.msra.mxu0 0.0
    %1029 = vmatprep.subr.mxu0 0.0
    %1030 = vmatpush1.xpose.msra.mxu0 0.0
    %1031 = vmatprep.subr.mxu0 0.0
    %1032 = vmatpush1.xpose.msra.mxu0 0.0
    %1033 = vmatprep.subr.mxu0 0.0
    %1034 = vmatpush1.xpose.msra.mxu0 0.0
    %1035 = vmatprep.subr.mxu0 0.0
    %1036 = vmatpush1.xpose.msra.mxu0 0.0
    %1037 = vmatprep.subr.mxu0 0.0
    %1038 = vmatpush1.xpose.msra.mxu0 0.0
    %1039 = vmatprep.subr.mxu0 0.0
    %1040 = vmatpush1.xpose.msra.mxu0 0.0
    %1041 = vmatprep.subr.mxu0 0.0
    %1042 = vmatpush1.xpose.msra.mxu0 0.0
    %1043 = vmatprep.subr.mxu0 0.0
    %1044 = vmatpush1.xpose.msra.mxu0 0.0
    %1045 = vmatprep.subr.mxu0 0.0
    %1046 = vmatpush1.xpose.msra.mxu0 0.0
    %1047 = vmatprep.subr.mxu0 0.0
    %1048 = vmatpush1.xpose.msra.mxu0 0.0
    %1049 = vmatprep.subr.mxu0 0.0
    %1050 = vmatpush1.xpose.msra.mxu0 0.0
    %1051 = vmatprep.subr.mxu0 0.0
    %1052 = vmatpush1.xpose.msra.mxu0 0.0
    %1053 = vmatprep.subr.mxu0 0.0
    %1054 = vmatpush1.xpose.msra.mxu0 0.0
    %1055 = vmatprep.subr.mxu0 0.0
    %1056 = vmatpush1.xpose.msra.mxu0 0.0
    %1057 = vmatprep.subr.mxu0 0.0
    %1058 = vmatpush1.xpose.msra.mxu0 0.0
    %1059 = vmatprep.subr.mxu0 0.0
    %1060 = vmatpush1.xpose.msra.mxu0 0.0
    %1061 = vmatprep.subr.mxu0 0.0
    %1062 = vmatpush1.xpose.msra.mxu0 0.0
    %1063 = vmatprep.subr.mxu0 0.0
    %1064 = vmatpush1.xpose.msra.mxu0 0.0
    %1065 = vmatprep.subr.mxu0 0.0
    %1066 = vmatpush1.xpose.msra.mxu0 0.0
    %1067 = vmatprep.mubr.f32.mxu0 0.0
    %1068 = vmatmul.mubr.f32.gmra.mrb[0].mxu0 %v999
    %v1069 = vpop.f32.mrb[0].mxu0
    %v1070 = vadd.f32 0.0, %v1069
    %v1071 = vpop.f32.mrb[0].mxu0
    %1072 = vdwg.mxu0
    %1073 = vrot.lane.b32.xlu0 %v172, 112
    %v1074 = vpop.permute.xlu0 %1073
    %1075 = vrot.lane.b32.xlu0 %v166, 80
    %v1076 = vpop.permute.xlu0 %1075
    %v1077 = vsel %vm176, %v1074, 0
    %v1079 = vsel %vm176, %v1076, 0
    %1081 = vmatprep.subr.mxu0 0.0
    %1082 = vmatpush1.xpose.msra.mxu0 %v1079
    %1083 = vmatprep.subr.mxu0 0.0
    %1084 = vmatpush1.xpose.msra.mxu0 0.0
    %1085 = vmatprep.subr.mxu0 0.0
    %1086 = vmatpush1.xpose.msra.mxu0 0.0
    %1087 = vmatprep.subr.mxu0 0.0
    %1088 = vmatpush1.xpose.msra.mxu0 0.0
    %1089 = vmatprep.subr.mxu0 0.0
    %1090 = vmatpush1.xpose.msra.mxu0 0.0
    %1091 = vmatprep.subr.mxu0 0.0
    %1092 = vmatpush1.xpose.msra.mxu0 0.0
    %1093 = vmatprep.subr.mxu0 0.0
    %1094 = vmatpush1.xpose.msra.mxu0 0.0
    %1095 = vmatprep.subr.mxu0 0.0
    %1096 = vmatpush1.xpose.msra.mxu0 0.0
    %1097 = vmatprep.subr.mxu0 0.0
    %1098 = vmatpush1.xpose.msra.mxu0 0.0
    %1099 = vmatprep.subr.mxu0 0.0
    %1100 = vmatpush1.xpose.msra.mxu0 0.0
    %1101 = vmatprep.subr.mxu0 0.0
    %1102 = vmatpush1.xpose.msra.mxu0 0.0
    %1103 = vmatprep.subr.mxu0 0.0
    %1104 = vmatpush1.xpose.msra.mxu0 0.0
    %1105 = vmatprep.subr.mxu0 0.0
    %1106 = vmatpush1.xpose.msra.mxu0 0.0
    %1107 = vmatprep.subr.mxu0 0.0
    %1108 = vmatpush1.xpose.msra.mxu0 0.0
    %1109 = vmatprep.subr.mxu0 0.0
    %1110 = vmatpush1.xpose.msra.mxu0 0.0
    %1111 = vmatprep.subr.mxu0 0.0
    %1112 = vmatpush1.xpose.msra.mxu0 0.0
    %1113 = vmatprep.subr.mxu0 0.0
    %1114 = vmatpush1.xpose.msra.mxu0 0.0
    %1115 = vmatprep.subr.mxu0 0.0
    %1116 = vmatpush1.xpose.msra.mxu0 0.0
    %1117 = vmatprep.subr.mxu0 0.0
    %1118 = vmatpush1.xpose.msra.mxu0 0.0
    %1119 = vmatprep.subr.mxu0 0.0
    %1120 = vmatpush1.xpose.msra.mxu0 0.0
    %1121 = vmatprep.subr.mxu0 0.0
    %1122 = vmatpush1.xpose.msra.mxu0 0.0
    %1123 = vmatprep.subr.mxu0 0.0
    %1124 = vmatpush1.xpose.msra.mxu0 0.0
    %1125 = vmatprep.subr.mxu0 0.0
    %1126 = vmatpush1.xpose.msra.mxu0 0.0
    %1127 = vmatprep.subr.mxu0 0.0
    %1128 = vmatpush1.xpose.msra.mxu0 0.0
    %1129 = vmatprep.subr.mxu0 0.0
    %1130 = vmatpush1.xpose.msra.mxu0 0.0
    %1131 = vmatprep.subr.mxu0 0.0
    %1132 = vmatpush1.xpose.msra.mxu0 0.0
    %1133 = vmatprep.subr.mxu0 0.0
    %1134 = vmatpush1.xpose.msra.mxu0 0.0
    %1135 = vmatprep.subr.mxu0 0.0
    %1136 = vmatpush1.xpose.msra.mxu0 0.0
    %1137 = vmatprep.subr.mxu0 0.0
    %1138 = vmatpush1.xpose.msra.mxu0 0.0
    %1139 = vmatprep.subr.mxu0 0.0
    %1140 = vmatpush1.xpose.msra.mxu0 0.0
    %1141 = vmatprep.subr.mxu0 0.0
    %1142 = vmatpush1.xpose.msra.mxu0 0.0
    %1143 = vmatprep.subr.mxu0 0.0
    %1144 = vmatpush1.xpose.msra.mxu0 0.0
    %1145 = vmatprep.mubr.f32.mxu0 0.0
    %1146 = vmatmul.mubr.f32.gmra.mrb[0].mxu0 %v1077
    %v1147 = vpop.f32.mrb[0].mxu0
    %v1148 = vadd.f32 0.0, %v1147
    %v1149 = vpop.f32.mrb[0].mxu0
    %1150 = vdwg.mxu0
    %v1151 = vsel %vm486, %v914, -inf
    %1152 = vmax.xlane.f32.xlu0 %v1151
    %v1153 = vpop.xlane.xlu0 %1152
    %v1154 = vsel %vm486, %v992, -inf
    %1155 = vmax.xlane.f32.xlu0 %v1154
    %v1156 = vpop.xlane.xlu0 %1155
    %v1157 = vsel %vm486, %v1070, -inf
    %1158 = vmax.xlane.f32.xlu0 %v1157
    %v1159 = vpop.xlane.xlu0 %1158
    %v1160 = vsel %vm486, %v1148, -inf
    %1161 = vmax.xlane.f32.xlu0 %v1160
    %v1162 = vpop.xlane.xlu0 %1161
    %v1163 = vsub.f32 %v914, %v1153
    %v1164 = vsub.f32 %v992, %v1156
    %v1165 = vsub.f32 %v1070, %v1159
    %v1166 = vsub.f32 %v1148, %v1162
    %v1167 = vmul.f32 %v1163, 1.442695
    %v1168 = vpow.pop %v1167
    %v1169 = vmul.f32 %v1164, 1.442695
    %v1170 = vpow.pop %v1169
    %v1171 = vmul.f32 %v1165, 1.442695
    %v1172 = vpow.pop %v1171
    %v1173 = vmul.f32 %v1166, 1.442695
    %v1174 = vpow.pop %v1173
    %v1175 = vsel %vm486, %v1168, 0.0
    %1176 = vadd.xlane.f32.xlu0 %v1175
    %v1177 = vpop.xlane.xlu0 %1176
    %v1178 = vsel %vm486, %v1170, 0.0
    %1179 = vadd.xlane.f32.xlu0 %v1178
    %v1180 = vpop.xlane.xlu0 %1179
    %v1181 = vsel %vm486, %v1172, 0.0
    %1182 = vadd.xlane.f32.xlu0 %v1181
    %v1183 = vpop.xlane.xlu0 %1182
    %v1184 = vsel %vm486, %v1174, 0.0
    %1185 = vadd.xlane.f32.xlu0 %v1184
    %v1186 = vpop.xlane.xlu0 %1185
    %1187 = vrot.lane.b32.xlu0 %v151, 48
    %v1188 = vpop.permute.xlu0 %1187
    %v1191 = vsel %vm486, %v1168, 0
    %1193 = vmatprep.subr.mxu0 0.0
    %1194 = vmatpush1.msra.mxu0 %v1188
    %1195 = vmatprep.subr.mxu0 0.0
    %1196 = vmatpush1.msra.mxu0 0.0
    %1197 = vmatprep.subr.mxu0 0.0
    %1198 = vmatpush1.msra.mxu0 0.0
    %1199 = vmatprep.subr.mxu0 0.0
    %1200 = vmatpush1.msra.mxu0 0.0
    %1201 = vmatprep.subr.mxu0 0.0
    %1202 = vmatpush1.msra.mxu0 0.0
    %1203 = vmatprep.subr.mxu0 0.0
    %1204 = vmatpush1.msra.mxu0 0.0
    %1205 = vmatprep.subr.mxu0 0.0
    %1206 = vmatpush1.msra.mxu0 0.0
    %1207 = vmatprep.subr.mxu0 0.0
    %1208 = vmatpush1.msra.mxu0 0.0
    %1209 = vmatprep.subr.mxu0 0.0
    %1210 = vmatpush1.msra.mxu0 0.0
    %1211 = vmatprep.subr.mxu0 0.0
    %1212 = vmatpush1.msra.mxu0 0.0
    %1213 = vmatprep.subr.mxu0 0.0
    %1214 = vmatpush1.msra.mxu0 0.0
    %1215 = vmatprep.subr.mxu0 0.0
    %1216 = vmatpush1.msra.mxu0 0.0
    %1217 = vmatprep.subr.mxu0 0.0
    %1218 = vmatpush1.msra.mxu0 0.0
    %1219 = vmatprep.subr.mxu0 0.0
    %1220 = vmatpush1.msra.mxu0 0.0
    %1221 = vmatprep.subr.mxu0 0.0
    %1222 = vmatpush1.msra.mxu0 0.0
    %1223 = vmatprep.subr.mxu0 0.0
    %1224 = vmatpush1.msra.mxu0 0.0
    %1225 = vmatprep.subr.mxu0 0.0
    %1226 = vmatpush1.msra.mxu0 0.0
    %1227 = vmatprep.subr.mxu0 0.0
    %1228 = vmatpush1.msra.mxu0 0.0
    %1229 = vmatprep.subr.mxu0 0.0
    %1230 = vmatpush1.msra.mxu0 0.0
    %1231 = vmatprep.subr.mxu0 0.0
    %1232 = vmatpush1.msra.mxu0 0.0
    %1233 = vmatprep.subr.mxu0 0.0
    %1234 = vmatpush1.msra.mxu0 0.0
    %1235 = vmatprep.subr.mxu0 0.0
    %1236 = vmatpush1.msra.mxu0 0.0
    %1237 = vmatprep.subr.mxu0 0.0
    %1238 = vmatpush1.msra.mxu0 0.0
    %1239 = vmatprep.subr.mxu0 0.0
    %1240 = vmatpush1.msra.mxu0 0.0
    %1241 = vmatprep.subr.mxu0 0.0
    %1242 = vmatpush1.msra.mxu0 0.0
    %1243 = vmatprep.subr.mxu0 0.0
    %1244 = vmatpush1.msra.mxu0 0.0
    %1245 = vmatprep.subr.mxu0 0.0
    %1246 = vmatpush1.msra.mxu0 0.0
    %1247 = vmatprep.subr.mxu0 0.0
    %1248 = vmatpush1.msra.mxu0 0.0
    %1249 = vmatprep.subr.mxu0 0.0
    %1250 = vmatpush1.msra.mxu0 0.0
    %1251 = vmatprep.subr.mxu0 0.0
    %1252 = vmatpush1.msra.mxu0 0.0
    %1253 = vmatprep.subr.mxu0 0.0
    %1254 = vmatpush1.msra.mxu0 0.0
    %1255 = vmatprep.subr.mxu0 0.0
    %1256 = vmatpush1.msra.mxu0 0.0
    %1257 = vmatprep.mubr.f32.mxu0 0.0
    %1258 = vmatmul.mubr.f32.gmra.mrb[0].mxu0 %v1191
    %v1259 = vpop.f32.mrb[0].mxu0
    %v1260 = vadd.f32 0.0, %v1259
    %v1261 = vpop.f32.mrb[0].mxu0
    %1262 = vdwg.mxu0
    %1263 = vrot.lane.b32.xlu0 %v156, 48
    %v1264 = vpop.permute.xlu0 %1263
    %v1267 = vsel %vm486, %v1170, 0
    %1269 = vmatprep.subr.mxu0 0.0
    %1270 = vmatpush1.msra.mxu0 %v1264
    %1271 = vmatprep.subr.mxu0 0.0
    %1272 = vmatpush1.msra.mxu0 0.0
    %1273 = vmatprep.subr.mxu0 0.0
    %1274 = vmatpush1.msra.mxu0 0.0
    %1275 = vmatprep.subr.mxu0 0.0
    %1276 = vmatpush1.msra.mxu0 0.0
    %1277 = vmatprep.subr.mxu0 0.0
    %1278 = vmatpush1.msra.mxu0 0.0
    %1279 = vmatprep.subr.mxu0 0.0
    %1280 = vmatpush1.msra.mxu0 0.0
    %1281 = vmatprep.subr.mxu0 0.0
    %1282 = vmatpush1.msra.mxu0 0.0
    %1283 = vmatprep.subr.mxu0 0.0
    %1284 = vmatpush1.msra.mxu0 0.0
    %1285 = vmatprep.subr.mxu0 0.0
    %1286 = vmatpush1.msra.mxu0 0.0
    %1287 = vmatprep.subr.mxu0 0.0
    %1288 = vmatpush1.msra.mxu0 0.0
    %1289 = vmatprep.subr.mxu0 0.0
    %1290 = vmatpush1.msra.mxu0 0.0
    %1291 = vmatprep.subr.mxu0 0.0
    %1292 = vmatpush1.msra.mxu0 0.0
    %1293 = vmatprep.subr.mxu0 0.0
    %1294 = vmatpush1.msra.mxu0 0.0
    %1295 = vmatprep.subr.mxu0 0.0
    %1296 = vmatpush1.msra.mxu0 0.0
    %1297 = vmatprep.subr.mxu0 0.0
    %1298 = vmatpush1.msra.mxu0 0.0
    %1299 = vmatprep.subr.mxu0 0.0
    %1300 = vmatpush1.msra.mxu0 0.0
    %1301 = vmatprep.subr.mxu0 0.0
    %1302 = vmatpush1.msra.mxu0 0.0
    %1303 = vmatprep.subr.mxu0 0.0
    %1304 = vmatpush1.msra.mxu0 0.0
    %1305 = vmatprep.subr.mxu0 0.0
    %1306 = vmatpush1.msra.mxu0 0.0
    %1307 = vmatprep.subr.mxu0 0.0
    %1308 = vmatpush1.msra.mxu0 0.0
    %1309 = vmatprep.subr.mxu0 0.0
    %1310 = vmatpush1.msra.mxu0 0.0
    %1311 = vmatprep.subr.mxu0 0.0
    %1312 = vmatpush1.msra.mxu0 0.0
    %1313 = vmatprep.subr.mxu0 0.0
    %1314 = vmatpush1.msra.mxu0 0.0
    %1315 = vmatprep.subr.mxu0 0.0
    %1316 = vmatpush1.msra.mxu0 0.0
    %1317 = vmatprep.subr.mxu0 0.0
    %1318 = vmatpush1.msra.mxu0 0.0
    %1319 = vmatprep.subr.mxu0 0.0
    %1320 = vmatpush1.msra.mxu0 0.0
    %1321 = vmatprep.subr.mxu0 0.0
    %1322 = vmatpush1.msra.mxu0 0.0
    %1323 = vmatprep.subr.mxu0 0.0
    %1324 = vmatpush1.msra.mxu0 0.0
    %1325 = vmatprep.subr.mxu0 0.0
    %1326 = vmatpush1.msra.mxu0 0.0
    %1327 = vmatprep.subr.mxu0 0.0
    %1328 = vmatpush1.msra.mxu0 0.0
    %1329 = vmatprep.subr.mxu0 0.0
    %1330 = vmatpush1.msra.mxu0 0.0
    %1331 = vmatprep.subr.mxu0 0.0
    %1332 = vmatpush1.msra.mxu0 0.0
    %1333 = vmatprep.mubr.f32.mxu0 0.0
    %1334 = vmatmul.mubr.f32.gmra.mrb[0].mxu0 %v1267
    %v1335 = vpop.f32.mrb[0].mxu0
    %v1336 = vadd.f32 0.0, %v1335
    %v1337 = vpop.f32.mrb[0].mxu0
    %1338 = vdwg.mxu0
    %1339 = vrot.lane.b32.xlu0 %v161, 48
    %v1340 = vpop.permute.xlu0 %1339
    %v1343 = vsel %vm486, %v1172, 0
    %1345 = vmatprep.subr.mxu0 0.0
    %1346 = vmatpush1.msra.mxu0 %v1340
    %1347 = vmatprep.subr.mxu0 0.0
    %1348 = vmatpush1.msra.mxu0 0.0
    %1349 = vmatprep.subr.mxu0 0.0
    %1350 = vmatpush1.msra.mxu0 0.0
    %1351 = vmatprep.subr.mxu0 0.0
    %1352 = vmatpush1.msra.mxu0 0.0
    %1353 = vmatprep.subr.mxu0 0.0
    %1354 = vmatpush1.msra.mxu0 0.0
    %1355 = vmatprep.subr.mxu0 0.0
    %1356 = vmatpush1.msra.mxu0 0.0
    %1357 = vmatprep.subr.mxu0 0.0
    %1358 = vmatpush1.msra.mxu0 0.0
    %1359 = vmatprep.subr.mxu0 0.0
    %1360 = vmatpush1.msra.mxu0 0.0
    %1361 = vmatprep.subr.mxu0 0.0
    %1362 = vmatpush1.msra.mxu0 0.0
    %1363 = vmatprep.subr.mxu0 0.0
    %1364 = vmatpush1.msra.mxu0 0.0
    %1365 = vmatprep.subr.mxu0 0.0
    %1366 = vmatpush1.msra.mxu0 0.0
    %1367 = vmatprep.subr.mxu0 0.0
    %1368 = vmatpush1.msra.mxu0 0.0
    %1369 = vmatprep.subr.mxu0 0.0
    %1370 = vmatpush1.msra.mxu0 0.0
    %1371 = vmatprep.subr.mxu0 0.0
    %1372 = vmatpush1.msra.mxu0 0.0
    %1373 = vmatprep.subr.mxu0 0.0
    %1374 = vmatpush1.msra.mxu0 0.0
    %1375 = vmatprep.subr.mxu0 0.0
    %1376 = vmatpush1.msra.mxu0 0.0
    %1377 = vmatprep.subr.mxu0 0.0
    %1378 = vmatpush1.msra.mxu0 0.0
    %1379 = vmatprep.subr.mxu0 0.0
    %1380 = vmatpush1.msra.mxu0 0.0
    %1381 = vmatprep.subr.mxu0 0.0
    %1382 = vmatpush1.msra.mxu0 0.0
    %1383 = vmatprep.subr.mxu0 0.0
    %1384 = vmatpush1.msra.mxu0 0.0
    %1385 = vmatprep.subr.mxu0 0.0
    %1386 = vmatpush1.msra.mxu0 0.0
    %1387 = vmatprep.subr.mxu0 0.0
    %1388 = vmatpush1.msra.mxu0 0.0
    %1389 = vmatprep.subr.mxu0 0.0
    %1390 = vmatpush1.msra.mxu0 0.0
    %1391 = vmatprep.subr.mxu0 0.0
    %1392 = vmatpush1.msra.mxu0 0.0
    %1393 = vmatprep.subr.mxu0 0.0
    %1394 = vmatpush1.msra.mxu0 0.0
    %1395 = vmatprep.subr.mxu0 0.0
    %1396 = vmatpush1.msra.mxu0 0.0
    %1397 = vmatprep.subr.mxu0 0.0
    %1398 = vmatpush1.msra.mxu0 0.0
    %1399 = vmatprep.subr.mxu0 0.0
    %1400 = vmatpush1.msra.mxu0 0.0
    %1401 = vmatprep.subr.mxu0 0.0
    %1402 = vmatpush1.msra.mxu0 0.0
    %1403 = vmatprep.subr.mxu0 0.0
    %1404 = vmatpush1.msra.mxu0 0.0
    %1405 = vmatprep.subr.mxu0 0.0
    %1406 = vmatpush1.msra.mxu0 0.0
    %1407 = vmatprep.subr.mxu0 0.0
    %1408 = vmatpush1.msra.mxu0 0.0
    %1409 = vmatprep.mubr.f32.mxu0 0.0
    %1410 = vmatmul.mubr.f32.gmra.mrb[0].mxu0 %v1343
    %v1411 = vpop.f32.mrb[0].mxu0
    %v1412 = vadd.f32 0.0, %v1411
    %v1413 = vpop.f32.mrb[0].mxu0
    %1414 = vdwg.mxu0
    %1415 = vrot.lane.b32.xlu0 %v166, 48
    %v1416 = vpop.permute.xlu0 %1415
    %v1419 = vsel %vm486, %v1174, 0
    %1421 = vmatprep.subr.mxu0 0.0
    %1422 = vmatpush1.msra.mxu0 %v1416
    %1423 = vmatprep.subr.mxu0 0.0
    %1424 = vmatpush1.msra.mxu0 0.0
    %1425 = vmatprep.subr.mxu0 0.0
    %1426 = vmatpush1.msra.mxu0 0.0
    %1427 = vmatprep.subr.mxu0 0.0
    %1428 = vmatpush1.msra.mxu0 0.0
    %1429 = vmatprep.subr.mxu0 0.0
    %1430 = vmatpush1.msra.mxu0 0.0
    %1431 = vmatprep.subr.mxu0 0.0
    %1432 = vmatpush1.msra.mxu0 0.0
    %1433 = vmatprep.subr.mxu0 0.0
    %1434 = vmatpush1.msra.mxu0 0.0
    %1435 = vmatprep.subr.mxu0 0.0
    %1436 = vmatpush1.msra.mxu0 0.0
    %1437 = vmatprep.subr.mxu0 0.0
    %1438 = vmatpush1.msra.mxu0 0.0
    %1439 = vmatprep.subr.mxu0 0.0
    %1440 = vmatpush1.msra.mxu0 0.0
    %1441 = vmatprep.subr.mxu0 0.0
    %1442 = vmatpush1.msra.mxu0 0.0
    %1443 = vmatprep.subr.mxu0 0.0
    %1444 = vmatpush1.msra.mxu0 0.0
    %1445 = vmatprep.subr.mxu0 0.0
    %1446 = vmatpush1.msra.mxu0 0.0
    %1447 = vmatprep.subr.mxu0 0.0
    %1448 = vmatpush1.msra.mxu0 0.0
    %1449 = vmatprep.subr.mxu0 0.0
    %1450 = vmatpush1.msra.mxu0 0.0
    %1451 = vmatprep.subr.mxu0 0.0
    %1452 = vmatpush1.msra.mxu0 0.0
    %1453 = vmatprep.subr.mxu0 0.0
    %1454 = vmatpush1.msra.mxu0 0.0
    %1455 = vmatprep.subr.mxu0 0.0
    %1456 = vmatpush1.msra.mxu0 0.0
    %1457 = vmatprep.subr.mxu0 0.0
    %1458 = vmatpush1.msra.mxu0 0.0
    %1459 = vmatprep.subr.mxu0 0.0
    %1460 = vmatpush1.msra.mxu0 0.0
    %1461 = vmatprep.subr.mxu0 0.0
    %1462 = vmatpush1.msra.mxu0 0.0
    %1463 = vmatprep.subr.mxu0 0.0
    %1464 = vmatpush1.msra.mxu0 0.0
    %1465 = vmatprep.subr.mxu0 0.0
    %1466 = vmatpush1.msra.mxu0 0.0
    %1467 = vmatprep.subr.mxu0 0.0
    %1468 = vmatpush1.msra.mxu0 0.0
    %1469 = vmatprep.subr.mxu0 0.0
    %1470 = vmatpush1.msra.mxu0 0.0
    %1471 = vmatprep.subr.mxu0 0.0
    %1472 = vmatpush1.msra.mxu0 0.0
    %1473 = vmatprep.subr.mxu0 0.0
    %1474 = vmatpush1.msra.mxu0 0.0
    %1475 = vmatprep.subr.mxu0 0.0
    %1476 = vmatpush1.msra.mxu0 0.0
    %1477 = vmatprep.subr.mxu0 0.0
    %1478 = vmatpush1.msra.mxu0 0.0
    %1479 = vmatprep.subr.mxu0 0.0
    %1480 = vmatpush1.msra.mxu0 0.0
    %1481 = vmatprep.subr.mxu0 0.0
    %1482 = vmatpush1.msra.mxu0 0.0
    %1483 = vmatprep.subr.mxu0 0.0
    %1484 = vmatpush1.msra.mxu0 0.0
    %1485 = vmatprep.mubr.f32.mxu0 0.0
    %1486 = vmatmul.mubr.f32.gmra.mrb[0].mxu0 %v1419
    %v1487 = vpop.f32.mrb[0].mxu0
    %v1488 = vadd.f32 0.0, %v1487
    %v1489 = vpop.f32.mrb[0].mxu0
    %1490 = vdwg.mxu0
    %v1491 = vrcp.pop %v1177
    %v1492 = vrcp.pop %v1180
    %v1493 = vrcp.pop %v1183
    %v1494 = vrcp.pop %v1186
    %v1495 = vmul.f32 %v1260, %v1491
    %v1496 = vmul.f32 %v1336, %v1492
    %v1497 = vmul.f32 %v1412, %v1493
    %v1498 = vmul.f32 %v1488, %v1494
    %1503 = vrot.lane.b32.xlu0 %v1495, 16
    %v1504 = vpop.permute.xlu0 %1503
    %1505 = vrot.lane.b32.xlu0 %v1496, 16
    %v1506 = vpop.permute.xlu0 %1505
    %1507 = vrot.lane.b32.xlu0 %v1497, 16
    %v1508 = vpop.permute.xlu0 %1507
    %1509 = vrot.lane.b32.xlu0 %v1498, 16
    %v1510 = vpop.permute.xlu0 %1509
    %vm1515 = vcmask 261248
    %1516 = vst.msk [vmem:[#allocation2] sm:$0xff] %vm1515, %v1504
    %1517 = vst.msk [vmem:[#allocation2 + $0x8] sm:$0xff] %vm1515, %v1506
    %1518 = vst.msk [vmem:[#allocation2 + $0x10] sm:$0xff] %vm1515, %v1508
    %1519 = vst.msk [vmem:[#allocation2 + $0x18] sm:$0xff] %vm1515, %v1510
    %v1520 = vld [vmem:[#allocation2] sm:$0xff]
    %v1521 = vld [vmem:[#allocation2 + $0x8] sm:$0xff]
    %v1522 = vld [vmem:[#allocation2 + $0x10] sm:$0xff]
    %v1523 = vld [vmem:[#allocation2 + $0x18] sm:$0xff]
    %v1524 = vld [vmem:[%s3] sm:$0x1]
    %v1526 = vlaneseq
    %v1527 = vshrl.u32 %v1526, 7
    %v1528 = vsub.s32 0, %v1527
    %v1529 = vrot.slane %v1524, %v1528
    %v1532 = vsel %vm71, %v1520, 0
    %v1535 = vsel %vm71, %v1521, 0
    %v1538 = vsel %vm71, %v1522, 0
    %v1541 = vsel %vm71, %v1523, 0
    %1543 = vmatprep.subr.mxu0 0.0
    %1544 = vmatpush1.msra.mxu0 %v67
    %1545 = vmatprep.subr.mxu0 0.0
    %1546 = vmatpush1.msra.mxu0 %v68
    %1547 = vmatprep.subr.mxu0 0.0
    %1548 = vmatpush1.msra.mxu0 %v69
    %1549 = vmatprep.subr.mxu0 0.0
    %1550 = vmatpush1.msra.mxu0 %v70
    %1551 = vmatprep.subr.mxu0 0.0
    %1552 = vmatpush1.msra.mxu0 0.0
    %1553 = vmatprep.subr.mxu0 0.0
    %1554 = vmatpush1.msra.mxu0 0.0
    %1555 = vmatprep.subr.mxu0 0.0
    %1556 = vmatpush1.msra.mxu0 0.0
    %1557 = vmatprep.subr.mxu0 0.0
    %1558 = vmatpush1.msra.mxu0 0.0
    %1559 = vmatprep.subr.mxu0 0.0
    %1560 = vmatpush1.msra.mxu0 0.0
    %1561 = vmatprep.subr.mxu0 0.0
    %1562 = vmatpush1.msra.mxu0 0.0
    %1563 = vmatprep.subr.mxu0 0.0
    %1564 = vmatpush1.msra.mxu0 0.0
    %1565 = vmatprep.subr.mxu0 0.0
    %1566 = vmatpush1.msra.mxu0 0.0
    %1567 = vmatprep.subr.mxu0 0.0
    %1568 = vmatpush1.msra.mxu0 0.0
    %1569 = vmatprep.subr.mxu0 0.0
    %1570 = vmatpush1.msra.mxu0 0.0
    %1571 = vmatprep.subr.mxu0 0.0
    %1572 = vmatpush1.msra.mxu0 0.0
    %1573 = vmatprep.subr.mxu0 0.0
    %1574 = vmatpush1.msra.mxu0 0.0
    %1575 = vmatprep.subr.mxu0 0.0
    %1576 = vmatpush1.msra.mxu0 0.0
    %1577 = vmatprep.subr.mxu0 0.0
    %1578 = vmatpush1.msra.mxu0 0.0
    %1579 = vmatprep.subr.mxu0 0.0
    %1580 = vmatpush1.msra.mxu0 0.0
    %1581 = vmatprep.subr.mxu0 0.0
    %1582 = vmatpush1.msra.mxu0 0.0
    %1583 = vmatprep.subr.mxu0 0.0
    %1584 = vmatpush1.msra.mxu0 0.0
    %1585 = vmatprep.subr.mxu0 0.0
    %1586 = vmatpush1.msra.mxu0 0.0
    %1587 = vmatprep.subr.mxu0 0.0
    %1588 = vmatpush1.msra.mxu0 0.0
    %1589 = vmatprep.subr.mxu0 0.0
    %1590 = vmatpush1.msra.mxu0 0.0
    %1591 = vmatprep.subr.mxu0 0.0
    %1592 = vmatpush1.msra.mxu0 0.0
    %1593 = vmatprep.subr.mxu0 0.0
    %1594 = vmatpush1.msra.mxu0 0.0
    %1595 = vmatprep.subr.mxu0 0.0
    %1596 = vmatpush1.msra.mxu0 0.0
    %1597 = vmatprep.subr.mxu0 0.0
    %1598 = vmatpush1.msra.mxu0 0.0
    %1599 = vmatprep.subr.mxu0 0.0
    %1600 = vmatpush1.msra.mxu0 0.0
    %1601 = vmatprep.subr.mxu0 0.0
    %1602 = vmatpush1.msra.mxu0 0.0
    %1603 = vmatprep.subr.mxu0 0.0
    %1604 = vmatpush1.msra.mxu0 0.0
    %1605 = vmatprep.subr.mxu0 0.0
    %1606 = vmatpush1.msra.mxu0 0.0
    %1607 = vmatprep.mubr.f32.mxu0 0.0
    %1608 = vmatmul.mubr.f32.gmra.mrb[0].mxu0 %v1532
    %v1609 = vpop.f32.mrb[0].mxu0
    %v1610 = vadd.f32 %v1529, %v1609
    %v1611 = vpop.f32.mrb[0].mxu0
    %1612 = vmatprep.mubr.f32.mxu0 0.0
    %1613 = vmatmul.mubr.f32.gmra.mrb[0].mxu0 %v1535
    %v1614 = vpop.f32.mrb[0].mxu0
    %v1615 = vadd.f32 %v1529, %v1614
    %v1616 = vpop.f32.mrb[0].mxu0
    %1617 = vmatprep.mubr.f32.mxu0 0.0
    %1618 = vmatmul.mubr.f32.gmra.mrb[0].mxu0 %v1538
    %v1619 = vpop.f32.mrb[0].mxu0
    %v1620 = vadd.f32 %v1529, %v1619
    %v1621 = vpop.f32.mrb[0].mxu0
    %1622 = vmatprep.mubr.f32.mxu0 0.0
    %1623 = vmatmul.mubr.f32.gmra.mrb[0].mxu0 %v1541
    %v1624 = vpop.f32.mrb[0].mxu0
    %v1625 = vadd.f32 %v1529, %v1624
    %v1626 = vpop.f32.mrb[0].mxu0
    %1627 = vdwg.mxu0
    %1628 = vst.msk [vmem:[#allocation9] sm:$0xff] %vm71, %v1610
    %1629 = vst.msk [vmem:[#allocation9 + $0x8] sm:$0xff] %vm71, %v1615
    %1630 = vst.msk [vmem:[#allocation9 + $0x10] sm:$0xff] %vm71, %v1620
    %1631 = vst.msk [vmem:[#allocation9 + $0x18] sm:$0xff] %vm71, %v1625
    // Predicated region
    $region30: #{tpu_custom_call.1} parent=1 // pred_check
      _
    $region31: #{tpu_custom_call.1} parent=1 // pred_check_branch
      %1633 = sbr.rel (0) target = $region33
    $region32: #{tpu_custom_call.1} parent=1 // pred_region
      %s1635 = ssub.s32 512, 512
      %1636 = vsyncadd [#allocation5], %s1635
      %s1637 = sshll.u32 [#allocation9], 4
      %s1638 = int_to_ptr.vmem [resolvable:$true] %s1637
      %1643 = dma.vmem_to_hbm [thread:$0]  %s1638, 512, %s4, [#allocation5], 128, 128, 8
    $region33: #{tpu_custom_call.1} parent=1 // pred_fallthru
      _
    // Predicated region
    $region34: #{tpu_custom_call.1} parent=1 // pred_check
      _
    $region35: #{tpu_custom_call.1} parent=1 // pred_check_branch
      %1645 = sbr.rel (0) target = $region37
    $region36: #{tpu_custom_call.1} parent=1 // pred_region
      %1646 = dma.done [#allocation5], 512
    $region37: #{tpu_custom_call.1} parent=1 // pred_fallthru
      _
    %1647 = vsyncpa [#allocation4], 1
    %1648 = vsyncpa [#allocation7], 1
    %1649 = vsyncpa [#allocation5], 1

// kernel: tpu_custom_call.1
$region0: #{tpu_custom_call.1}
  #allocation0 [shape = 'u32[]', space=smem, size = 0x4, offset = 0x4, fixed_abs, tag = 'smem constant byte address 0x4 - core index']
  #allocation1 [shape = 'u32[144,128]{1,0:T(1,128)}', space=vmem, size = 0x12000, scoped, tag = 'internal scratch']
  #allocation2 [shape = 'f32[32,32]{1,0:T(8,128)}', space=vmem, size = 0x4000, scoped, tag = 'scratch operand']
  %s0 = inlined_call_operand.hbm [shape: f32[4,8,32], index: 0, kind: input, shape index: {}]
  %s1 = inlined_call_operand.hbm [shape: f32[32,96], index: 1, kind: input, shape index: {}]
  %s2 = inlined_call_operand.hbm [shape: f32[32,32], index: 2, kind: input, shape index: {}]
  %s3 = inlined_call_operand.vmem [shape: f32[1,32], index: 3, kind: input, shape index: {}]
  %s4 = inlined_call_operand.hbm [shape: f32[4,8,32], index: 4, kind: output, shape index: {}]
  %s5 = sld [smem:[#allocation0]]
  $region38: #{tpu_custom_call.1} parent=0
    _
  %s7 = ssub.s32 1, %s5
  %s8 = scalar_select 0, %s7, %s5
  $region1: #{tpu_custom_call.1} parent=0
    #allocation3 [shape = 'u8[16384]{0}', space=vmem, size = 0x4000, scoped, tag = 'input window, operand 0, single buffered']
    #allocation4 [shape = 's32[1]{0}', space=sflag, size = 0x4, scoped, tag = 'scoped memory for tpu_custom_call.1']
    #allocation5 [shape = 's32[1]{0}', space=sflag, size = 0x4, scoped, tag = 'scoped memory for tpu_custom_call.1']
    #allocation6 [shape = 'u8[16384]{0}', space=vmem, size = 0x4000, scoped, tag = 'input window, operand 1, single buffered']
    #allocation7 [shape = 's32[1]{0}', space=sflag, size = 0x4, scoped, tag = 'scoped memory for tpu_custom_call.1']
    #allocation8 [shape = 'u8[16384]{0}', space=vmem, size = 0x4000, scoped, tag = 'input window, operand 2, single buffered']
    #allocation9 [shape = 'u8[16384]{0}', space=vmem, size = 0x4000, scoped, tag = 'output window, operand 0, single buffered']
    %9 = vsyncpa [#allocation4], 0
    %10 = vsyncpa [#allocation7], 0
    %11 = vsyncpa [#allocation5], 0
    // Predicated region
    $region2: #{tpu_custom_call.1} parent=1 // pred_check
      _
    $region3: #{tpu_custom_call.1} parent=1 // pred_check_branch
      %13 = sbr.rel (0) target = $region5
    $region4: #{tpu_custom_call.1} parent=1 // pred_region
      %s15 = ssub.s32 512, 512
      %16 = vsyncadd [#allocation4], %s15
      %s17 = sshll.u32 [#allocation3], 4
      %s18 = int_to_ptr.vmem [resolvable:$true] %s17
      %23 = dma.hbm_to_vmem [thread:$0]  %s0, 512, %s18, [#allocation4], 128, 128, 8
    $region5: #{tpu_custom_call.1} parent=1 // pred_fallthru
      _
    // Predicated region
    $region6: #{tpu_custom_call.1} parent=1 // pred_check
      _
    $region7: #{tpu_custom_call.1} parent=1 // pred_check_branch
      %25 = sbr.rel (0) target = $region9
    $region8: #{tpu_custom_call.1} parent=1 // pred_region
      %s27 = ssub.s32 512, 512
      %28 = vsyncadd [#allocation7], %s27
      %s29 = sshll.u32 [#allocation6], 4
      %s30 = int_to_ptr.vmem [resolvable:$true] %s29
      %35 = dma.hbm_to_vmem [thread:$0]  %s1, 512, %s30, [#allocation7], 128, 128, 8
    $region9: #{tpu_custom_call.1} parent=1 // pred_fallthru
      _
    // Predicated region
    $region10: #{tpu_custom_call.1} parent=1 // pred_check
      _
    $region11: #{tpu_custom_call.1} parent=1 // pred_check_branch
      %37 = sbr.rel (0) target = $region13
    $region12: #{tpu_custom_call.1} parent=1 // pred_region
      %s39 = ssub.s32 512, 512
      %40 = vsyncadd [#allocation7], %s39
      %s41 = sshll.u32 [#allocation8], 4
      %s42 = int_to_ptr.vmem [resolvable:$true] %s41
      %47 = dma.hbm_to_vmem [thread:$0]  %s2, 512, %s42, [#allocation7], 128, 128, 8
    $region13: #{tpu_custom_call.1} parent=1 // pred_fallthru
      _
    // Predicated region
    $region14: #{tpu_custom_call.1} parent=1 // pred_check
      _
    $region15: #{tpu_custom_call.1} parent=1 // pred_check_branch
      %49 = sbr.rel (0) target = $region17
    $region16: #{tpu_custom_call.1} parent=1 // pred_region
      _
    $region17: #{tpu_custom_call.1} parent=1 // pred_fallthru
      _
    // Predicated region
    $region18: #{tpu_custom_call.1} parent=1 // pred_check
      _
    $region19: #{tpu_custom_call.1} parent=1 // pred_check_branch
      %51 = sbr.rel (0) target = $region21
    $region20: #{tpu_custom_call.1} parent=1 // pred_region
      %52 = dma.done [#allocation4], 512
    $region21: #{tpu_custom_call.1} parent=1 // pred_fallthru
      _
    // Predicated region
    $region22: #{tpu_custom_call.1} parent=1 // pred_check
      _
    $region23: #{tpu_custom_call.1} parent=1 // pred_check_branch
      %54 = sbr.rel (0) target = $region25
    $region24: #{tpu_custom_call.1} parent=1 // pred_region
      %55 = dma.done [#allocation7], 512
    $region25: #{tpu_custom_call.1} parent=1 // pred_fallthru
      _
    // Predicated region
    $region26: #{tpu_custom_call.1} parent=1 // pred_check
      _
    $region27: #{tpu_custom_call.1} parent=1 // pred_check_branch
      %57 = sbr.rel (0) target = $region29
    $region28: #{tpu_custom_call.1} parent=1 // pred_region
      %58 = dma.done [#allocation7], 512
    $region29: #{tpu_custom_call.1} parent=1 // pred_fallthru
      _
    %v59 = vld [vmem:[#allocation3] sm:$0xff]
    %v60 = vld [vmem:[#allocation3 + $0x8] sm:$0xff]
    %v61 = vld [vmem:[#allocation3 + $0x10] sm:$0xff]
    %v62 = vld [vmem:[#allocation3 + $0x18] sm:$0xff]
    %v63 = vld [vmem:[#allocation6] sm:$0xff]
    %v64 = vld [vmem:[#allocation6 + $0x8] sm:$0xff]
    %v65 = vld [vmem:[#allocation6 + $0x10] sm:$0xff]
    %v66 = vld [vmem:[#allocation6 + $0x18] sm:$0xff]
    %v67 = vld [vmem:[#allocation8] sm:$0xff]
    %v68 = vld [vmem:[#allocation8 + $0x8] sm:$0xff]
    %v69 = vld [vmem:[#allocation8 + $0x10] sm:$0xff]
    %v70 = vld [vmem:[#allocation8 + $0x18] sm:$0xff]
    %vm71 = vcmask 261120
    %v73 = vsel %vm71, %v59, 0
    %v76 = vsel %vm71, %v60, 0
    %v79 = vsel %vm71, %v61, 0
    %v82 = vsel %vm71, %v62, 0
    %84 = vmatprep.subr.mxu0 0.0
    %85 = vmatpush1.msra.mxu0 %v63
    %86 = vmatprep.subr.mxu0 0.0
    %87 = vmatpush1.msra.mxu0 %v64
    %88 = vmatprep.subr.mxu0 0.0
    %89 = vmatpush1.msra.mxu0 %v65
    %90 = vmatprep.subr.mxu0 0.0
    %91 = vmatpush1.msra.mxu0 %v66
    %92 = vmatprep.subr.mxu0 0.0
    %93 = vmatpush1.msra.mxu0 0.0
    %94 = vmatprep.subr.mxu0 0.0
    %95 = vmatpush1.msra.mxu0 0.0
    %96 = vmatprep.subr.mxu0 0.0
    %97 = vmatpush1.msra.mxu0 0.0
    %98 = vmatprep.subr.mxu0 0.0
    %99 = vmatpush1.msra.mxu0 0.0
    %100 = vmatprep.subr.mxu0 0.0
    %101 = vmatpush1.msra.mxu0 0.0
    %102 = vmatprep.subr.mxu0 0.0
    %103 = vmatpush1.msra.mxu0 0.0
    %104 = vmatprep.subr.mxu0 0.0
    %105 = vmatpush1.msra.mxu0 0.0
    %106 = vmatprep.subr.mxu0 0.0
    %107 = vmatpush1.msra.mxu0 0.0
    %108 = vmatprep.subr.mxu0 0.0
    %109 = vmatpush1.msra.mxu0 0.0
    %110 = vmatprep.subr.mxu0 0.0
    %111 = vmatpush1.msra.mxu0 0.0
    %112 = vmatprep.subr.mxu0 0.0
    %113 = vmatpush1.msra.mxu0 0.0
    %114 = vmatprep.subr.mxu0 0.0
    %115 = vmatpush1.msra.mxu0 0.0
    %116 = vmatprep.subr.mxu0 0.0
    %117 = vmatpush1.msra.mxu0 0.0
    %118 = vmatprep.subr.mxu0 0.0
    %119 = vmatpush1.msra.mxu0 0.0
    %120 = vmatprep.subr.mxu0 0.0
    %121 = vmatpush1.msra.mxu0 0.0
    %122 = vmatprep.subr.mxu0 0.0
    %123 = vmatpush1.msra.mxu0 0.0
    %124 = vmatprep.subr.mxu0 0.0
    %125 = vmatpush1.msra.mxu0 0.0
    %126 = vmatprep.subr.mxu0 0.0
    %127 = vmatpush1.msra.mxu0 0.0
    %128 = vmatprep.subr.mxu0 0.0
    %129 = vmatpush1.msra.mxu0 0.0
    %130 = vmatprep.subr.mxu0 0.0
    %131 = vmatpush1.msra.mxu0 0.0
    %132 = vmatprep.subr.mxu0 0.0
    %133 = vmatpush1.msra.mxu0 0.0
    %134 = vmatprep.subr.mxu0 0.0
    %135 = vmatpush1.msra.mxu0 0.0
    %136 = vmatprep.subr.mxu0 0.0
    %137 = vmatpush1.msra.mxu0 0.0
    %138 = vmatprep.subr.mxu0 0.0
    %139 = vmatpush1.msra.mxu0 0.0
    %140 = vmatprep.subr.mxu0 0.0
    %141 = vmatpush1.msra.mxu0 0.0
    %142 = vmatprep.subr.mxu0 0.0
    %143 = vmatpush1.msra.mxu0 0.0
    %144 = vmatprep.subr.mxu0 0.0
    %145 = vmatpush1.msra.mxu0 0.0
    %146 = vmatprep.subr.mxu0 0.0
    %147 = vmatpush1.msra.mxu0 0.0
    %148 = vmatprep.mubr.f32.mxu0 0.0
    %149 = vmatmul.mubr.f32.gmra.mrb[0].mxu0 %v73
    %v150 = vpop.f32.mrb[0].mxu0
    %v151 = vadd.f32 0.0, %v150
    %v152 = vpop.f32.mrb[0].mxu0
    %153 = vmatprep.mubr.f32.mxu0 0.0
    %154 = vmatmul.mubr.f32.gmra.mrb[0].mxu0 %v76
    %v155 = vpop.f32.mrb[0].mxu0
    %v156 = vadd.f32 0.0, %v155
    %v157 = vpop.f32.mrb[0].mxu0
    %158 = vmatprep.mubr.f32.mxu0 0.0
    %159 = vmatmul.mubr.f32.gmra.mrb[0].mxu0 %v79
    %v160 = vpop.f32.mrb[0].mxu0
    %v161 = vadd.f32 0.0, %v160
    %v162 = vpop.f32.mrb[0].mxu0
    %163 = vmatprep.mubr.f32.mxu0 0.0
    %164 = vmatmul.mubr.f32.gmra.mrb[0].mxu0 %v82
    %v165 = vpop.f32.mrb[0].mxu0
    %v166 = vadd.f32 0.0, %v165
    %v167 = vpop.f32.mrb[0].mxu0
    %168 = vdwg.mxu0
    %v169 = vmul.f32 %v151, 0.25
    %v170 = vmul.f32 %v156, 0.25
    %v171 = vmul.f32 %v161, 0.25
    %v172 = vmul.f32 %v166, 0.25
    %174 = vrot.lane.b32.xlu0 %v151, 96
    %v175 = vpop.permute.xlu0 %174
    %vm176 = vcmask 130048
    %v178 = vsel %vm176, %v169, 0
    %v180 = vsel %vm176, %v175, 0
    %182 = vmatprep.subr.mxu0 0.0
    %183 = vmatpush1.xpose.msra.mxu0 %v180
    %184 = vmatprep.subr.mxu0 0.0
    %185 = vmatpush1.xpose.msra.mxu0 0.0
    %186 = vmatprep.subr.mxu0 0.0
    %187 = vmatpush1.xpose.msra.mxu0 0.0
    %188 = vmatprep.subr.mxu0 0.0
    %189 = vmatpush1.xpose.msra.mxu0 0.0
    %190 = vmatprep.subr.mxu0 0.0
    %191 = vmatpush1.xpose.msra.mxu0 0.0
    %192 = vmatprep.subr.mxu0 0.0
    %193 = vmatpush1.xpose.msra.mxu0 0.0
    %194 = vmatprep.subr.mxu0 0.0
    %195 = vmatpush1.xpose.msra.mxu0 0.0
    %196 = vmatprep.subr.mxu0 0.0
    %197 = vmatpush1.xpose.msra.mxu0 0.0
    %198 = vmatprep.subr.mxu0 0.0
    %199 = vmatpush1.xpose.msra.mxu0 0.0
    %200 = vmatprep.subr.mxu0 0.0
    %201 = vmatpush1.xpose.msra.mxu0 0.0
    %202 = vmatprep.subr.mxu0 0.0
    %203 = vmatpush1.xpose.msra.mxu0 0.0
    %204 = vmatprep.subr.mxu0 0.0
    %205 = vmatpush1.xpose.msra.mxu0 0.0
    %206 = vmatprep.subr.mxu0 0.0
    %207 = vmatpush1.xpose.msra.mxu0 0.0
    %208 = vmatprep.subr.mxu0 0.0
    %209 = vmatpush1.xpose.msra.mxu0 0.0
    %210 = vmatprep.subr.mxu0 0.0
    %211 = vmatpush1.xpose.msra.mxu0 0.0
    %212 = vmatprep.subr.mxu0 0.0
    %213 = vmatpush1.xpose.msra.mxu0 0.0
    %214 = vmatprep.subr.mxu0 0.0
    %215 = vmatpush1.xpose.msra.mxu0 0.0
    %216 = vmatprep.subr.mxu0 0.0
    %217 = vmatpush1.xpose.msra.mxu0 0.0
    %218 = vmatprep.subr.mxu0 0.0
    %219 = vmatpush1.xpose.msra.mxu0 0.0
    %220 = vmatprep.subr.mxu0 0.0
    %221 = vmatpush1.xpose.msra.mxu0 0.0
    %222 = vmatprep.subr.mxu0 0.0
    %223 = vmatpush1.xpose.msra.mxu0 0.0
    %224 = vmatprep.subr.mxu0 0.0
    %225 = vmatpush1.xpose.msra.mxu0 0.0
    %226 = vmatprep.subr.mxu0 0.0
    %227 = vmatpush1.xpose.msra.mxu0 0.0
    %228 = vmatprep.subr.mxu0 0.0
    %229 = vmatpush1.xpose.msra.mxu0 0.0
    %230 = vmatprep.subr.mxu0 0.0
    %231 = vmatpush1.xpose.msra.mxu0 0.0
    %232 = vmatprep.subr.mxu0 0.0
    %233 = vmatpush1.xpose.msra.mxu0 0.0
    %234 = vmatprep.subr.mxu0 0.0
    %235 = vmatpush1.xpose.msra.mxu0 0.0
    %236 = vmatprep.subr.mxu0 0.0
    %237 = vmatpush1.xpose.msra.mxu0 0.0
    %238 = vmatprep.subr.mxu0 0.0
    %239 = vmatpush1.xpose.msra.mxu0 0.0
    %240 = vmatprep.subr.mxu0 0.0
    %241 = vmatpush1.xpose.msra.mxu0 0.0
    %242 = vmatprep.subr.mxu0 0.0
    %243 = vmatpush1.xpose.msra.mxu0 0.0
    %244 = vmatprep.subr.mxu0 0.0
    %245 = vmatpush1.xpose.msra.mxu0 0.0
    %246 = vmatprep.mubr.f32.mxu0 0.0
    %247 = vmatmul.mubr.f32.gmra.mrb[0].mxu0 %v178
    %v248 = vpop.f32.mrb[0].mxu0
    %v249 = vadd.f32 0.0, %v248
    %v250 = vpop.f32.mrb[0].mxu0
    %251 = vdwg.mxu0
    %253 = vrot.lane.b32.xlu0 %v156, 96
    %v254 = vpop.permute.xlu0 %253
    %v256 = vsel %vm176, %v170, 0
    %v258 = vsel %vm176, %v254, 0
    %260 = vmatprep.subr.mxu0 0.0
    %261 = vmatpush1.xpose.msra.mxu0 %v258
    %262 = vmatprep.subr.mxu0 0.0
    %263 = vmatpush1.xpose.msra.mxu0 0.0
    %264 = vmatprep.subr.mxu0 0.0
    %265 = vmatpush1.xpose.msra.mxu0 0.0
    %266 = vmatprep.subr.mxu0 0.0
    %267 = vmatpush1.xpose.msra.mxu0 0.0
    %268 = vmatprep.subr.mxu0 0.0
    %269 = vmatpush1.xpose.msra.mxu0 0.0
    %270 = vmatprep.subr.mxu0 0.0
    %271 = vmatpush1.xpose.msra.mxu0 0.0
    %272 = vmatprep.subr.mxu0 0.0
    %273 = vmatpush1.xpose.msra.mxu0 0.0
    %274 = vmatprep.subr.mxu0 0.0
    %275 = vmatpush1.xpose.msra.mxu0 0.0
    %276 = vmatprep.subr.mxu0 0.0
    %277 = vmatpush1.xpose.msra.mxu0 0.0
    %278 = vmatprep.subr.mxu0 0.0
    %279 = vmatpush1.xpose.msra.mxu0 0.0
    %280 = vmatprep.subr.mxu0 0.0
    %281 = vmatpush1.xpose.msra.mxu0 0.0
    %282 = vmatprep.subr.mxu0 0.0
    %283 = vmatpush1.xpose.msra.mxu0 0.0
    %284 = vmatprep.subr.mxu0 0.0
    %285 = vmatpush1.xpose.msra.mxu0 0.0
    %286 = vmatprep.subr.mxu0 0.0
    %287 = vmatpush1.xpose.msra.mxu0 0.0
    %288 = vmatprep.subr.mxu0 0.0
    %289 = vmatpush1.xpose.msra.mxu0 0.0
    %290 = vmatprep.subr.mxu0 0.0
    %291 = vmatpush1.xpose.msra.mxu0 0.0
    %292 = vmatprep.subr.mxu0 0.0
    %293 = vmatpush1.xpose.msra.mxu0 0.0
    %294 = vmatprep.subr.mxu0 0.0
    %295 = vmatpush1.xpose.msra.mxu0 0.0
    %296 = vmatprep.subr.mxu0 0.0
    %297 = vmatpush1.xpose.msra.mxu0 0.0
    %298 = vmatprep.subr.mxu0 0.0
    %299 = vmatpush1.xpose.msra.mxu0 0.0
    %300 = vmatprep.subr.mxu0 0.0
    %301 = vmatpush1.xpose.msra.mxu0 0.0
    %302 = vmatprep.subr.mxu0 0.0
    %303 = vmatpush1.xpose.msra.mxu0 0.0
    %304 = vmatprep.subr.mxu0 0.0
    %305 = vmatpush1.xpose.msra.mxu0 0.0
    %306 = vmatprep.subr.mxu0 0.0
    %307 = vmatpush1.xpose.msra.mxu0 0.0
    %308 = vmatprep.subr.mxu0 0.0
    %309 = vmatpush1.xpose.msra.mxu0 0.0
    %310 = vmatprep.subr.mxu0 0.0
    %311 = vmatpush1.xpose.msra.mxu0 0.0
    %312 = vmatprep.subr.mxu0 0.0
    %313 = vmatpush1.xpose.msra.mxu0 0.0
    %314 = vmatprep.subr.mxu0 0.0
    %315 = vmatpush1.xpose.msra.mxu0 0.0
    %316 = vmatprep.subr.mxu0 0.0
    %317 = vmatpush1.xpose.msra.mxu0 0.0
    %318 = vmatprep.subr.mxu0 0.0
    %319 = vmatpush1.xpose.msra.mxu0 0.0
    %320 = vmatprep.subr.mxu0 0.0
    %321 = vmatpush1.xpose.msra.mxu0 0.0
    %322 = vmatprep.subr.mxu0 0.0
    %323 = vmatpush1.xpose.msra.mxu0 0.0
    %324 = vmatprep.mubr.f32.mxu0 0.0
    %325 = vmatmul.mubr.f32.gmra.mrb[0].mxu0 %v256
    %v326 = vpop.f32.mrb[0].mxu0
    %v327 = vadd.f32 0.0, %v326
    %v328 = vpop.f32.mrb[0].mxu0
    %329 = vdwg.mxu0
    %331 = vrot.lane.b32.xlu0 %v161, 96
    %v332 = vpop.permute.xlu0 %331
    %v334 = vsel %vm176, %v171, 0
    %v336 = vsel %vm176, %v332, 0
    %338 = vmatprep.subr.mxu0 0.0
    %339 = vmatpush1.xpose.msra.mxu0 %v336
    %340 = vmatprep.subr.mxu0 0.0
    %341 = vmatpush1.xpose.msra.mxu0 0.0
    %342 = vmatprep.subr.mxu0 0.0
    %343 = vmatpush1.xpose.msra.mxu0 0.0
    %344 = vmatprep.subr.mxu0 0.0
    %345 = vmatpush1.xpose.msra.mxu0 0.0
    %346 = vmatprep.subr.mxu0 0.0
    %347 = vmatpush1.xpose.msra.mxu0 0.0
    %348 = vmatprep.subr.mxu0 0.0
    %349 = vmatpush1.xpose.msra.mxu0 0.0
    %350 = vmatprep.subr.mxu0 0.0
    %351 = vmatpush1.xpose.msra.mxu0 0.0
    %352 = vmatprep.subr.mxu0 0.0
    %353 = vmatpush1.xpose.msra.mxu0 0.0
    %354 = vmatprep.subr.mxu0 0.0
    %355 = vmatpush1.xpose.msra.mxu0 0.0
    %356 = vmatprep.subr.mxu0 0.0
    %357 = vmatpush1.xpose.msra.mxu0 0.0
    %358 = vmatprep.subr.mxu0 0.0
    %359 = vmatpush1.xpose.msra.mxu0 0.0
    %360 = vmatprep.subr.mxu0 0.0
    %361 = vmatpush1.xpose.msra.mxu0 0.0
    %362 = vmatprep.subr.mxu0 0.0
    %363 = vmatpush1.xpose.msra.mxu0 0.0
    %364 = vmatprep.subr.mxu0 0.0
    %365 = vmatpush1.xpose.msra.mxu0 0.0
    %366 = vmatprep.subr.mxu0 0.0
    %367 = vmatpush1.xpose.msra.mxu0 0.0
    %368 = vmatprep.subr.mxu0 0.0
    %369 = vmatpush1.xpose.msra.mxu0 0.0
    %370 = vmatprep.subr.mxu0 0.0
    %371 = vmatpush1.xpose.msra.mxu0 0.0
    %372 = vmatprep.subr.mxu0 0.0
    %373 = vmatpush1.xpose.msra.mxu0 0.0
    %374 = vmatprep.subr.mxu0 0.0
    %375 = vmatpush1.xpose.msra.mxu0 0.0
    %376 = vmatprep.subr.mxu0 0.0
    %377 = vmatpush1.xpose.msra.mxu0 0.0
    %378 = vmatprep.subr.mxu0 0.0
    %379 = vmatpush1.xpose.msra.mxu0 0.0
    %380 = vmatprep.subr.mxu0 0.0
    %381 = vmatpush1.xpose.msra.mxu0 0.0
    %382 = vmatprep.subr.mxu0 0.0
    %383 = vmatpush1.xpose.msra.mxu0 0.0
    %384 = vmatprep.subr.mxu0 0.0
    %385 = vmatpush1.xpose.msra.mxu0 0.0
    %386 = vmatprep.subr.mxu0 0.0
    %387 = vmatpush1.xpose.msra.mxu0 0.0
    %388 = vmatprep.subr.mxu0 0.0
    %389 = vmatpush1.xpose.msra.mxu0 0.0
    %390 = vmatprep.subr.mxu0 0.0
    %391 = vmatpush1.xpose.msra.mxu0 0.0
    %392 = vmatprep.subr.mxu0 0.0
    %393 = vmatpush1.xpose.msra.mxu0 0.0
    %394 = vmatprep.subr.mxu0 0.0
    %395 = vmatpush1.xpose.msra.mxu0 0.0
    %396 = vmatprep.subr.mxu0 0.0
    %397 = vmatpush1.xpose.msra.mxu0 0.0
    %398 = vmatprep.subr.mxu0 0.0
    %399 = vmatpush1.xpose.msra.mxu0 0.0
    %400 = vmatprep.subr.mxu0 0.0
    %401 = vmatpush1.xpose.msra.mxu0 0.0
    %402 = vmatprep.mubr.f32.mxu0 0.0
    %403 = vmatmul.mubr.f32.gmra.mrb[0].mxu0 %v334
    %v404 = vpop.f32.mrb[0].mxu0
    %v405 = vadd.f32 0.0, %v404
    %v406 = vpop.f32.mrb[0].mxu0
    %407 = vdwg.mxu0
    %409 = vrot.lane.b32.xlu0 %v166, 96
    %v410 = vpop.permute.xlu0 %409
    %v412 = vsel %vm176, %v172, 0
    %v414 = vsel %vm176, %v410, 0
    %416 = vmatprep.subr.mxu0 0.0
    %417 = vmatpush1.xpose.msra.mxu0 %v414
    %418 = vmatprep.subr.mxu0 0.0
    %419 = vmatpush1.xpose.msra.mxu0 0.0
    %420 = vmatprep.subr.mxu0 0.0
    %421 = vmatpush1.xpose.msra.mxu0 0.0
    %422 = vmatprep.subr.mxu0 0.0
    %423 = vmatpush1.xpose.msra.mxu0 0.0
    %424 = vmatprep.subr.mxu0 0.0
    %425 = vmatpush1.xpose.msra.mxu0 0.0
    %426 = vmatprep.subr.mxu0 0.0
    %427 = vmatpush1.xpose.msra.mxu0 0.0
    %428 = vmatprep.subr.mxu0 0.0
    %429 = vmatpush1.xpose.msra.mxu0 0.0
    %430 = vmatprep.subr.mxu0 0.0
    %431 = vmatpush1.xpose.msra.mxu0 0.0
    %432 = vmatprep.subr.mxu0 0.0
    %433 = vmatpush1.xpose.msra.mxu0 0.0
    %434 = vmatprep.subr.mxu0 0.0
    %435 = vmatpush1.xpose.msra.mxu0 0.0
    %436 = vmatprep.subr.mxu0 0.0
    %437 = vmatpush1.xpose.msra.mxu0 0.0
    %438 = vmatprep.subr.mxu0 0.0
    %439 = vmatpush1.xpose.msra.mxu0 0.0
    %440 = vmatprep.subr.mxu0 0.0
    %441 = vmatpush1.xpose.msra.mxu0 0.0
    %442 = vmatprep.subr.mxu0 0.0
    %443 = vmatpush1.xpose.msra.mxu0 0.0
    %444 = vmatprep.subr.mxu0 0.0
    %445 = vmatpush1.xpose.msra.mxu0 0.0
    %446 = vmatprep.subr.mxu0 0.0
    %447 = vmatpush1.xpose.msra.mxu0 0.0
    %448 = vmatprep.subr.mxu0 0.0
    %449 = vmatpush1.xpose.msra.mxu0 0.0
    %450 = vmatprep.subr.mxu0 0.0
    %451 = vmatpush1.xpose.msra.mxu0 0.0
    %452 = vmatprep.subr.mxu0 0.0
    %453 = vmatpush1.xpose.msra.mxu0 0.0
    %454 = vmatprep.subr.mxu0 0.0
    %455 = vmatpush1.xpose.msra.mxu0 0.0
    %456 = vmatprep.subr.mxu0 0.0
    %457 = vmatpush1.xpose.msra.mxu0 0.0
    %458 = vmatprep.subr.mxu0 0.0
    %459 = vmatpush1.xpose.msra.mxu0 0.0
    %460 = vmatprep.subr.mxu0 0.0
    %461 = vmatpush1.xpose.msra.mxu0 0.0
    %462 = vmatprep.subr.mxu0 0.0
    %463 = vmatpush1.xpose.msra.mxu0 0.0
    %464 = vmatprep.subr.mxu0 0.0
    %465 = vmatpush1.xpose.msra.mxu0 0.0
    %466 = vmatprep.subr.mxu0 0.0
    %467 = vmatpush1.xpose.msra.mxu0 0.0
    %468 = vmatprep.subr.mxu0 0.0
    %469 = vmatpush1.xpose.msra.mxu0 0.0
    %470 = vmatprep.subr.mxu0 0.0
    %471 = vmatpush1.xpose.msra.mxu0 0.0
    %472 = vmatprep.subr.mxu0 0.0
    %473 = vmatpush1.xpose.msra.mxu0 0.0
    %474 = vmatprep.subr.mxu0 0.0
    %475 = vmatpush1.xpose.msra.mxu0 0.0
    %476 = vmatprep.subr.mxu0 0.0
    %477 = vmatpush1.xpose.msra.mxu0 0.0
    %478 = vmatprep.subr.mxu0 0.0
    %479 = vmatpush1.xpose.msra.mxu0 0.0
    %480 = vmatprep.mubr.f32.mxu0 0.0
    %481 = vmatmul.mubr.f32.gmra.mrb[0].mxu0 %v412
    %v482 = vpop.f32.mrb[0].mxu0
    %v483 = vadd.f32 0.0, %v482
    %v484 = vpop.f32.mrb[0].mxu0
    %485 = vdwg.mxu0
    %vm486 = vcmask 64512
    %v487 = vsel %vm486, %v249, -inf
    %488 = vmax.xlane.f32.xlu0 %v487
    %v489 = vpop.xlane.xlu0 %488
    %v490 = vsel %vm486, %v327, -inf
    %491 = vmax.xlane.f32.xlu0 %v490
    %v492 = vpop.xlane.xlu0 %491
    %v493 = vsel %vm486, %v405, -inf
    %494 = vmax.xlane.f32.xlu0 %v493
    %v495 = vpop.xlane.xlu0 %494
    %v496 = vsel %vm486, %v483, -inf
    %497 = vmax.xlane.f32.xlu0 %v496
    %v498 = vpop.xlane.xlu0 %497
    %v499 = vsub.f32 %v249, %v489
    %v500 = vsub.f32 %v327, %v492
    %v501 = vsub.f32 %v405, %v495
    %v502 = vsub.f32 %v483, %v498
    %v503 = vmul.f32 %v499, 1.442695
    %v504 = vpow.pop %v503
    %v505 = vmul.f32 %v500, 1.442695
    %v506 = vpow.pop %v505
    %v507 = vmul.f32 %v501, 1.442695
    %v508 = vpow.pop %v507
    %v509 = vmul.f32 %v502, 1.442695
    %v510 = vpow.pop %v509
    %v511 = vsel %vm486, %v504, 0.0
    %512 = vadd.xlane.f32.xlu0 %v511
    %v513 = vpop.xlane.xlu0 %512
    %v514 = vsel %vm486, %v506, 0.0
    %515 = vadd.xlane.f32.xlu0 %v514
    %v516 = vpop.xlane.xlu0 %515
    %v517 = vsel %vm486, %v508, 0.0
    %518 = vadd.xlane.f32.xlu0 %v517
    %v519 = vpop.xlane.xlu0 %518
    %v520 = vsel %vm486, %v510, 0.0
    %521 = vadd.xlane.f32.xlu0 %v520
    %v522 = vpop.xlane.xlu0 %521
    %523 = vrot.lane.b32.xlu0 %v151, 64
    %v524 = vpop.permute.xlu0 %523
    %v527 = vsel %vm486, %v504, 0
    %529 = vmatprep.subr.mxu0 0.0
    %530 = vmatpush1.msra.mxu0 %v524
    %531 = vmatprep.subr.mxu0 0.0
    %532 = vmatpush1.msra.mxu0 0.0
    %533 = vmatprep.subr.mxu0 0.0
    %534 = vmatpush1.msra.mxu0 0.0
    %535 = vmatprep.subr.mxu0 0.0
    %536 = vmatpush1.msra.mxu0 0.0
    %537 = vmatprep.subr.mxu0 0.0
    %538 = vmatpush1.msra.mxu0 0.0
    %539 = vmatprep.subr.mxu0 0.0
    %540 = vmatpush1.msra.mxu0 0.0
    %541 = vmatprep.subr.mxu0 0.0
    %542 = vmatpush1.msra.mxu0 0.0
    %543 = vmatprep.subr.mxu0 0.0
    %544 = vmatpush1.msra.mxu0 0.0
    %545 = vmatprep.subr.mxu0 0.0
    %546 = vmatpush1.msra.mxu0 0.0
    %547 = vmatprep.subr.mxu0 0.0
    %548 = vmatpush1.msra.mxu0 0.0
    %549 = vmatprep.subr.mxu0 0.0
    %550 = vmatpush1.msra.mxu0 0.0
    %551 = vmatprep.subr.mxu0 0.0
    %552 = vmatpush1.msra.mxu0 0.0
    %553 = vmatprep.subr.mxu0 0.0
    %554 = vmatpush1.msra.mxu0 0.0
    %555 = vmatprep.subr.mxu0 0.0
    %556 = vmatpush1.msra.mxu0 0.0
    %557 = vmatprep.subr.mxu0 0.0
    %558 = vmatpush1.msra.mxu0 0.0
    %559 = vmatprep.subr.mxu0 0.0
    %560 = vmatpush1.msra.mxu0 0.0
    %561 = vmatprep.subr.mxu0 0.0
    %562 = vmatpush1.msra.mxu0 0.0
    %563 = vmatprep.subr.mxu0 0.0
    %564 = vmatpush1.msra.mxu0 0.0
    %565 = vmatprep.subr.mxu0 0.0
    %566 = vmatpush1.msra.mxu0 0.0
    %567 = vmatprep.subr.mxu0 0.0
    %568 = vmatpush1.msra.mxu0 0.0
    %569 = vmatprep.subr.mxu0 0.0
    %570 = vmatpush1.msra.mxu0 0.0
    %571 = vmatprep.subr.mxu0 0.0
    %572 = vmatpush1.msra.mxu0 0.0
    %573 = vmatprep.subr.mxu0 0.0
    %574 = vmatpush1.msra.mxu0 0.0
    %575 = vmatprep.subr.mxu0 0.0
    %576 = vmatpush1.msra.mxu0 0.0
    %577 = vmatprep.subr.mxu0 0.0
    %578 = vmatpush1.msra.mxu0 0.0
    %579 = vmatprep.subr.mxu0 0.0
    %580 = vmatpush1.msra.mxu0 0.0
    %581 = vmatprep.subr.mxu0 0.0
    %582 = vmatpush1.msra.mxu0 0.0
    %583 = vmatprep.subr.mxu0 0.0
    %584 = vmatpush1.msra.mxu0 0.0
    %585 = vmatprep.subr.mxu0 0.0
    %586 = vmatpush1.msra.mxu0 0.0
    %587 = vmatprep.subr.mxu0 0.0
    %588 = vmatpush1.msra.mxu0 0.0
    %589 = vmatprep.subr.mxu0 0.0
    %590 = vmatpush1.msra.mxu0 0.0
    %591 = vmatprep.subr.mxu0 0.0
    %592 = vmatpush1.msra.mxu0 0.0
    %593 = vmatprep.mubr.f32.mxu0 0.0
    %594 = vmatmul.mubr.f32.gmra.mrb[0].mxu0 %v527
    %v595 = vpop.f32.mrb[0].mxu0
    %v596 = vadd.f32 0.0, %v595
    %v597 = vpop.f32.mrb[0].mxu0
    %598 = vdwg.mxu0
    %599 = vrot.lane.b32.xlu0 %v156, 64
    %v600 = vpop.permute.xlu0 %599
    %v603 = vsel %vm486, %v506, 0
    %605 = vmatprep.subr.mxu0 0.0
    %606 = vmatpush1.msra.mxu0 %v600
    %607 = vmatprep.subr.mxu0 0.0
    %608 = vmatpush1.msra.mxu0 0.0
    %609 = vmatprep.subr.mxu0 0.0
    %610 = vmatpush1.msra.mxu0 0.0
    %611 = vmatprep.subr.mxu0 0.0
    %612 = vmatpush1.msra.mxu0 0.0
    %613 = vmatprep.subr.mxu0 0.0
    %614 = vmatpush1.msra.mxu0 0.0
    %615 = vmatprep.subr.mxu0 0.0
    %616 = vmatpush1.msra.mxu0 0.0
    %617 = vmatprep.subr.mxu0 0.0
    %618 = vmatpush1.msra.mxu0 0.0
    %619 = vmatprep.subr.mxu0 0.0
    %620 = vmatpush1.msra.mxu0 0.0
    %621 = vmatprep.subr.mxu0 0.0
    %622 = vmatpush1.msra.mxu0 0.0
    %623 = vmatprep.subr.mxu0 0.0
    %624 = vmatpush1.msra.mxu0 0.0
    %625 = vmatprep.subr.mxu0 0.0
    %626 = vmatpush1.msra.mxu0 0.0
    %627 = vmatprep.subr.mxu0 0.0
    %628 = vmatpush1.msra.mxu0 0.0
    %629 = vmatprep.subr.mxu0 0.0
    %630 = vmatpush1.msra.mxu0 0.0
    %631 = vmatprep.subr.mxu0 0.0
    %632 = vmatpush1.msra.mxu0 0.0
    %633 = vmatprep.subr.mxu0 0.0
    %634 = vmatpush1.msra.mxu0 0.0
    %635 = vmatprep.subr.mxu0 0.0
    %636 = vmatpush1.msra.mxu0 0.0
    %637 = vmatprep.subr.mxu0 0.0
    %638 = vmatpush1.msra.mxu0 0.0
    %639 = vmatprep.subr.mxu0 0.0
    %640 = vmatpush1.msra.mxu0 0.0
    %641 = vmatprep.subr.mxu0 0.0
    %642 = vmatpush1.msra.mxu0 0.0
    %643 = vmatprep.subr.mxu0 0.0
    %644 = vmatpush1.msra.mxu0 0.0
    %645 = vmatprep.subr.mxu0 0.0
    %646 = vmatpush1.msra.mxu0 0.0
    %647 = vmatprep.subr.mxu0 0.0
    %648 = vmatpush1.msra.mxu0 0.0
    %649 = vmatprep.subr.mxu0 0.0
    %650 = vmatpush1.msra.mxu0 0.0
    %651 = vmatprep.subr.mxu0 0.0
    %652 = vmatpush1.msra.mxu0 0.0
    %653 = vmatprep.subr.mxu0 0.0
    %654 = vmatpush1.msra.mxu0 0.0
    %655 = vmatprep.subr.mxu0 0.0
    %656 = vmatpush1.msra.mxu0 0.0
    %657 = vmatprep.subr.mxu0 0.0
    %658 = vmatpush1.msra.mxu0 0.0
    %659 = vmatprep.subr.mxu0 0.0
    %660 = vmatpush1.msra.mxu0 0.0
    %661 = vmatprep.subr.mxu0 0.0
    %662 = vmatpush1.msra.mxu0 0.0
    %663 = vmatprep.subr.mxu0 0.0
    %664 = vmatpush1.msra.mxu0 0.0
    %665 = vmatprep.subr.mxu0 0.0
    %666 = vmatpush1.msra.mxu0 0.0
    %667 = vmatprep.subr.mxu0 0.0
    %668 = vmatpush1.msra.mxu0 0.0
    %669 = vmatprep.mubr.f32.mxu0 0.0
    %670 = vmatmul.mubr.f32.gmra.mrb[0].mxu0 %v603
    %v671 = vpop.f32.mrb[0].mxu0
    %v672 = vadd.f32 0.0, %v671
    %v673 = vpop.f32.mrb[0].mxu0
    %674 = vdwg.mxu0
    %675 = vrot.lane.b32.xlu0 %v161, 64
    %v676 = vpop.permute.xlu0 %675
    %v679 = vsel %vm486, %v508, 0
    %681 = vmatprep.subr.mxu0 0.0
    %682 = vmatpush1.msra.mxu0 %v676
    %683 = vmatprep.subr.mxu0 0.0
    %684 = vmatpush1.msra.mxu0 0.0
    %685 = vmatprep.subr.mxu0 0.0
    %686 = vmatpush1.msra.mxu0 0.0
    %687 = vmatprep.subr.mxu0 0.0
    %688 = vmatpush1.msra.mxu0 0.0
    %689 = vmatprep.subr.mxu0 0.0
    %690 = vmatpush1.msra.mxu0 0.0
    %691 = vmatprep.subr.mxu0 0.0
    %692 = vmatpush1.msra.mxu0 0.0
    %693 = vmatprep.subr.mxu0 0.0
    %694 = vmatpush1.msra.mxu0 0.0
    %695 = vmatprep.subr.mxu0 0.0
    %696 = vmatpush1.msra.mxu0 0.0
    %697 = vmatprep.subr.mxu0 0.0
    %698 = vmatpush1.msra.mxu0 0.0
    %699 = vmatprep.subr.mxu0 0.0
    %700 = vmatpush1.msra.mxu0 0.0
    %701 = vmatprep.subr.mxu0 0.0
    %702 = vmatpush1.msra.mxu0 0.0
    %703 = vmatprep.subr.mxu0 0.0
    %704 = vmatpush1.msra.mxu0 0.0
    %705 = vmatprep.subr.mxu0 0.0
    %706 = vmatpush1.msra.mxu0 0.0
    %707 = vmatprep.subr.mxu0 0.0
    %708 = vmatpush1.msra.mxu0 0.0
    %709 = vmatprep.subr.mxu0 0.0
    %710 = vmatpush1.msra.mxu0 0.0
    %711 = vmatprep.subr.mxu0 0.0
    %712 = vmatpush1.msra.mxu0 0.0
    %713 = vmatprep.subr.mxu0 0.0
    %714 = vmatpush1.msra.mxu0 0.0
    %715 = vmatprep.subr.mxu0 0.0
    %716 = vmatpush1.msra.mxu0 0.0
    %717 = vmatprep.subr.mxu0 0.0
    %718 = vmatpush1.msra.mxu0 0.0
    %719 = vmatprep.subr.mxu0 0.0
    %720 = vmatpush1.msra.mxu0 0.0
    %721 = vmatprep.subr.mxu0 0.0
    %722 = vmatpush1.msra.mxu0 0.0
    %723 = vmatprep.subr.mxu0 0.0
    %724 = vmatpush1.msra.mxu0 0.0
    %725 = vmatprep.subr.mxu0 0.0
    %726 = vmatpush1.msra.mxu0 0.0
    %727 = vmatprep.subr.mxu0 0.0
    %728 = vmatpush1.msra.mxu0 0.0
    %729 = vmatprep.subr.mxu0 0.0
    %730 = vmatpush1.msra.mxu0 0.0
    %731 = vmatprep.subr.mxu0 0.0
    %732 = vmatpush1.msra.mxu0 0.0
    %733 = vmatprep.subr.mxu0 0.0
    %734 = vmatpush1.msra.mxu0 0.0
    %735 = vmatprep.subr.mxu0 0.0
    %736 = vmatpush1.msra.mxu0 0.0
    %737 = vmatprep.subr.mxu0 0.0
    %738 = vmatpush1.msra.mxu0 0.0
    %739 = vmatprep.subr.mxu0 0.0
    %740 = vmatpush1.msra.mxu0 0.0
    %741 = vmatprep.subr.mxu0 0.0
    %742 = vmatpush1.msra.mxu0 0.0
    %743 = vmatprep.subr.mxu0 0.0
    %744 = vmatpush1.msra.mxu0 0.0
    %745 = vmatprep.mubr.f32.mxu0 0.0
    %746 = vmatmul.mubr.f32.gmra.mrb[0].mxu0 %v679
    %v747 = vpop.f32.mrb[0].mxu0
    %v748 = vadd.f32 0.0, %v747
    %v749 = vpop.f32.mrb[0].mxu0
    %750 = vdwg.mxu0
    %751 = vrot.lane.b32.xlu0 %v166, 64
    %v752 = vpop.permute.xlu0 %751
    %v755 = vsel %vm486, %v510, 0
    %757 = vmatprep.subr.mxu0 0.0
    %758 = vmatpush1.msra.mxu0 %v752
    %759 = vmatprep.subr.mxu0 0.0
    %760 = vmatpush1.msra.mxu0 0.0
    %761 = vmatprep.subr.mxu0 0.0
    %762 = vmatpush1.msra.mxu0 0.0
    %763 = vmatprep.subr.mxu0 0.0
    %764 = vmatpush1.msra.mxu0 0.0
    %765 = vmatprep.subr.mxu0 0.0
    %766 = vmatpush1.msra.mxu0 0.0
    %767 = vmatprep.subr.mxu0 0.0
    %768 = vmatpush1.msra.mxu0 0.0
    %769 = vmatprep.subr.mxu0 0.0
    %770 = vmatpush1.msra.mxu0 0.0
    %771 = vmatprep.subr.mxu0 0.0
    %772 = vmatpush1.msra.mxu0 0.0
    %773 = vmatprep.subr.mxu0 0.0
    %774 = vmatpush1.msra.mxu0 0.0
    %775 = vmatprep.subr.mxu0 0.0
    %776 = vmatpush1.msra.mxu0 0.0
    %777 = vmatprep.subr.mxu0 0.0
    %778 = vmatpush1.msra.mxu0 0.0
    %779 = vmatprep.subr.mxu0 0.0
    %780 = vmatpush1.msra.mxu0 0.0
    %781 = vmatprep.subr.mxu0 0.0
    %782 = vmatpush1.msra.mxu0 0.0
    %783 = vmatprep.subr.mxu0 0.0
    %784 = vmatpush1.msra.mxu0 0.0
    %785 = vmatprep.subr.mxu0 0.0
    %786 = vmatpush1.msra.mxu0 0.0
    %787 = vmatprep.subr.mxu0 0.0
    %788 = vmatpush1.msra.mxu0 0.0
    %789 = vmatprep.subr.mxu0 0.0
    %790 = vmatpush1.msra.mxu0 0.0
    %791 = vmatprep.subr.mxu0 0.0
    %792 = vmatpush1.msra.mxu0 0.0
    %793 = vmatprep.subr.mxu0 0.0
    %794 = vmatpush1.msra.mxu0 0.0
    %795 = vmatprep.subr.mxu0 0.0
    %796 = vmatpush1.msra.mxu0 0.0
    %797 = vmatprep.subr.mxu0 0.0
    %798 = vmatpush1.msra.mxu0 0.0
    %799 = vmatprep.subr.mxu0 0.0
    %800 = vmatpush1.msra.mxu0 0.0
    %801 = vmatprep.subr.mxu0 0.0
    %802 = vmatpush1.msra.mxu0 0.0
    %803 = vmatprep.subr.mxu0 0.0
    %804 = vmatpush1.msra.mxu0 0.0
    %805 = vmatprep.subr.mxu0 0.0
    %806 = vmatpush1.msra.mxu0 0.0
    %807 = vmatprep.subr.mxu0 0.0
    %808 = vmatpush1.msra.mxu0 0.0
    %809 = vmatprep.subr.mxu0 0.0
    %810 = vmatpush1.msra.mxu0 0.0
    %811 = vmatprep.subr.mxu0 0.0
    %812 = vmatpush1.msra.mxu0 0.0
    %813 = vmatprep.subr.mxu0 0.0
    %814 = vmatpush1.msra.mxu0 0.0
    %815 = vmatprep.subr.mxu0 0.0
    %816 = vmatpush1.msra.mxu0 0.0
    %817 = vmatprep.subr.mxu0 0.0
    %818 = vmatpush1.msra.mxu0 0.0
    %819 = vmatprep.subr.mxu0 0.0
    %820 = vmatpush1.msra.mxu0 0.0
    %821 = vmatprep.mubr.f32.mxu0 0.0
    %822 = vmatmul.mubr.f32.gmra.mrb[0].mxu0 %v755
    %v823 = vpop.f32.mrb[0].mxu0
    %v824 = vadd.f32 0.0, %v823
    %v825 = vpop.f32.mrb[0].mxu0
    %826 = vdwg.mxu0
    %v827 = vrcp.pop %v513
    %v828 = vrcp.pop %v516
    %v829 = vrcp.pop %v519
    %v830 = vrcp.pop %v522
    %v831 = vmul.f32 %v596, %v827
    %v832 = vmul.f32 %v672, %v828
    %v833 = vmul.f32 %v748, %v829
    %v834 = vmul.f32 %v824, %v830
    %835 = vst.msk [vmem:[#allocation2] sm:$0xff] %vm176, %v831
    %836 = vst.msk [vmem:[#allocation2 + $0x8] sm:$0xff] %vm176, %v832
    %837 = vst.msk [vmem:[#allocation2 + $0x10] sm:$0xff] %vm176, %v833
    %838 = vst.msk [vmem:[#allocation2 + $0x18] sm:$0xff] %vm176, %v834
    %839 = vrot.lane.b32.xlu0 %v169, 112
    %v840 = vpop.permute.xlu0 %839
    %841 = vrot.lane.b32.xlu0 %v151, 80
    %v842 = vpop.permute.xlu0 %841
    %v843 = vsel %vm176, %v840, 0
    %v845 = vsel %vm176, %v842, 0
    %847 = vmatprep.subr.mxu0 0.0
    %848 = vmatpush1.xpose.msra.mxu0 %v845
    %849 = vmatprep.subr.mxu0 0.0
    %850 = vmatpush1.xpose.msra.mxu0 0.0
    %851 = vmatprep.subr.mxu0 0.0
    %852 = vmatpush1.xpose.msra.mxu0 0.0
    %853 = vmatprep.subr.mxu0 0.0
    %854 = vmatpush1.xpose.msra.mxu0 0.0
    %855 = vmatprep.subr.mxu0 0.0
    %856 = vmatpush1.xpose.msra.mxu0 0.0
    %857 = vmatprep.subr.mxu0 0.0
    %858 = vmatpush1.xpose.msra.mxu0 0.0
    %859 = vmatprep.subr.mxu0 0.0
    %860 = vmatpush1.xpose.msra.mxu0 0.0
    %861 = vmatprep.subr.mxu0 0.0
    %862 = vmatpush1.xpose.msra.mxu0 0.0
    %863 = vmatprep.subr.mxu0 0.0
    %864 = vmatpush1.xpose.msra.mxu0 0.0
    %865 = vmatprep.subr.mxu0 0.0
    %866 = vmatpush1.xpose.msra.mxu0 0.0
    %867 = vmatprep.subr.mxu0 0.0
    %868 = vmatpush1.xpose.msra.mxu0 0.0
    %869 = vmatprep.subr.mxu0 0.0
    %870 = vmatpush1.xpose.msra.mxu0 0.0
    %871 = vmatprep.subr.mxu0 0.0
    %872 = vmatpush1.xpose.msra.mxu0 0.0
    %873 = vmatprep.subr.mxu0 0.0
    %874 = vmatpush1.xpose.msra.mxu0 0.0
    %875 = vmatprep.subr.mxu0 0.0
    %876 = vmatpush1.xpose.msra.mxu0 0.0
    %877 = vmatprep.subr.mxu0 0.0
    %878 = vmatpush1.xpose.msra.mxu0 0.0
    %879 = vmatprep.subr.mxu0 0.0
    %880 = vmatpush1.xpose.msra.mxu0 0.0
    %881 = vmatprep.subr.mxu0 0.0
    %882 = vmatpush1.xpose.msra.mxu0 0.0
    %883 = vmatprep.subr.mxu0 0.0
    %884 = vmatpush1.xpose.msra.mxu0 0.0
    %885 = vmatprep.subr.mxu0 0.0
    %886 = vmatpush1.xpose.msra.mxu0 0.0
    %887 = vmatprep.subr.mxu0 0.0
    %888 = vmatpush1.xpose.msra.mxu0 0.0
    %889 = vmatprep.subr.mxu0 0.0
    %890 = vmatpush1.xpose.msra.mxu0 0.0
    %891 = vmatprep.subr.mxu0 0.0
    %892 = vmatpush1.xpose.msra.mxu0 0.0
    %893 = vmatprep.subr.mxu0 0.0
    %894 = vmatpush1.xpose.msra.mxu0 0.0
    %895 = vmatprep.subr.mxu0 0.0
    %896 = vmatpush1.xpose.msra.mxu0 0.0
    %897 = vmatprep.subr.mxu0 0.0
    %898 = vmatpush1.xpose.msra.mxu0 0.0
    %899 = vmatprep.subr.mxu0 0.0
    %900 = vmatpush1.xpose.msra.mxu0 0.0
    %901 = vmatprep.subr.mxu0 0.0
    %902 = vmatpush1.xpose.msra.mxu0 0.0
    %903 = vmatprep.subr.mxu0 0.0
    %904 = vmatpush1.xpose.msra.mxu0 0.0
    %905 = vmatprep.subr.mxu0 0.0
    %906 = vmatpush1.xpose.msra.mxu0 0.0
    %907 = vmatprep.subr.mxu0 0.0
    %908 = vmatpush1.xpose.msra.mxu0 0.0
    %909 = vmatprep.subr.mxu0 0.0
    %910 = vmatpush1.xpose.msra.mxu0 0.0
    %911 = vmatprep.mubr.f32.mxu0 0.0
    %912 = vmatmul.mubr.f32.gmra.mrb[0].mxu0 %v843
    %v913 = vpop.f32.mrb[0].mxu0
    %v914 = vadd.f32 0.0, %v913
    %v915 = vpop.f32.mrb[0].mxu0
    %916 = vdwg.mxu0
    %917 = vrot.lane.b32.xlu0 %v170, 112
    %v918 = vpop.permute.xlu0 %917
    %919 = vrot.lane.b32.xlu0 %v156, 80
    %v920 = vpop.permute.xlu0 %919
    %v921 = vsel %vm176, %v918, 0
    %v923 = vsel %vm176, %v920, 0
    %925 = vmatprep.subr.mxu0 0.0
    %926 = vmatpush1.xpose.msra.mxu0 %v923
    %927 = vmatprep.subr.mxu0 0.0
    %928 = vmatpush1.xpose.msra.mxu0 0.0
    %929 = vmatprep.subr.mxu0 0.0
    %930 = vmatpush1.xpose.msra.mxu0 0.0
    %931 = vmatprep.subr.mxu0 0.0
    %932 = vmatpush1.xpose.msra.mxu0 0.0
    %933 = vmatprep.subr.mxu0 0.0
    %934 = vmatpush1.xpose.msra.mxu0 0.0
    %935 = vmatprep.subr.mxu0 0.0
    %936 = vmatpush1.xpose.msra.mxu0 0.0
    %937 = vmatprep.subr.mxu0 0.0
    %938 = vmatpush1.xpose.msra.mxu0 0.0
    %939 = vmatprep.subr.mxu0 0.0
    %940 = vmatpush1.xpose.msra.mxu0 0.0
    %941 = vmatprep.subr.mxu0 0.0
    %942 = vmatpush1.xpose.msra.mxu0 0.0
    %943 = vmatprep.subr.mxu0 0.0
    %944 = vmatpush1.xpose.msra.mxu0 0.0
    %945 = vmatprep.subr.mxu0 0.0
    %946 = vmatpush1.xpose.msra.mxu0 0.0
    %947 = vmatprep.subr.mxu0 0.0
    %948 = vmatpush1.xpose.msra.mxu0 0.0
    %949 = vmatprep.subr.mxu0 0.0
    %950 = vmatpush1.xpose.msra.mxu0 0.0
    %951 = vmatprep.subr.mxu0 0.0
    %952 = vmatpush1.xpose.msra.mxu0 0.0
    %953 = vmatprep.subr.mxu0 0.0
    %954 = vmatpush1.xpose.msra.mxu0 0.0
    %955 = vmatprep.subr.mxu0 0.0
    %956 = vmatpush1.xpose.msra.mxu0 0.0
    %957 = vmatprep.subr.mxu0 0.0
    %958 = vmatpush1.xpose.msra.mxu0 0.0
    %959 = vmatprep.subr.mxu0 0.0
    %960 = vmatpush1.xpose.msra.mxu0 0.0
    %961 = vmatprep.subr.mxu0 0.0
    %962 = vmatpush1.xpose.msra.mxu0 0.0
    %963 = vmatprep.subr.mxu0 0.0
    %964 = vmatpush1.xpose.msra.mxu0 0.0
    %965 = vmatprep.subr.mxu0 0.0
    %966 = vmatpush1.xpose.msra.mxu0 0.0
    %967 = vmatprep.subr.mxu0 0.0
    %968 = vmatpush1.xpose.msra.mxu0 0.0
    %969 = vmatprep.subr.mxu0 0.0
    %970 = vmatpush1.xpose.msra.mxu0 0.0
    %971 = vmatprep.subr.mxu0 0.0
    %972 = vmatpush1.xpose.msra.mxu0 0.0
    %973 = vmatprep.subr.mxu0 0.0
    %974 = vmatpush1.xpose.msra.mxu0 0.0
    %975 = vmatprep.subr.mxu0 0.0
    %976 = vmatpush1.xpose.msra.mxu0 0.0
    %977 = vmatprep.subr.mxu0 0.0
    %978 = vmatpush1.xpose.msra.mxu0 0.0
    %979 = vmatprep.subr.mxu0 0.0
    %980 = vmatpush1.xpose.msra.mxu0 0.0
    %981 = vmatprep.subr.mxu0 0.0
    %982 = vmatpush1.xpose.msra.mxu0 0.0
    %983 = vmatprep.subr.mxu0 0.0
    %984 = vmatpush1.xpose.msra.mxu0 0.0
    %985 = vmatprep.subr.mxu0 0.0
    %986 = vmatpush1.xpose.msra.mxu0 0.0
    %987 = vmatprep.subr.mxu0 0.0
    %988 = vmatpush1.xpose.msra.mxu0 0.0
    %989 = vmatprep.mubr.f32.mxu0 0.0
    %990 = vmatmul.mubr.f32.gmra.mrb[0].mxu0 %v921
    %v991 = vpop.f32.mrb[0].mxu0
    %v992 = vadd.f32 0.0, %v991
    %v993 = vpop.f32.mrb[0].mxu0
    %994 = vdwg.mxu0
    %995 = vrot.lane.b32.xlu0 %v171, 112
    %v996 = vpop.permute.xlu0 %995
    %997 = vrot.lane.b32.xlu0 %v161, 80
    %v998 = vpop.permute.xlu0 %997
    %v999 = vsel %vm176, %v996, 0
    %v1001 = vsel %vm176, %v998, 0
    %1003 = vmatprep.subr.mxu0 0.0
    %1004 = vmatpush1.xpose.msra.mxu0 %v1001
    %1005 = vmatprep.subr.mxu0 0.0
    %1006 = vmatpush1.xpose.msra.mxu0 0.0
    %1007 = vmatprep.subr.mxu0 0.0
    %1008 = vmatpush1.xpose.msra.mxu0 0.0
    %1009 = vmatprep.subr.mxu0 0.0
    %1010 = vmatpush1.xpose.msra.mxu0 0.0
    %1011 = vmatprep.subr.mxu0 0.0
    %1012 = vmatpush1.xpose.msra.mxu0 0.0
    %1013 = vmatprep.subr.mxu0 0.0
    %1014 = vmatpush1.xpose.msra.mxu0 0.0
    %1015 = vmatprep.subr.mxu0 0.0
    %1016 = vmatpush1.xpose.msra.mxu0 0.0
    %1017 = vmatprep.subr.mxu0 0.0
    %1018 = vmatpush1.xpose.msra.mxu0 0.0
    %1019 = vmatprep.subr.mxu0 0.0
    %1020 = vmatpush1.xpose.msra.mxu0 0.0
    %1021 = vmatprep.subr.mxu0 0.0
    %1022 = vmatpush1.xpose.msra.mxu0 0.0
    %1023 = vmatprep.subr.mxu0 0.0
    %1024 = vmatpush1.xpose.msra.mxu0 0.0
    %1025 = vmatprep.subr.mxu0 0.0
    %1026 = vmatpush1.xpose.msra.mxu0 0.0
    %1027 = vmatprep.subr.mxu0 0.0
    %1028 = vmatpush1.xpose.msra.mxu0 0.0
    %1029 = vmatprep.subr.mxu0 0.0
    %1030 = vmatpush1.xpose.msra.mxu0 0.0
    %1031 = vmatprep.subr.mxu0 0.0
    %1032 = vmatpush1.xpose.msra.mxu0 0.0
    %1033 = vmatprep.subr.mxu0 0.0
    %1034 = vmatpush1.xpose.msra.mxu0 0.0
    %1035 = vmatprep.subr.mxu0 0.0
    %1036 = vmatpush1.xpose.msra.mxu0 0.0
    %1037 = vmatprep.subr.mxu0 0.0
    %1038 = vmatpush1.xpose.msra.mxu0 0.0
    %1039 = vmatprep.subr.mxu0 0.0
    %1040 = vmatpush1.xpose.msra.mxu0 0.0
    %1041 = vmatprep.subr.mxu0 0.0
    %1042 = vmatpush1.xpose.msra.mxu0 0.0
    %1043 = vmatprep.subr.mxu0 0.0
    %1044 = vmatpush1.xpose.msra.mxu0 0.0
    %1045 = vmatprep.subr.mxu0 0.0
    %1046 = vmatpush1.xpose.msra.mxu0 0.0
    %1047 = vmatprep.subr.mxu0 0.0
    %1048 = vmatpush1.xpose.msra.mxu0 0.0
    %1049 = vmatprep.subr.mxu0 0.0
    %1050 = vmatpush1.xpose.msra.mxu0 0.0
    %1051 = vmatprep.subr.mxu0 0.0
    %1052 = vmatpush1.xpose.msra.mxu0 0.0
    %1053 = vmatprep.subr.mxu0 0.0
    %1054 = vmatpush1.xpose.msra.mxu0 0.0
    %1055 = vmatprep.subr.mxu0 0.0
    %1056 = vmatpush1.xpose.msra.mxu0 0.0
    %1057 = vmatprep.subr.mxu0 0.0
    %1058 = vmatpush1.xpose.msra.mxu0 0.0
    %1059 = vmatprep.subr.mxu0 0.0
    %1060 = vmatpush1.xpose.msra.mxu0 0.0
    %1061 = vmatprep.subr.mxu0 0.0
    %1062 = vmatpush1.xpose.msra.mxu0 0.0
    %1063 = vmatprep.subr.mxu0 0.0
    %1064 = vmatpush1.xpose.msra.mxu0 0.0
    %1065 = vmatprep.subr.mxu0 0.0
    %1066 = vmatpush1.xpose.msra.mxu0 0.0
    %1067 = vmatprep.mubr.f32.mxu0 0.0
    %1068 = vmatmul.mubr.f32.gmra.mrb[0].mxu0 %v999
    %v1069 = vpop.f32.mrb[0].mxu0
    %v1070 = vadd.f32 0.0, %v1069
    %v1071 = vpop.f32.mrb[0].mxu0
    %1072 = vdwg.mxu0
    %1073 = vrot.lane.b32.xlu0 %v172, 112
    %v1074 = vpop.permute.xlu0 %1073
    %1075 = vrot.lane.b32.xlu0 %v166, 80
    %v1076 = vpop.permute.xlu0 %1075
    %v1077 = vsel %vm176, %v1074, 0
    %v1079 = vsel %vm176, %v1076, 0
    %1081 = vmatprep.subr.mxu0 0.0
    %1082 = vmatpush1.xpose.msra.mxu0 %v1079
    %1083 = vmatprep.subr.mxu0 0.0
    %1084 = vmatpush1.xpose.msra.mxu0 0.0
    %1085 = vmatprep.subr.mxu0 0.0
    %1086 = vmatpush1.xpose.msra.mxu0 0.0
    %1087 = vmatprep.subr.mxu0 0.0
    %1088 = vmatpush1.xpose.msra.mxu0 0.0
    %1089 = vmatprep.subr.mxu0 0.0
    %1090 = vmatpush1.xpose.msra.mxu0 0.0
    %1091 = vmatprep.subr.mxu0 0.0
    %1092 = vmatpush1.xpose.msra.mxu0 0.0
    %1093 = vmatprep.subr.mxu0 0.0
    %1094 = vmatpush1.xpose.msra.mxu0 0.0
    %1095 = vmatprep.subr.mxu0 0.0
    %1096 = vmatpush1.xpose.msra.mxu0 0.0
    %1097 = vmatprep.subr.mxu0 0.0
    %1098 = vmatpush1.xpose.msra.mxu0 0.0
    %1099 = vmatprep.subr.mxu0 0.0
    %1100 = vmatpush1.xpose.msra.mxu0 0.0
    %1101 = vmatprep.subr.mxu0 0.0
    %1102 = vmatpush1.xpose.msra.mxu0 0.0
    %1103 = vmatprep.subr.mxu0 0.0
    %1104 = vmatpush1.xpose.msra.mxu0 0.0
    %1105 = vmatprep.subr.mxu0 0.0
    %1106 = vmatpush1.xpose.msra.mxu0 0.0
    %1107 = vmatprep.subr.mxu0 0.0
    %1108 = vmatpush1.xpose.msra.mxu0 0.0
    %1109 = vmatprep.subr.mxu0 0.0
    %1110 = vmatpush1.xpose.msra.mxu0 0.0
    %1111 = vmatprep.subr.mxu0 0.0
    %1112 = vmatpush1.xpose.msra.mxu0 0.0
    %1113 = vmatprep.subr.mxu0 0.0
    %1114 = vmatpush1.xpose.msra.mxu0 0.0
    %1115 = vmatprep.subr.mxu0 0.0
    %1116 = vmatpush1.xpose.msra.mxu0 0.0
    %1117 = vmatprep.subr.mxu0 0.0
    %1118 = vmatpush1.xpose.msra.mxu0 0.0
    %1119 = vmatprep.subr.mxu0 0.0
    %1120 = vmatpush1.xpose.msra.mxu0 0.0
    %1121 = vmatprep.subr.mxu0 0.0
    %1122 = vmatpush1.xpose.msra.mxu0 0.0
    %1123 = vmatprep.subr.mxu0 0.0
    %1124 = vmatpush1.xpose.msra.mxu0 0.0
    %1125 = vmatprep.subr.mxu0 0.0
    %1126 = vmatpush1.xpose.msra.mxu0 0.0
    %1127 = vmatprep.subr.mxu0 0.0
    %1128 = vmatpush1.xpose.msra.mxu0 0.0
    %1129 = vmatprep.subr.mxu0 0.0
    %1130 = vmatpush1.xpose.msra.mxu0 0.0
    %1131 = vmatprep.subr.mxu0 0.0
    %1132 = vmatpush1.xpose.msra.mxu0 0.0
    %1133 = vmatprep.subr.mxu0 0.0
    %1134 = vmatpush1.xpose.msra.mxu0 0.0
    %1135 = vmatprep.subr.mxu0 0.0
    %1136 = vmatpush1.xpose.msra.mxu0 0.0
    %1137 = vmatprep.subr.mxu0 0.0
    %1138 = vmatpush1.xpose.msra.mxu0 0.0
    %1139 = vmatprep.subr.mxu0 0.0
    %1140 = vmatpush1.xpose.msra.mxu0 0.0
    %1141 = vmatprep.subr.mxu0 0.0
    %1142 = vmatpush1.xpose.msra.mxu0 0.0
    %1143 = vmatprep.subr.mxu0 0.0
    %1144 = vmatpush1.xpose.msra.mxu0 0.0
    %1145 = vmatprep.mubr.f32.mxu0 0.0
    %1146 = vmatmul.mubr.f32.gmra.mrb[0].mxu0 %v1077
    %v1147 = vpop.f32.mrb[0].mxu0
    %v1148 = vadd.f32 0.0, %v1147
    %v1149 = vpop.f32.mrb[0].mxu0
    %1150 = vdwg.mxu0
    %v1151 = vsel %vm486, %v914, -inf
    %1152 = vmax.xlane.f32.xlu0 %v1151
    %v1153 = vpop.xlane.xlu0 %1152
    %v1154 = vsel %vm486, %v992, -inf
    %1155 = vmax.xlane.f32.xlu0 %v1154
    %v1156 = vpop.xlane.xlu0 %1155
    %v1157 = vsel %vm486, %v1070, -inf
    %1158 = vmax.xlane.f32.xlu0 %v1157
    %v1159 = vpop.xlane.xlu0 %1158
    %v1160 = vsel %vm486, %v1148, -inf
    %1161 = vmax.xlane.f32.xlu0 %v1160
    %v1162 = vpop.xlane.xlu0 %1161
    %v1163 = vsub.f32 %v914, %v1153
    %v1164 = vsub.f32 %v992, %v1156
    %v1165 = vsub.f32 %v1070, %v1159
    %v1166 = vsub.f32 %v1148, %v1162
    %v1167 = vmul.f32 %v1163, 1.442695
    %v1168 = vpow.pop %v1167
    %v1169 = vmul.f32 %v1164, 1.442695
    %v1170 = vpow.pop %v1169
    %v1171 = vmul.f32 %v1165, 1.442695
    %v1172 = vpow.pop %v1171
    %v1173 = vmul.f32 %v1166, 1.442695
    %v1174 = vpow.pop %v1173
    %v1175 = vsel %vm486, %v1168, 0.0
    %1176 = vadd.xlane.f32.xlu0 %v1175
    %v1177 = vpop.xlane.xlu0 %1176
    %v1178 = vsel %vm486, %v1170, 0.0
    %1179 = vadd.xlane.f32.xlu0 %v1178
    %v1180 = vpop.xlane.xlu0 %1179
    %v1181 = vsel %vm486, %v1172, 0.0
    %1182 = vadd.xlane.f32.xlu0 %v1181
    %v1183 = vpop.xlane.xlu0 %1182
    %v1184 = vsel %vm486, %v1174, 0.0
    %1185 = vadd.xlane.f32.xlu0 %v1184
    %v1186 = vpop.xlane.xlu0 %1185
    %1187 = vrot.lane.b32.xlu0 %v151, 48
    %v1188 = vpop.permute.xlu0 %1187
    %v1191 = vsel %vm486, %v1168, 0
    %1193 = vmatprep.subr.mxu0 0.0
    %1194 = vmatpush1.msra.mxu0 %v1188
    %1195 = vmatprep.subr.mxu0 0.0
    %1196 = vmatpush1.msra.mxu0 0.0
    %1197 = vmatprep.subr.mxu0 0.0
    %1198 = vmatpush1.msra.mxu0 0.0
    %1199 = vmatprep.subr.mxu0 0.0
    %1200 = vmatpush1.msra.mxu0 0.0
    %1201 = vmatprep.subr.mxu0 0.0
    %1202 = vmatpush1.msra.mxu0 0.0
    %1203 = vmatprep.subr.mxu0 0.0
    %1204 = vmatpush1.msra.mxu0 0.0
    %1205 = vmatprep.subr.mxu0 0.0
    %1206 = vmatpush1.msra.mxu0 0.0
    %1207 = vmatprep.subr.mxu0 0.0
    %1208 = vmatpush1.msra.mxu0 0.0
    %1209 = vmatprep.subr.mxu0 0.0
    %1210 = vmatpush1.msra.mxu0 0.0
    %1211 = vmatprep.subr.mxu0 0.0
    %1212 = vmatpush1.msra.mxu0 0.0
    %1213 = vmatprep.subr.mxu0 0.0
    %1214 = vmatpush1.msra.mxu0 0.0
    %1215 = vmatprep.subr.mxu0 0.0
    %1216 = vmatpush1.msra.mxu0 0.0
    %1217 = vmatprep.subr.mxu0 0.0
    %1218 = vmatpush1.msra.mxu0 0.0
    %1219 = vmatprep.subr.mxu0 0.0
    %1220 = vmatpush1.msra.mxu0 0.0
    %1221 = vmatprep.subr.mxu0 0.0
    %1222 = vmatpush1.msra.mxu0 0.0
    %1223 = vmatprep.subr.mxu0 0.0
    %1224 = vmatpush1.msra.mxu0 0.0
    %1225 = vmatprep.subr.mxu0 0.0
    %1226 = vmatpush1.msra.mxu0 0.0
    %1227 = vmatprep.subr.mxu0 0.0
    %1228 = vmatpush1.msra.mxu0 0.0
    %1229 = vmatprep.subr.mxu0 0.0
    %1230 = vmatpush1.msra.mxu0 0.0
    %1231 = vmatprep.subr.mxu0 0.0
    %1232 = vmatpush1.msra.mxu0 0.0
    %1233 = vmatprep.subr.mxu0 0.0
    %1234 = vmatpush1.msra.mxu0 0.0
    %1235 = vmatprep.subr.mxu0 0.0
    %1236 = vmatpush1.msra.mxu0 0.0
    %1237 = vmatprep.subr.mxu0 0.0
    %1238 = vmatpush1.msra.mxu0 0.0
    %1239 = vmatprep.subr.mxu0 0.0
    %1240 = vmatpush1.msra.mxu0 0.0
    %1241 = vmatprep.subr.mxu0 0.0
    %1242 = vmatpush1.msra.mxu0 0.0
    %1243 = vmatprep.subr.mxu0 0.0
    %1244 = vmatpush1.msra.mxu0 0.0
    %1245 = vmatprep.subr.mxu0 0.0
    %1246 = vmatpush1.msra.mxu0 0.0
    %1247 = vmatprep.subr.mxu0 0.0
    %1248 = vmatpush1.msra.mxu0 0.0
    %1249 = vmatprep.subr.mxu0 0.0
    %1250 = vmatpush1.msra.mxu0 0.0
    %1251 = vmatprep.subr.mxu0 0.0
    %1252 = vmatpush1.msra.mxu0 0.0
    %1253 = vmatprep.subr.mxu0 0.0
    %1254 = vmatpush1.msra.mxu0 0.0
    %1255 = vmatprep.subr.mxu0 0.0
    %1256 = vmatpush1.msra.mxu0 0.0
    %1257 = vmatprep.mubr.f32.mxu0 0.0
    %1258 = vmatmul.mubr.f32.gmra.mrb[0].mxu0 %v1191
    %v1259 = vpop.f32.mrb[0].mxu0
    %v1260 = vadd.f32 0.0, %v1259
    %v1261 = vpop.f32.mrb[0].mxu0
    %1262 = vdwg.mxu0
    %1263 = vrot.lane.b32.xlu0 %v156, 48
    %v1264 = vpop.permute.xlu0 %1263
    %v1267 = vsel %vm486, %v1170, 0
    %1269 = vmatprep.subr.mxu0 0.0
    %1270 = vmatpush1.msra.mxu0 %v1264
    %1271 = vmatprep.subr.mxu0 0.0
    %1272 = vmatpush1.msra.mxu0 0.0
    %1273 = vmatprep.subr.mxu0 0.0
    %1274 = vmatpush1.msra.mxu0 0.0
    %1275 = vmatprep.subr.mxu0 0.0
    %1276 = vmatpush1.msra.mxu0 0.0
    %1277 = vmatprep.subr.mxu0 0.0
    %1278 = vmatpush1.msra.mxu0 0.0
    %1279 = vmatprep.subr.mxu0 0.0
    %1280 = vmatpush1.msra.mxu0 0.0
    %1281 = vmatprep.subr.mxu0 0.0
    %1282 = vmatpush1.msra.mxu0 0.0
    %1283 = vmatprep.subr.mxu0 0.0
    %1284 = vmatpush1.msra.mxu0 0.0
    %1285 = vmatprep.subr.mxu0 0.0
    %1286 = vmatpush1.msra.mxu0 0.0
    %1287 = vmatprep.subr.mxu0 0.0
    %1288 = vmatpush1.msra.mxu0 0.0
    %1289 = vmatprep.subr.mxu0 0.0
    %1290 = vmatpush1.msra.mxu0 0.0
    %1291 = vmatprep.subr.mxu0 0.0
    %1292 = vmatpush1.msra.mxu0 0.0
    %1293 = vmatprep.subr.mxu0 0.0
    %1294 = vmatpush1.msra.mxu0 0.0
    %1295 = vmatprep.subr.mxu0 0.0
    %1296 = vmatpush1.msra.mxu0 0.0
    %1297 = vmatprep.subr.mxu0 0.0
    %1298 = vmatpush1.msra.mxu0 0.0
    %1299 = vmatprep.subr.mxu0 0.0
    %1300 = vmatpush1.msra.mxu0 0.0
    %1301 = vmatprep.subr.mxu0 0.0
    %1302 = vmatpush1.msra.mxu0 0.0
    %1303 = vmatprep.subr.mxu0 0.0
    %1304 = vmatpush1.msra.mxu0 0.0
    %1305 = vmatprep.subr.mxu0 0.0
    %1306 = vmatpush1.msra.mxu0 0.0
    %1307 = vmatprep.subr.mxu0 0.0
    %1308 = vmatpush1.msra.mxu0 0.0
    %1309 = vmatprep.subr.mxu0 0.0
    %1310 = vmatpush1.msra.mxu0 0.0
    %1311 = vmatprep.subr.mxu0 0.0
    %1312 = vmatpush1.msra.mxu0 0.0
    %1313 = vmatprep.subr.mxu0 0.0
    %1314 = vmatpush1.msra.mxu0 0.0
    %1315 = vmatprep.subr.mxu0 0.0
    %1316 = vmatpush1.msra.mxu0 0.0
    %1317 = vmatprep.subr.mxu0 0.0
    %1318 = vmatpush1.msra.mxu0 0.0
    %1319 = vmatprep.subr.mxu0 0.0
    %1320 = vmatpush1.msra.mxu0 0.0
    %1321 = vmatprep.subr.mxu0 0.0
    %1322 = vmatpush1.msra.mxu0 0.0
    %1323 = vmatprep.subr.mxu0 0.0
    %1324 = vmatpush1.msra.mxu0 0.0
    %1325 = vmatprep.subr.mxu0 0.0
    %1326 = vmatpush1.msra.mxu0 0.0
    %1327 = vmatprep.subr.mxu0 0.0
    %1328 = vmatpush1.msra.mxu0 0.0
    %1329 = vmatprep.subr.mxu0 0.0
    %1330 = vmatpush1.msra.mxu0 0.0
    %1331 = vmatprep.subr.mxu0 0.0
    %1332 = vmatpush1.msra.mxu0 0.0
    %1333 = vmatprep.mubr.f32.mxu0 0.0
    %1334 = vmatmul.mubr.f32.gmra.mrb[0].mxu0 %v1267
    %v1335 = vpop.f32.mrb[0].mxu0
    %v1336 = vadd.f32 0.0, %v1335
    %v1337 = vpop.f32.mrb[0].mxu0
    %1338 = vdwg.mxu0
    %1339 = vrot.lane.b32.xlu0 %v161, 48
    %v1340 = vpop.permute.xlu0 %1339
    %v1343 = vsel %vm486, %v1172, 0
    %1345 = vmatprep.subr.mxu0 0.0
    %1346 = vmatpush1.msra.mxu0 %v1340
    %1347 = vmatprep.subr.mxu0 0.0
    %1348 = vmatpush1.msra.mxu0 0.0
    %1349 = vmatprep.subr.mxu0 0.0
    %1350 = vmatpush1.msra.mxu0 0.0
    %1351 = vmatprep.subr.mxu0 0.0
    %1352 = vmatpush1.msra.mxu0 0.0
    %1353 = vmatprep.subr.mxu0 0.0
    %1354 = vmatpush1.msra.mxu0 0.0
    %1355 = vmatprep.subr.mxu0 0.0
    %1356 = vmatpush1.msra.mxu0 0.0
    %1357 = vmatprep.subr.mxu0 0.0
    %1358 = vmatpush1.msra.mxu0 0.0
    %1359 = vmatprep.subr.mxu0 0.0
    %1360 = vmatpush1.msra.mxu0 0.0
    %1361 = vmatprep.subr.mxu0 0.0
    %1362 = vmatpush1.msra.mxu0 0.0
    %1363 = vmatprep.subr.mxu0 0.0
    %1364 = vmatpush1.msra.mxu0 0.0
    %1365 = vmatprep.subr.mxu0 0.0
    %1366 = vmatpush1.msra.mxu0 0.0
    %1367 = vmatprep.subr.mxu0 0.0
    %1368 = vmatpush1.msra.mxu0 0.0
    %1369 = vmatprep.subr.mxu0 0.0
    %1370 = vmatpush1.msra.mxu0 0.0
    %1371 = vmatprep.subr.mxu0 0.0
    %1372 = vmatpush1.msra.mxu0 0.0
    %1373 = vmatprep.subr.mxu0 0.0
    %1374 = vmatpush1.msra.mxu0 0.0
    %1375 = vmatprep.subr.mxu0 0.0
    %1376 = vmatpush1.msra.mxu0 0.0
    %1377 = vmatprep.subr.mxu0 0.0
    %1378 = vmatpush1.msra.mxu0 0.0
    %1379 = vmatprep.subr.mxu0 0.0
    %1380 = vmatpush1.msra.mxu0 0.0
    %1381 = vmatprep.subr.mxu0 0.0
    %1382 = vmatpush1.msra.mxu0 0.0
    %1383 = vmatprep.subr.mxu0 0.0
    %1384 = vmatpush1.msra.mxu0 0.0
    %1385 = vmatprep.subr.mxu0 0.0
    %1386 = vmatpush1.msra.mxu0 0.0
    %1387 = vmatprep.subr.mxu0 0.0
    %1388 = vmatpush1.msra.mxu0 0.0
    %1389 = vmatprep.subr.mxu0 0.0
    %1390 = vmatpush1.msra.mxu0 0.0
    %1391 = vmatprep.subr.mxu0 0.0
    %1392 = vmatpush1.msra.mxu0 0.0
    %1393 = vmatprep.subr.mxu0 0.0
    %1394 = vmatpush1.msra.mxu0 0.0
    %1395 = vmatprep.subr.mxu0 0.0
    %1396 = vmatpush1.msra.mxu0 0.0
    %1397 = vmatprep.subr.mxu0 0.0
    %1398 = vmatpush1.msra.mxu0 0.0
    %1399 = vmatprep.subr.mxu0 0.0
    %1400 = vmatpush1.msra.mxu0 0.0
    %1401 = vmatprep.subr.mxu0 0.0
    %1402 = vmatpush1.msra.mxu0 0.0
    %1403 = vmatprep.subr.mxu0 0.0
    %1404 = vmatpush1.msra.mxu0 0.0
    %1405 = vmatprep.subr.mxu0 0.0
    %1406 = vmatpush1.msra.mxu0 0.0
    %1407 = vmatprep.subr.mxu0 0.0
    %1408 = vmatpush1.msra.mxu0 0.0
    %1409 = vmatprep.mubr.f32.mxu0 0.0
    %1410 = vmatmul.mubr.f32.gmra.mrb[0].mxu0 %v1343
    %v1411 = vpop.f32.mrb[0].mxu0
    %v1412 = vadd.f32 0.0, %v1411
    %v1413 = vpop.f32.mrb[0].mxu0
    %1414 = vdwg.mxu0
    %1415 = vrot.lane.b32.xlu0 %v166, 48
    %v1416 = vpop.permute.xlu0 %1415
    %v1419 = vsel %vm486, %v1174, 0
    %1421 = vmatprep.subr.mxu0 0.0
    %1422 = vmatpush1.msra.mxu0 %v1416
    %1423 = vmatprep.subr.mxu0 0.0
    %1424 = vmatpush1.msra.mxu0 0.0
    %1425 = vmatprep.subr.mxu0 0.0
    %1426 = vmatpush1.msra.mxu0 0.0
    %1427 = vmatprep.subr.mxu0 0.0
    %1428 = vmatpush1.msra.mxu0 0.0
    %1429 = vmatprep.subr.mxu0 0.0
    %1430 = vmatpush1.msra.mxu0 0.0
    %1431 = vmatprep.subr.mxu0 0.0
    %1432 = vmatpush1.msra.mxu0 0.0
    %1433 = vmatprep.subr.mxu0 0.0
    %1434 = vmatpush1.msra.mxu0 0.0
    %1435 = vmatprep.subr.mxu0 0.0
    %1436 = vmatpush1.msra.mxu0 0.0
    %1437 = vmatprep.subr.mxu0 0.0
    %1438 = vmatpush1.msra.mxu0 0.0
    %1439 = vmatprep.subr.mxu0 0.0
    %1440 = vmatpush1.msra.mxu0 0.0
    %1441 = vmatprep.subr.mxu0 0.0
    %1442 = vmatpush1.msra.mxu0 0.0
    %1443 = vmatprep.subr.mxu0 0.0
    %1444 = vmatpush1.msra.mxu0 0.0
    %1445 = vmatprep.subr.mxu0 0.0
    %1446 = vmatpush1.msra.mxu0 0.0
    %1447 = vmatprep.subr.mxu0 0.0
    %1448 = vmatpush1.msra.mxu0 0.0
    %1449 = vmatprep.subr.mxu0 0.0
    %1450 = vmatpush1.msra.mxu0 0.0
    %1451 = vmatprep.subr.mxu0 0.0
    %1452 = vmatpush1.msra.mxu0 0.0
    %1453 = vmatprep.subr.mxu0 0.0
    %1454 = vmatpush1.msra.mxu0 0.0
    %1455 = vmatprep.subr.mxu0 0.0
    %1456 = vmatpush1.msra.mxu0 0.0
    %1457 = vmatprep.subr.mxu0 0.0
    %1458 = vmatpush1.msra.mxu0 0.0
    %1459 = vmatprep.subr.mxu0 0.0
    %1460 = vmatpush1.msra.mxu0 0.0
    %1461 = vmatprep.subr.mxu0 0.0
    %1462 = vmatpush1.msra.mxu0 0.0
    %1463 = vmatprep.subr.mxu0 0.0
    %1464 = vmatpush1.msra.mxu0 0.0
    %1465 = vmatprep.subr.mxu0 0.0
    %1466 = vmatpush1.msra.mxu0 0.0
    %1467 = vmatprep.subr.mxu0 0.0
    %1468 = vmatpush1.msra.mxu0 0.0
    %1469 = vmatprep.subr.mxu0 0.0
    %1470 = vmatpush1.msra.mxu0 0.0
    %1471 = vmatprep.subr.mxu0 0.0
    %1472 = vmatpush1.msra.mxu0 0.0
    %1473 = vmatprep.subr.mxu0 0.0
    %1474 = vmatpush1.msra.mxu0 0.0
    %1475 = vmatprep.subr.mxu0 0.0
    %1476 = vmatpush1.msra.mxu0 0.0
    %1477 = vmatprep.subr.mxu0 0.0
    %1478 = vmatpush1.msra.mxu0 0.0
    %1479 = vmatprep.subr.mxu0 0.0
    %1480 = vmatpush1.msra.mxu0 0.0
    %1481 = vmatprep.subr.mxu0 0.0
    %1482 = vmatpush1.msra.mxu0 0.0
    %1483 = vmatprep.subr.mxu0 0.0
    %1484 = vmatpush1.msra.mxu0 0.0
    %1485 = vmatprep.mubr.f32.mxu0 0.0
    %1486 = vmatmul.mubr.f32.gmra.mrb[0].mxu0 %v1419
    %v1487 = vpop.f32.mrb[0].mxu0
    %v1488 = vadd.f32 0.0, %v1487
    %v1489 = vpop.f32.mrb[0].mxu0
    %1490 = vdwg.mxu0
    %v1491 = vrcp.pop %v1177
    %v1492 = vrcp.pop %v1180
    %v1493 = vrcp.pop %v1183
    %v1494 = vrcp.pop %v1186
    %v1495 = vmul.f32 %v1260, %v1491
    %v1496 = vmul.f32 %v1336, %v1492
    %v1497 = vmul.f32 %v1412, %v1493
    %v1498 = vmul.f32 %v1488, %v1494
    %1503 = vrot.lane.b32.xlu0 %v1495, 16
    %v1504 = vpop.permute.xlu0 %1503
    %1505 = vrot.lane.b32.xlu0 %v1496, 16
    %v1506 = vpop.permute.xlu0 %1505
    %1507 = vrot.lane.b32.xlu0 %v1497, 16
    %v1508 = vpop.permute.xlu0 %1507
    %1509 = vrot.lane.b32.xlu0 %v1498, 16
    %v1510 = vpop.permute.xlu0 %1509
    %vm1515 = vcmask 261248
    %1516 = vst.msk [vmem:[#allocation2] sm:$0xff] %vm1515, %v1504
    %1517 = vst.msk [vmem:[#allocation2 + $0x8] sm:$0xff] %vm1515, %v1506
    %1518 = vst.msk [vmem:[#allocation2 + $0x10] sm:$0xff] %vm1515, %v1508
    %1519 = vst.msk [vmem:[#allocation2 + $0x18] sm:$0xff] %vm1515, %v1510
    %v1520 = vld [vmem:[#allocation2] sm:$0xff]
    %v1521 = vld [vmem:[#allocation2 + $0x8] sm:$0xff]
    %v1522 = vld [vmem:[#allocation2 + $0x10] sm:$0xff]
    %v1523 = vld [vmem:[#allocation2 + $0x18] sm:$0xff]
    %v1524 = vld [vmem:[%s3] sm:$0x1]
    %v1526 = vlaneseq
    %v1527 = vshrl.u32 %v1526, 7
    %v1528 = vsub.s32 0, %v1527
    %v1529 = vrot.slane %v1524, %v1528
    %v1532 = vsel %vm71, %v1520, 0
    %v1535 = vsel %vm71, %v1521, 0
    %v1538 = vsel %vm71, %v1522, 0
    %v1541 = vsel %vm71, %v1523, 0
    %1543 = vmatprep.subr.mxu0 0.0
    %1544 = vmatpush1.msra.mxu0 %v67
    %1545 = vmatprep.subr.mxu0 0.0
    %1546 = vmatpush1.msra.mxu0 %v68
    %1547 = vmatprep.subr.mxu0 0.0
    %1548 = vmatpush1.msra.mxu0 %v69
    %1549 = vmatprep.subr.mxu0 0.0
    %1550 = vmatpush1.msra.mxu0 %v70
    %1551 = vmatprep.subr.mxu0 0.0
    %1552 = vmatpush1.msra.mxu0 0.0
    %1553 = vmatprep.subr.mxu0 0.0
    %1554 = vmatpush1.msra.mxu0 0.0
    %1555 = vmatprep.subr.mxu0 0.0
    %1556 = vmatpush1.msra.mxu0 0.0
    %1557 = vmatprep.subr.mxu0 0.0
    %1558 = vmatpush1.msra.mxu0 0.0
    %1559 = vmatprep.subr.mxu0 0.0
    %1560 = vmatpush1.msra.mxu0 0.0
    %1561 = vmatprep.subr.mxu0 0.0
    %1562 = vmatpush1.msra.mxu0 0.0
    %1563 = vmatprep.subr.mxu0 0.0
    %1564 = vmatpush1.msra.mxu0 0.0
    %1565 = vmatprep.subr.mxu0 0.0
    %1566 = vmatpush1.msra.mxu0 0.0
    %1567 = vmatprep.subr.mxu0 0.0
    %1568 = vmatpush1.msra.mxu0 0.0
    %1569 = vmatprep.subr.mxu0 0.0
    %1570 = vmatpush1.msra.mxu0 0.0
    %1571 = vmatprep.subr.mxu0 0.0
    %1572 = vmatpush1.msra.mxu0 0.0
    %1573 = vmatprep.subr.mxu0 0.0
    %1574 = vmatpush1.msra.mxu0 0.0
    %1575 = vmatprep.subr.mxu0 0.0
    %1576 = vmatpush1.msra.mxu0 0.0
    %1577 = vmatprep.subr.mxu0 0.0
    %1578 = vmatpush1.msra.mxu0 0.0
    %1579 = vmatprep.subr.mxu0 0.0
    %1580 = vmatpush1.msra.mxu0 0.0
    %1581 = vmatprep.subr.mxu0 0.0
    %1582 = vmatpush1.msra.mxu0 0.0
    %1583 = vmatprep.subr.mxu0 0.0
    %1584 = vmatpush1.msra.mxu0 0.0
    %1585 = vmatprep.subr.mxu0 0.0
    %1586 = vmatpush1.msra.mxu0 0.0
    %1587 = vmatprep.subr.mxu0 0.0
    %1588 = vmatpush1.msra.mxu0 0.0
    %1589 = vmatprep.subr.mxu0 0.0
    %1590 = vmatpush1.msra.mxu0 0.0
    %1591 = vmatprep.subr.mxu0 0.0
    %1592 = vmatpush1.msra.mxu0 0.0
    %1593 = vmatprep.subr.mxu0 0.0
    %1594 = vmatpush1.msra.mxu0 0.0
    %1595 = vmatprep.subr.mxu0 0.0
    %1596 = vmatpush1.msra.mxu0 0.0
    %1597 = vmatprep.subr.mxu0 0.0
    %1598 = vmatpush1.msra.mxu0 0.0
    %1599 = vmatprep.subr.mxu0 0.0
    %1600 = vmatpush1.msra.mxu0 0.0
    %1601 = vmatprep.subr.mxu0 0.0
    %1602 = vmatpush1.msra.mxu0 0.0
    %1603 = vmatprep.subr.mxu0 0.0
    %1604 = vmatpush1.msra.mxu0 0.0
    %1605 = vmatprep.subr.mxu0 0.0
    %1606 = vmatpush1.msra.mxu0 0.0
    %1607 = vmatprep.mubr.f32.mxu0 0.0
    %1608 = vmatmul.mubr.f32.gmra.mrb[0].mxu0 %v1532
    %v1609 = vpop.f32.mrb[0].mxu0
    %v1610 = vadd.f32 %v1529, %v1609
    %v1611 = vpop.f32.mrb[0].mxu0
    %1612 = vmatprep.mubr.f32.mxu0 0.0
    %1613 = vmatmul.mubr.f32.gmra.mrb[0].mxu0 %v1535
    %v1614 = vpop.f32.mrb[0].mxu0
    %v1615 = vadd.f32 %v1529, %v1614
    %v1616 = vpop.f32.mrb[0].mxu0
    %1617 = vmatprep.mubr.f32.mxu0 0.0
    %1618 = vmatmul.mubr.f32.gmra.mrb[0].mxu0 %v1538
    %v1619 = vpop.f32.mrb[0].mxu0
    %v1620 = vadd.f32 %v1529, %v1619
    %v1621 = vpop.f32.mrb[0].mxu0
    %1622 = vmatprep.mubr.f32.mxu0 0.0
    %1623 = vmatmul.mubr.f32.gmra.mrb[0].mxu0 %v1541
    %v1624 = vpop.f32.mrb[0].mxu0
    %v1625 = vadd.f32 %v1529, %v1624
    %v1626 = vpop.f32.mrb[0].mxu0
    %1627 = vdwg.mxu0
    %1628 = vst.msk [vmem:[#allocation9] sm:$0xff] %vm71, %v1610
    %1629 = vst.msk [vmem:[#allocation9 + $0x8] sm:$0xff] %vm71, %v1615
    %1630 = vst.msk [vmem:[#allocation9 + $0x10] sm:$0xff] %vm71, %v1620
    %1631 = vst.msk [vmem:[#allocation9 + $0x18] sm:$0xff] %vm71, %v1625
    // Predicated region
    $region30: #{tpu_custom_call.1} parent=1 // pred_check
      _
    $region31: #{tpu_custom_call.1} parent=1 // pred_check_branch
      %1633 = sbr.rel (0) target = $region33
    $region32: #{tpu_custom_call.1} parent=1 // pred_region
      %s1635 = ssub.s32 512, 512
      %1636 = vsyncadd [#allocation5], %s1635
      %s1637 = sshll.u32 [#allocation9], 4
      %s1638 = int_to_ptr.vmem [resolvable:$true] %s1637
      %1643 = dma.vmem_to_hbm [thread:$0]  %s1638, 512, %s4, [#allocation5], 128, 128, 8
    $region33: #{tpu_custom_call.1} parent=1 // pred_fallthru
      _
    // Predicated region
    $region34: #{tpu_custom_call.1} parent=1 // pred_check
      _
    $region35: #{tpu_custom_call.1} parent=1 // pred_check_branch
      %1645 = sbr.rel (0) target = $region37
    $region36: #{tpu_custom_call.1} parent=1 // pred_region
      %1646 = dma.done [#allocation5], 512
    $region37: #{tpu_custom_call.1} parent=1 // pred_fallthru
      _
    %1647 = vsyncpa [#allocation4], 1
    %1648 = vsyncpa [#allocation7], 1
    %1649 = vsyncpa [#allocation5], 1

</llo_original>
